<compile_context>
chip_gen: v6e
topology: v6e:2x2x1
jax: 0.10.0
libtpu: 0.0.40
codegen_flags: <defaults>
</compile_context>

<pallas_src>
from functools import partial

import jax
import jax.numpy as jnp
from jax.experimental import pallas as pl
from jax.experimental.pallas import tpu as pltpu


def _round_up(v, m):
    return (v + m - 1) // m * m


def attention_with_prefix_kernel(x_ref, pk_ref, pv_ref, wq_ref, wk_ref, wv_ref,
                                 wproj_ref, bproj_ref, o_ref,
                                 k_scr, v_scr, acc_scr, *,
                                 num_heads, head_dim, prefix_len, prefix_pad,
                                 seq_len, q_tile, compute_dtype):
    H, D = num_heads, head_dim
    C = H * D
    P, Pp, N = prefix_len, prefix_pad, seq_len
    L = k_scr.shape[0]                      # padded KV length (multiple of 128)
    cd = compute_dtype
    scale = D ** -0.5
    qt = pl.program_id(1)

    # ---- build concatenated (prefix ++ projected) K/V once per batch elem ----
    @pl.when(qt == 0)
    def _build_kv():
        # zero the pad rows so masked columns can never contribute NaN/Inf
        k_scr[...] = jnp.zeros_like(k_scr)
        v_scr[...] = jnp.zeros_like(v_scr)
        k_scr[0:P, :] = pk_ref[...]
        v_scr[0:P, :] = pv_ref[...]
        xc = x_ref[...].astype(cd)                                   # (N, C) bf16
        k_scr[Pp:Pp + N, :] = jnp.dot(
            xc, wk_ref[...], preferred_element_type=jnp.float32).astype(cd)
        v_scr[Pp:Pp + N, :] = jnp.dot(
            xc, wv_ref[...], preferred_element_type=jnp.float32).astype(cd)

    # ---- queries for this tile ----
    row0 = pl.multiple_of(qt * q_tile, q_tile)
    x_q = x_ref[pl.ds(row0, q_tile), :].astype(cd)                   # (TQ, C)
    q = jnp.dot(x_q, wq_ref[...], preferred_element_type=jnp.float32)
    q = (q * scale).astype(cd)                                       # (TQ, C)

    # additive mask for padded KV columns (hoisted, reused by every head)
    col = jax.lax.broadcasted_iota(jnp.int32, (1, L), 1)
    valid = (col < P) | ((col >= Pp) & (col < Pp + N))
    neg_mask = jnp.where(valid, 0.0, -1e30).astype(jnp.float32)      # (1, L)

    # ---- per-head attention; each head feeds the accumulator immediately ----
    # (static unroll over H keeps slices/offsets static; only one (TQ, L)
    #  score matrix is live at a time)
    for h in range(H):
        lo = h * D
        qh = q[:, lo:lo + D]                                         # (TQ, D) bf16
        kh = k_scr[:, lo:lo + D]                                     # (L,  D) bf16
        vh = v_scr[:, lo:lo + D]                                     # (L,  D) bf16
        s = jax.lax.dot_general(qh, kh, (((1,), (1,)), ((), ())),
                                preferred_element_type=jnp.float32)  # (TQ, L) f32
        s = s + neg_mask
        m = jnp.max(s, axis=-1, keepdims=True)
        p = jnp.exp(s - m)                                           # f32 softmax math
        denom = jnp.sum(p, axis=-1, keepdims=True)                   # (TQ, 1)
        o_h = jnp.dot(p.astype(cd), vh, preferred_element_type=jnp.float32)
        # deferred normalization via EUP reciprocal on the (TQ, 1) row sum
        acc_scr[:, lo:lo + D] = o_h * pl.reciprocal(denom, approx=True)

    # ---- output projection: one big (TQ, C) @ (C, C) MXU matmul ----
    y = jnp.dot(acc_scr[...].astype(cd), wproj_ref[...],
                preferred_element_type=jnp.float32) + bproj_ref[...]
    o_ref[...] = y.astype(o_ref.dtype)


def attention_with_prefix(x, prefix_k, prefix_v, w_qkv, w_proj, b_proj, *,
                          num_heads, q_tile=None, compute_dtype=jnp.bfloat16):
    B, N, C = x.shape
    P = prefix_k.shape[1]
    assert C % num_heads == 0
    D = C // num_heads

    if q_tile is None:
        # 256 matches the v6e/v7x 256x256 MXU; prefer 128 on v5e.
        q_tile = min(N, 256)
    assert N % q_tile == 0, "N must be a multiple of q_tile"  # TODO(synk): ragged N via masking
    assert q_tile == N or q_tile % 8 == 0

    P_pad = _round_up(P, 8)             # sublane-align the computed K/V region
    L_pad = _round_up(P_pad + N, 128)   # lane-dense KV length for scores / p@v

    cd = compute_dtype
    w_q = w_qkv[:, 0 * C:1 * C].astype(cd)
    w_k = w_qkv[:, 1 * C:2 * C].astype(cd)
    w_v = w_qkv[:, 2 * C:3 * C].astype(cd)
    w_p = w_proj.astype(cd)
    pk = prefix_k.astype(cd)
    pv = prefix_v.astype(cd)

    kernel = partial(attention_with_prefix_kernel,
                     num_heads=num_heads, head_dim=D,
                     prefix_len=P, prefix_pad=P_pad, seq_len=N,
                     q_tile=q_tile, compute_dtype=cd)

    n_q = N // q_tile
    return pl.pallas_call(
        kernel,
        out_shape=jax.ShapeDtypeStruct((B, N, C), x.dtype),
        grid_spec=pltpu.PrefetchScalarGridSpec(
            num_scalar_prefetch=0,
            grid=(B, n_q),
            in_specs=[
                # x: full sequence, block index constant across qt -> fetched
                # once per batch element and kept resident for K/V + Q slices.
                pl.BlockSpec((None, N, C), lambda b, qt: (b, 0, 0)),
                pl.BlockSpec((None, P, C), lambda b, qt: (b, 0, 0)),   # prefix_k
                pl.BlockSpec((None, P, C), lambda b, qt: (b, 0, 0)),   # prefix_v
                # Weights: grid-invariant index maps -> DMA'd once.
                # (pipeline_mode=pl.Buffered(1) could halve their residency.)
                pl.BlockSpec((C, C), lambda b, qt: (0, 0)),            # w_q
                pl.BlockSpec((C, C), lambda b, qt: (0, 0)),            # w_k
                pl.BlockSpec((C, C), lambda b, qt: (0, 0)),            # w_v
                pl.BlockSpec((C, C), lambda b, qt: (0, 0)),            # w_proj
                pl.BlockSpec((1, C), lambda b, qt: (0, 0)),            # b_proj
            ],
            out_specs=pl.BlockSpec((None, q_tile, C), lambda b, qt: (b, qt, 0)),
            scratch_shapes=[
                pltpu.VMEM((L_pad, C), cd),            # concatenated K (zero-padded)
                pltpu.VMEM((L_pad, C), cd),            # concatenated V (zero-padded)
                pltpu.VMEM((q_tile, C), jnp.float32),  # per-tile attention output
            ],
        ),
        compiler_params=pltpu.CompilerParams(
            # Batch axis exposes parallelism across TensorCores (v7x); the
            # query-tile axis must stay "arbitrary" because K/V scratch is
            # carried across tiles of the same batch element.
            dimension_semantics=("parallel", "arbitrary"),
            vmem_limit_bytes=32 * 1024 * 1024,
        ),
    )(x, pk, pv, w_q, w_k, w_v, w_p, b_proj)


def reference(x, prefix_k, prefix_v, w_qkv, w_proj, b_proj, num_heads,
              compute_dtype=jnp.bfloat16):
    """Pure-JAX reference mirroring the PyTorch forward (eval mode) with the
    same bf16-input / f32-accumulate cast placement as the kernel."""
    B, N, C = x.shape
    H = num_heads
    D = C // H
    cd = compute_dtype
    f32 = jnp.float32

    qkv = jnp.dot(x.astype(cd), w_qkv.astype(cd), preferred_element_type=f32)
    qkv = qkv.reshape(B, N, 3, H, D).transpose(2, 0, 3, 1, 4)
    q, k, v = qkv[0], qkv[1], qkv[2]                       # (B, H, N, D) f32
    P = prefix_k.shape[1]
    pk = prefix_k.reshape(B, P, H, D).transpose(0, 2, 1, 3).astype(f32)
    pv = prefix_v.reshape(B, P, H, D).transpose(0, 2, 1, 3).astype(f32)
    k = jnp.concatenate([pk, k], axis=2)
    v = jnp.concatenate([pv, v], axis=2)
    q = (q * (D ** -0.5)).astype(cd)
    s = jnp.einsum('bhnd,bhmd->bhnm', q, k.astype(cd), preferred_element_type=f32)
    m = jnp.max(s, axis=-1, keepdims=True)
    p = jnp.exp(s - m)
    denom = jnp.sum(p, axis=-1, keepdims=True)
    out = jnp.einsum('bhnm,bhmd->bhnd', p.astype(cd), v.astype(cd),
                     preferred_element_type=f32) / denom
    out = out.transpose(0, 2, 1, 3).reshape(B, N, C)
    return jnp.dot(out.astype(cd), w_proj.astype(cd),
                   preferred_element_type=f32) + b_proj


if __name__ == "__main__":
    B, N, C = 2, 16, 32
    num_heads = 8          # head_dim = 4
    P = 4                  # number of prefix tokens
    TQ = 8                 # query tile -> grid (B, 2): exercises K/V caching

    key = jax.random.PRNGKey(0)
    kx, kpk, kpv, kwqkv, kwproj, kbproj = jax.random.split(key, 6)

    x = jax.random.normal(kx, (B, N, C), dtype=jnp.float32)
    prefix_k = jax.random.normal(kpk, (B, P, C), dtype=jnp.float32)
    prefix_v = jax.random.normal(kpv, (B, P, C), dtype=jnp.float32)

    # Deterministic nn.Linear-like params, pre-transposed to (in, out).
    w_qkv = jax.random.normal(kwqkv, (C, 3 * C), dtype=jnp.float32) * (C ** -0.5)
    w_proj = jax.random.normal(kwproj, (C, C), dtype=jnp.float32) * (C ** -0.5)
    b_proj = jax.random.normal(kbproj, (1, C), dtype=jnp.float32) * 0.02

    out = attention_with_prefix(x, prefix_k, prefix_v, w_qkv, w_proj, b_proj,
                                num_heads=num_heads, q_tile=TQ)
    out = jax.block_until_ready(out)

    ref = reference(x, prefix_k, prefix_v, w_qkv, w_proj, b_proj, num_heads)
    assert out.shape == (B, N, C)
    assert jnp.allclose(out, ref, atol=5e-2, rtol=5e-2), (
        "mismatch vs reference: max abs err = "
        f"{float(jnp.max(jnp.abs(out - ref)))}")

    print("KERNEL_OK")
</pallas_src>

<mosaic_0001>
module attributes {stable_mosaic.version = 11 : i64} {
  func.func @attention_with_prefix_kernel(%arg0: i32, %arg1: i32, %arg2: memref<1x16x32xf32, #tpu.memory_space<vmem>>, %arg3: memref<1x4x32xbf16, #tpu.memory_space<vmem>>, %arg4: memref<1x4x32xbf16, #tpu.memory_space<vmem>>, %arg5: memref<32x32xbf16, #tpu.memory_space<vmem>>, %arg6: memref<32x32xbf16, #tpu.memory_space<vmem>>, %arg7: memref<32x32xbf16, #tpu.memory_space<vmem>>, %arg8: memref<32x32xbf16, #tpu.memory_space<vmem>>, %arg9: memref<1x32xf32, #tpu.memory_space<vmem>>, %arg10: memref<1x8x32xf32, #tpu.memory_space<vmem>>, %arg11: memref<128x32xbf16, #tpu.memory_space<vmem>>, %arg12: memref<128x32xbf16, #tpu.memory_space<vmem>>, %arg13: memref<8x32xf32, #tpu.memory_space<vmem>>) attributes {dimension_semantics = [#tpu.dimension_semantics<parallel>, #tpu.dimension_semantics<arbitrary>], iteration_bounds = array<i64: 2, 2>, scalar_prefetch = 0 : i64, scratch_operands = 3 : i64, tpu.core_type = #tpu.core_type<tc>, window_params = [{transform_indices = @transform_0, window_bounds = array<i64: 1, 16, 32>}, {transform_indices = @transform_1, window_bounds = array<i64: 1, 4, 32>}, {transform_indices = @transform_2, window_bounds = array<i64: 1, 4, 32>}, {pipeline_mode = #tpu.pipeline_mode<synchronous>, transform_indices = @transform_3, window_bounds = array<i64: 32, 32>}, {pipeline_mode = #tpu.pipeline_mode<synchronous>, transform_indices = @transform_4, window_bounds = array<i64: 32, 32>}, {pipeline_mode = #tpu.pipeline_mode<synchronous>, transform_indices = @transform_5, window_bounds = array<i64: 32, 32>}, {pipeline_mode = #tpu.pipeline_mode<synchronous>, transform_indices = @transform_6, window_bounds = array<i64: 32, 32>}, {pipeline_mode = #tpu.pipeline_mode<synchronous>, transform_indices = @transform_7, window_bounds = array<i64: 1, 32>}, {transform_indices = @transform_8, window_bounds = array<i64: 1, 8, 32>}]} {
    %c0_i32 = arith.constant 0 : i32
    %0 = arith.cmpi eq, %arg1, %c0_i32 : i32
    %1 = arith.extui %0 : i1 to i32
    %c0_i32_0 = arith.constant 0 : i32
    %2 = arith.cmpi ne, %1, %c0_i32_0 : i32
    scf.if %2 {
      %cst_91 = arith.constant 0.000000e+00 : bf16
      %188 = vector.broadcast %cst_91 : bf16 to vector<128x32xbf16>
      %c0_92 = arith.constant 0 : index
      %c0_93 = arith.constant 0 : index
      %189 = vector.load %arg11[%c0_92, %c0_93] : memref<128x32xbf16, #tpu.memory_space<vmem>>, vector<128x32xbf16>
      tpu.vector_store %arg11[%c0_92, %c0_93], %188 {strides = array<i32>} : memref<128x32xbf16, #tpu.memory_space<vmem>>, vector<128x32xbf16>,
      %cst_94 = arith.constant 0.000000e+00 : bf16
      %190 = vector.broadcast %cst_94 : bf16 to vector<128x32xbf16>
      %c0_95 = arith.constant 0 : index
      %c0_96 = arith.constant 0 : index
      %191 = vector.load %arg12[%c0_95, %c0_96] : memref<128x32xbf16, #tpu.memory_space<vmem>>, vector<128x32xbf16>
      tpu.vector_store %arg12[%c0_95, %c0_96], %190 {strides = array<i32>} : memref<128x32xbf16, #tpu.memory_space<vmem>>, vector<128x32xbf16>,
      %c0_97 = arith.constant 0 : index
      %c0_98 = arith.constant 0 : index
      %c0_99 = arith.constant 0 : index
      %192 = vector.load %arg3[%c0_97, %c0_98, %c0_99] : memref<1x4x32xbf16, #tpu.memory_space<vmem>>, vector<1x4x32xbf16>
      %193 = vector.shape_cast %192 : vector<1x4x32xbf16> to vector<4x32xbf16>
      %c0_100 = arith.constant 0 : index
      %c0_101 = arith.constant 0 : index
      %194 = vector.load %arg11[%c0_100, %c0_101] : memref<128x32xbf16, #tpu.memory_space<vmem>>, vector<4x32xbf16>
      tpu.vector_store %arg11[%c0_100, %c0_101], %193 {strides = array<i32>} : memref<128x32xbf16, #tpu.memory_space<vmem>>, vector<4x32xbf16>,
      %c0_102 = arith.constant 0 : index
      %c0_103 = arith.constant 0 : index
      %c0_104 = arith.constant 0 : index
      %195 = vector.load %arg4[%c0_102, %c0_103, %c0_104] : memref<1x4x32xbf16, #tpu.memory_space<vmem>>, vector<1x4x32xbf16>
      %196 = vector.shape_cast %195 : vector<1x4x32xbf16> to vector<4x32xbf16>
      %c0_105 = arith.constant 0 : index
      %c0_106 = arith.constant 0 : index
      %197 = vector.load %arg12[%c0_105, %c0_106] : memref<128x32xbf16, #tpu.memory_space<vmem>>, vector<4x32xbf16>
      tpu.vector_store %arg12[%c0_105, %c0_106], %196 {strides = array<i32>} : memref<128x32xbf16, #tpu.memory_space<vmem>>, vector<4x32xbf16>,
      %c0_107 = arith.constant 0 : index
      %c0_108 = arith.constant 0 : index
      %c0_109 = arith.constant 0 : index
      %198 = vector.load %arg2[%c0_107, %c0_108, %c0_109] : memref<1x16x32xf32, #tpu.memory_space<vmem>>, vector<1x16x32xf32>
      %199 = vector.shape_cast %198 : vector<1x16x32xf32> to vector<16x32xf32>
      %200 = arith.truncf %199 : vector<16x32xf32> to vector<16x32xbf16>
      %c0_110 = arith.constant 0 : index
      %c0_111 = arith.constant 0 : index
      %201 = vector.load %arg6[%c0_110, %c0_111] : memref<32x32xbf16, #tpu.memory_space<vmem>>, vector<32x32xbf16>
      %cst_112 = arith.constant dense<0.000000e+00> : vector<16x32xf32>
      %202 = tpu.matmul %200, %201, %cst_112 {dimension_numbers = #tpu.dot_dimension_numbers<[1], [0], [0], [1], [0, 0, 1, 1], [], []>} : vector<16x32xbf16>, vector<32x32xbf16>, vector<16x32xf32> -> vector<16x32xf32>
      %203 = arith.truncf %202 : vector<16x32xf32> to vector<16x32xbf16>
      %c8_113 = arith.constant 8 : index
      %c0_114 = arith.constant 0 : index
      %204 = vector.load %arg11[%c8_113, %c0_114] : memref<128x32xbf16, #tpu.memory_space<vmem>>, vector<16x32xbf16>
      tpu.vector_store %arg11[%c8_113, %c0_114], %203 {strides = array<i32>} : memref<128x32xbf16, #tpu.memory_space<vmem>>, vector<16x32xbf16>,
      %c0_115 = arith.constant 0 : index
      %c0_116 = arith.constant 0 : index
      %205 = vector.load %arg7[%c0_115, %c0_116] : memref<32x32xbf16, #tpu.memory_space<vmem>>, vector<32x32xbf16>
      %cst_117 = arith.constant dense<0.000000e+00> : vector<16x32xf32>
      %206 = tpu.matmul %200, %205, %cst_117 {dimension_numbers = #tpu.dot_dimension_numbers<[1], [0], [0], [1], [0, 0, 1, 1], [], []>} : vector<16x32xbf16>, vector<32x32xbf16>, vector<16x32xf32> -> vector<16x32xf32>
      %207 = arith.truncf %206 : vector<16x32xf32> to vector<16x32xbf16>
      %c8_118 = arith.constant 8 : index
      %c0_119 = arith.constant 0 : index
      %208 = vector.load %arg12[%c8_118, %c0_119] : memref<128x32xbf16, #tpu.memory_space<vmem>>, vector<16x32xbf16>
      tpu.vector_store %arg12[%c8_118, %c0_119], %207 {strides = array<i32>} : memref<128x32xbf16, #tpu.memory_space<vmem>>, vector<16x32xbf16>,
    } else {
    }
    %c8_i32 = arith.constant 8 : i32
    %3 = arith.muli %arg1, %c8_i32 : i32
    %4 = tpu.assume_multiple %3, 8 : i32
    %c0 = arith.constant 0 : index
    %5 = arith.index_cast %4 : i32 to index
    %c0_1 = arith.constant 0 : index
    %6 = vector.load %arg2[%c0, %5, %c0_1] : memref<1x16x32xf32, #tpu.memory_space<vmem>>, vector<1x8x32xf32>
    %7 = vector.shape_cast %6 : vector<1x8x32xf32> to vector<8x32xf32>
    %8 = arith.truncf %7 : vector<8x32xf32> to vector<8x32xbf16>
    %c0_2 = arith.constant 0 : index
    %c0_3 = arith.constant 0 : index
    %9 = vector.load %arg5[%c0_2, %c0_3] : memref<32x32xbf16, #tpu.memory_space<vmem>>, vector<32x32xbf16>
    %cst = arith.constant dense<0.000000e+00> : vector<8x32xf32>
    %10 = tpu.matmul %8, %9, %cst {dimension_numbers = #tpu.dot_dimension_numbers<[1], [0], [0], [1], [0, 0, 1, 1], [], []>} : vector<8x32xbf16>, vector<32x32xbf16>, vector<8x32xf32> -> vector<8x32xf32>
    %cst_4 = arith.constant 5.000000e-01 : f32
    %11 = vector.broadcast %cst_4 : f32 to vector<8x32xf32>
    %12 = arith.mulf %10, %11 : vector<8x32xf32>
    %13 = arith.truncf %12 : vector<8x32xf32> to vector<8x32xbf16>
    %14 = tpu.iota {dimensions = array<i32: 1>} : vector<1x128xi32>
    %c4_i32 = arith.constant 4 : i32
    %15 = vector.broadcast %c4_i32 : i32 to vector<1x128xi32>
    %16 = arith.cmpi slt, %14, %15 : vector<1x128xi32>
    %c8_i32_5 = arith.constant 8 : i32
    %17 = vector.broadcast %c8_i32_5 : i32 to vector<1x128xi32>
    %18 = arith.cmpi sge, %14, %17 : vector<1x128xi32>
    %c24_i32 = arith.constant 24 : i32
    %19 = vector.broadcast %c24_i32 : i32 to vector<1x128xi32>
    %20 = arith.cmpi slt, %14, %19 : vector<1x128xi32>
    %21 = arith.andi %18, %20 : vector<1x128xi1>
    %22 = arith.ori %16, %21 : vector<1x128xi1>
    %cst_6 = arith.constant 0.000000e+00 : f32
    %cst_7 = arith.constant -1.000000e+30 : f32
    %23 = vector.broadcast %cst_6 : f32 to vector<1x128xf32>
    %24 = vector.broadcast %cst_7 : f32 to vector<1x128xf32>
    %25 = arith.select %22, %23, %24 : vector<1x128xi1>, vector<1x128xf32>
    %26 = vector.extract_strided_slice %13 {offsets = [0, 0], sizes = [8, 4], strides = [1, 1]} : vector<8x32xbf16> to vector<8x4xbf16>
    %c0_8 = arith.constant 0 : index
    %c0_9 = arith.constant 0 : index
    %27 = vector.load %arg11[%c0_8, %c0_9] : memref<128x32xbf16, #tpu.memory_space<vmem>>, vector<128x4xbf16>
    %c0_10 = arith.constant 0 : index
    %c0_11 = arith.constant 0 : index
    %28 = vector.load %arg12[%c0_10, %c0_11] : memref<128x32xbf16, #tpu.memory_space<vmem>>, vector<128x4xbf16>
    %cst_12 = arith.constant dense<0.000000e+00> : vector<8x128xf32>
    %29 = tpu.matmul %26, %27, %cst_12 {dimension_numbers = #tpu.dot_dimension_numbers<[1], [1], [0], [0], [0, 0, 1, 0], [], []>} : vector<8x4xbf16>, vector<128x4xbf16>, vector<8x128xf32> -> vector<8x128xf32>
    %30 = vector.broadcast %25 : vector<1x128xf32> to vector<8x128xf32>
    %31 = arith.addf %29, %30 : vector<8x128xf32>
    %cst_13 = arith.constant dense<0xFF800000> : vector<8xf32>
    %32 = vector.multi_reduction <maximumf>, %31, %cst_13 [1] : vector<8x128xf32> to vector<8xf32>
    %33 = vector.shape_cast %32 : vector<8xf32> to vector<8x1xf32>
    %34 = vector.broadcast %33 : vector<8x1xf32> to vector<8x128xf32>
    %35 = arith.subf %31, %34 : vector<8x128xf32>
    %36 = math.exp %35 : vector<8x128xf32>
    %cst_14 = arith.constant dense<0.000000e+00> : vector<8xf32>
    %37 = vector.multi_reduction <add>, %36, %cst_14 [1] : vector<8x128xf32> to vector<8xf32>
    %38 = vector.shape_cast %37 : vector<8xf32> to vector<8x1xf32>
    %39 = arith.truncf %36 : vector<8x128xf32> to vector<8x128xbf16>
    %cst_15 = arith.constant dense<0.000000e+00> : vector<8x4xf32>
    %40 = tpu.matmul %39, %28, %cst_15 {dimension_numbers = #tpu.dot_dimension_numbers<[1], [0], [0], [1], [0, 0, 1, 1], [], []>} : vector<8x128xbf16>, vector<128x4xbf16>, vector<8x4xf32> -> vector<8x4xf32>
    %41 = tpu.reciprocal %38 {approx = true} : vector<8x1xf32> -> vector<8x1xf32>
    %42 = vector.broadcast %41 : vector<8x1xf32> to vector<8x4xf32>
    %43 = arith.mulf %40, %42 : vector<8x4xf32>
    %c0_16 = arith.constant 0 : index
    %c0_17 = arith.constant 0 : index
    %44 = vector.load %arg13[%c0_16, %c0_17] : memref<8x32xf32, #tpu.memory_space<vmem>>, vector<8x4xf32>
    tpu.vector_store %arg13[%c0_16, %c0_17], %43 {strides = array<i32>} : memref<8x32xf32, #tpu.memory_space<vmem>>, vector<8x4xf32>,
    %45 = vector.extract_strided_slice %13 {offsets = [0, 4], sizes = [8, 4], strides = [1, 1]} : vector<8x32xbf16> to vector<8x4xbf16>
    %c0_18 = arith.constant 0 : index
    %c4 = arith.constant 4 : index
    %46 = vector.load %arg11[%c0_18, %c4] : memref<128x32xbf16, #tpu.memory_space<vmem>>, vector<128x4xbf16>
    %c0_19 = arith.constant 0 : index
    %c4_20 = arith.constant 4 : index
    %47 = vector.load %arg12[%c0_19, %c4_20] : memref<128x32xbf16, #tpu.memory_space<vmem>>, vector<128x4xbf16>
    %cst_21 = arith.constant dense<0.000000e+00> : vector<8x128xf32>
    %48 = tpu.matmul %45, %46, %cst_21 {dimension_numbers = #tpu.dot_dimension_numbers<[1], [1], [0], [0], [0, 0, 1, 0], [], []>} : vector<8x4xbf16>, vector<128x4xbf16>, vector<8x128xf32> -> vector<8x128xf32>
    %49 = vector.broadcast %25 : vector<1x128xf32> to vector<8x128xf32>
    %50 = arith.addf %48, %49 : vector<8x128xf32>
    %cst_22 = arith.constant dense<0xFF800000> : vector<8xf32>
    %51 = vector.multi_reduction <maximumf>, %50, %cst_22 [1] : vector<8x128xf32> to vector<8xf32>
    %52 = vector.shape_cast %51 : vector<8xf32> to vector<8x1xf32>
    %53 = vector.broadcast %52 : vector<8x1xf32> to vector<8x128xf32>
    %54 = arith.subf %50, %53 : vector<8x128xf32>
    %55 = math.exp %54 : vector<8x128xf32>
    %cst_23 = arith.constant dense<0.000000e+00> : vector<8xf32>
    %56 = vector.multi_reduction <add>, %55, %cst_23 [1] : vector<8x128xf32> to vector<8xf32>
    %57 = vector.shape_cast %56 : vector<8xf32> to vector<8x1xf32>
    %58 = arith.truncf %55 : vector<8x128xf32> to vector<8x128xbf16>
    %cst_24 = arith.constant dense<0.000000e+00> : vector<8x4xf32>
    %59 = tpu.matmul %58, %47, %cst_24 {dimension_numbers = #tpu.dot_dimension_numbers<[1], [0], [0], [1], [0, 0, 1, 1], [], []>} : vector<8x128xbf16>, vector<128x4xbf16>, vector<8x4xf32> -> vector<8x4xf32>
    %60 = tpu.reciprocal %57 {approx = true} : vector<8x1xf32> -> vector<8x1xf32>
    %61 = vector.broadcast %60 : vector<8x1xf32> to vector<8x4xf32>
    %62 = arith.mulf %59, %61 : vector<8x4xf32>
    %c0_25 = arith.constant 0 : index
    %c4_26 = arith.constant 4 : index
    %63 = vector.load %arg13[%c0_25, %c4_26] : memref<8x32xf32, #tpu.memory_space<vmem>>, vector<8x4xf32>
    tpu.vector_store %arg13[%c0_25, %c4_26], %62 {strides = array<i32>} : memref<8x32xf32, #tpu.memory_space<vmem>>, vector<8x4xf32>,
    %64 = vector.extract_strided_slice %13 {offsets = [0, 8], sizes = [8, 4], strides = [1, 1]} : vector<8x32xbf16> to vector<8x4xbf16>
    %c0_27 = arith.constant 0 : index
    %c8 = arith.constant 8 : index
    %65 = vector.load %arg11[%c0_27, %c8] : memref<128x32xbf16, #tpu.memory_space<vmem>>, vector<128x4xbf16>
    %c0_28 = arith.constant 0 : index
    %c8_29 = arith.constant 8 : index
    %66 = vector.load %arg12[%c0_28, %c8_29] : memref<128x32xbf16, #tpu.memory_space<vmem>>, vector<128x4xbf16>
    %cst_30 = arith.constant dense<0.000000e+00> : vector<8x128xf32>
    %67 = tpu.matmul %64, %65, %cst_30 {dimension_numbers = #tpu.dot_dimension_numbers<[1], [1], [0], [0], [0, 0, 1, 0], [], []>} : vector<8x4xbf16>, vector<128x4xbf16>, vector<8x128xf32> -> vector<8x128xf32>
    %68 = vector.broadcast %25 : vector<1x128xf32> to vector<8x128xf32>
    %69 = arith.addf %67, %68 : vector<8x128xf32>
    %cst_31 = arith.constant dense<0xFF800000> : vector<8xf32>
    %70 = vector.multi_reduction <maximumf>, %69, %cst_31 [1] : vector<8x128xf32> to vector<8xf32>
    %71 = vector.shape_cast %70 : vector<8xf32> to vector<8x1xf32>
    %72 = vector.broadcast %71 : vector<8x1xf32> to vector<8x128xf32>
    %73 = arith.subf %69, %72 : vector<8x128xf32>
    %74 = math.exp %73 : vector<8x128xf32>
    %cst_32 = arith.constant dense<0.000000e+00> : vector<8xf32>
    %75 = vector.multi_reduction <add>, %74, %cst_32 [1] : vector<8x128xf32> to vector<8xf32>
    %76 = vector.shape_cast %75 : vector<8xf32> to vector<8x1xf32>
    %77 = arith.truncf %74 : vector<8x128xf32> to vector<8x128xbf16>
    %cst_33 = arith.constant dense<0.000000e+00> : vector<8x4xf32>
    %78 = tpu.matmul %77, %66, %cst_33 {dimension_numbers = #tpu.dot_dimension_numbers<[1], [0], [0], [1], [0, 0, 1, 1], [], []>} : vector<8x128xbf16>, vector<128x4xbf16>, vector<8x4xf32> -> vector<8x4xf32>
    %79 = tpu.reciprocal %76 {approx = true} : vector<8x1xf32> -> vector<8x1xf32>
    %80 = vector.broadcast %79 : vector<8x1xf32> to vector<8x4xf32>
    %81 = arith.mulf %78, %80 : vector<8x4xf32>
    %c0_34 = arith.constant 0 : index
    %c8_35 = arith.constant 8 : index
    %82 = vector.load %arg13[%c0_34, %c8_35] : memref<8x32xf32, #tpu.memory_space<vmem>>, vector<8x4xf32>
    tpu.vector_store %arg13[%c0_34, %c8_35], %81 {strides = array<i32>} : memref<8x32xf32, #tpu.memory_space<vmem>>, vector<8x4xf32>,
    %83 = vector.extract_strided_slice %13 {offsets = [0, 12], sizes = [8, 4], strides = [1, 1]} : vector<8x32xbf16> to vector<8x4xbf16>
    %c0_36 = arith.constant 0 : index
    %c12 = arith.constant 12 : index
    %84 = vector.load %arg11[%c0_36, %c12] : memref<128x32xbf16, #tpu.memory_space<vmem>>, vector<128x4xbf16>
    %c0_37 = arith.constant 0 : index
    %c12_38 = arith.constant 12 : index
    %85 = vector.load %arg12[%c0_37, %c12_38] : memref<128x32xbf16, #tpu.memory_space<vmem>>, vector<128x4xbf16>
    %cst_39 = arith.constant dense<0.000000e+00> : vector<8x128xf32>
    %86 = tpu.matmul %83, %84, %cst_39 {dimension_numbers = #tpu.dot_dimension_numbers<[1], [1], [0], [0], [0, 0, 1, 0], [], []>} : vector<8x4xbf16>, vector<128x4xbf16>, vector<8x128xf32> -> vector<8x128xf32>
    %87 = vector.broadcast %25 : vector<1x128xf32> to vector<8x128xf32>
    %88 = arith.addf %86, %87 : vector<8x128xf32>
    %cst_40 = arith.constant dense<0xFF800000> : vector<8xf32>
    %89 = vector.multi_reduction <maximumf>, %88, %cst_40 [1] : vector<8x128xf32> to vector<8xf32>
    %90 = vector.shape_cast %89 : vector<8xf32> to vector<8x1xf32>
    %91 = vector.broadcast %90 : vector<8x1xf32> to vector<8x128xf32>
    %92 = arith.subf %88, %91 : vector<8x128xf32>
    %93 = math.exp %92 : vector<8x128xf32>
    %cst_41 = arith.constant dense<0.000000e+00> : vector<8xf32>
    %94 = vector.multi_reduction <add>, %93, %cst_41 [1] : vector<8x128xf32> to vector<8xf32>
    %95 = vector.shape_cast %94 : vector<8xf32> to vector<8x1xf32>
    %96 = arith.truncf %93 : vector<8x128xf32> to vector<8x128xbf16>
    %cst_42 = arith.constant dense<0.000000e+00> : vector<8x4xf32>
    %97 = tpu.matmul %96, %85, %cst_42 {dimension_numbers = #tpu.dot_dimension_numbers<[1], [0], [0], [1], [0, 0, 1, 1], [], []>} : vector<8x128xbf16>, vector<128x4xbf16>, vector<8x4xf32> -> vector<8x4xf32>
    %98 = tpu.reciprocal %95 {approx = true} : vector<8x1xf32> -> vector<8x1xf32>
    %99 = vector.broadcast %98 : vector<8x1xf32> to vector<8x4xf32>
    %100 = arith.mulf %97, %99 : vector<8x4xf32>
    %c0_43 = arith.constant 0 : index
    %c12_44 = arith.constant 12 : index
    %101 = vector.load %arg13[%c0_43, %c12_44] : memref<8x32xf32, #tpu.memory_space<vmem>>, vector<8x4xf32>
    tpu.vector_store %arg13[%c0_43, %c12_44], %100 {strides = array<i32>} : memref<8x32xf32, #tpu.memory_space<vmem>>, vector<8x4xf32>,
    %102 = vector.extract_strided_slice %13 {offsets = [0, 16], sizes = [8, 4], strides = [1, 1]} : vector<8x32xbf16> to vector<8x4xbf16>
    %c0_45 = arith.constant 0 : index
    %c16 = arith.constant 16 : index
    %103 = vector.load %arg11[%c0_45, %c16] : memref<128x32xbf16, #tpu.memory_space<vmem>>, vector<128x4xbf16>
    %c0_46 = arith.constant 0 : index
    %c16_47 = arith.constant 16 : index
    %104 = vector.load %arg12[%c0_46, %c16_47] : memref<128x32xbf16, #tpu.memory_space<vmem>>, vector<128x4xbf16>
    %cst_48 = arith.constant dense<0.000000e+00> : vector<8x128xf32>
    %105 = tpu.matmul %102, %103, %cst_48 {dimension_numbers = #tpu.dot_dimension_numbers<[1], [1], [0], [0], [0, 0, 1, 0], [], []>} : vector<8x4xbf16>, vector<128x4xbf16>, vector<8x128xf32> -> vector<8x128xf32>
    %106 = vector.broadcast %25 : vector<1x128xf32> to vector<8x128xf32>
    %107 = arith.addf %105, %106 : vector<8x128xf32>
    %cst_49 = arith.constant dense<0xFF800000> : vector<8xf32>
    %108 = vector.multi_reduction <maximumf>, %107, %cst_49 [1] : vector<8x128xf32> to vector<8xf32>
    %109 = vector.shape_cast %108 : vector<8xf32> to vector<8x1xf32>
    %110 = vector.broadcast %109 : vector<8x1xf32> to vector<8x128xf32>
    %111 = arith.subf %107, %110 : vector<8x128xf32>
    %112 = math.exp %111 : vector<8x128xf32>
    %cst_50 = arith.constant dense<0.000000e+00> : vector<8xf32>
    %113 = vector.multi_reduction <add>, %112, %cst_50 [1] : vector<8x128xf32> to vector<8xf32>
    %114 = vector.shape_cast %113 : vector<8xf32> to vector<8x1xf32>
    %115 = arith.truncf %112 : vector<8x128xf32> to vector<8x128xbf16>
    %cst_51 = arith.constant dense<0.000000e+00> : vector<8x4xf32>
    %116 = tpu.matmul %115, %104, %cst_51 {dimension_numbers = #tpu.dot_dimension_numbers<[1], [0], [0], [1], [0, 0, 1, 1], [], []>} : vector<8x128xbf16>, vector<128x4xbf16>, vector<8x4xf32> -> vector<8x4xf32>
    %117 = tpu.reciprocal %114 {approx = true} : vector<8x1xf32> -> vector<8x1xf32>
    %118 = vector.broadcast %117 : vector<8x1xf32> to vector<8x4xf32>
    %119 = arith.mulf %116, %118 : vector<8x4xf32>
    %c0_52 = arith.constant 0 : index
    %c16_53 = arith.constant 16 : index
    %120 = vector.load %arg13[%c0_52, %c16_53] : memref<8x32xf32, #tpu.memory_space<vmem>>, vector<8x4xf32>
    tpu.vector_store %arg13[%c0_52, %c16_53], %119 {strides = array<i32>} : memref<8x32xf32, #tpu.memory_space<vmem>>, vector<8x4xf32>,
    %121 = vector.extract_strided_slice %13 {offsets = [0, 20], sizes = [8, 4], strides = [1, 1]} : vector<8x32xbf16> to vector<8x4xbf16>
    %c0_54 = arith.constant 0 : index
    %c20 = arith.constant 20 : index
    %122 = vector.load %arg11[%c0_54, %c20] : memref<128x32xbf16, #tpu.memory_space<vmem>>, vector<128x4xbf16>
    %c0_55 = arith.constant 0 : index
    %c20_56 = arith.constant 20 : index
    %123 = vector.load %arg12[%c0_55, %c20_56] : memref<128x32xbf16, #tpu.memory_space<vmem>>, vector<128x4xbf16>
    %cst_57 = arith.constant dense<0.000000e+00> : vector<8x128xf32>
    %124 = tpu.matmul %121, %122, %cst_57 {dimension_numbers = #tpu.dot_dimension_numbers<[1], [1], [0], [0], [0, 0, 1, 0], [], []>} : vector<8x4xbf16>, vector<128x4xbf16>, vector<8x128xf32> -> vector<8x128xf32>
    %125 = vector.broadcast %25 : vector<1x128xf32> to vector<8x128xf32>
    %126 = arith.addf %124, %125 : vector<8x128xf32>
    %cst_58 = arith.constant dense<0xFF800000> : vector<8xf32>
    %127 = vector.multi_reduction <maximumf>, %126, %cst_58 [1] : vector<8x128xf32> to vector<8xf32>
    %128 = vector.shape_cast %127 : vector<8xf32> to vector<8x1xf32>
    %129 = vector.broadcast %128 : vector<8x1xf32> to vector<8x128xf32>
    %130 = arith.subf %126, %129 : vector<8x128xf32>
    %131 = math.exp %130 : vector<8x128xf32>
    %cst_59 = arith.constant dense<0.000000e+00> : vector<8xf32>
    %132 = vector.multi_reduction <add>, %131, %cst_59 [1] : vector<8x128xf32> to vector<8xf32>
    %133 = vector.shape_cast %132 : vector<8xf32> to vector<8x1xf32>
    %134 = arith.truncf %131 : vector<8x128xf32> to vector<8x128xbf16>
    %cst_60 = arith.constant dense<0.000000e+00> : vector<8x4xf32>
    %135 = tpu.matmul %134, %123, %cst_60 {dimension_numbers = #tpu.dot_dimension_numbers<[1], [0], [0], [1], [0, 0, 1, 1], [], []>} : vector<8x128xbf16>, vector<128x4xbf16>, vector<8x4xf32> -> vector<8x4xf32>
    %136 = tpu.reciprocal %133 {approx = true} : vector<8x1xf32> -> vector<8x1xf32>
    %137 = vector.broadcast %136 : vector<8x1xf32> to vector<8x4xf32>
    %138 = arith.mulf %135, %137 : vector<8x4xf32>
    %c0_61 = arith.constant 0 : index
    %c20_62 = arith.constant 20 : index
    %139 = vector.load %arg13[%c0_61, %c20_62] : memref<8x32xf32, #tpu.memory_space<vmem>>, vector<8x4xf32>
    tpu.vector_store %arg13[%c0_61, %c20_62], %138 {strides = array<i32>} : memref<8x32xf32, #tpu.memory_space<vmem>>, vector<8x4xf32>,
    %140 = vector.extract_strided_slice %13 {offsets = [0, 24], sizes = [8, 4], strides = [1, 1]} : vector<8x32xbf16> to vector<8x4xbf16>
    %c0_63 = arith.constant 0 : index
    %c24 = arith.constant 24 : index
    %141 = vector.load %arg11[%c0_63, %c24] : memref<128x32xbf16, #tpu.memory_space<vmem>>, vector<128x4xbf16>
    %c0_64 = arith.constant 0 : index
    %c24_65 = arith.constant 24 : index
    %142 = vector.load %arg12[%c0_64, %c24_65] : memref<128x32xbf16, #tpu.memory_space<vmem>>, vector<128x4xbf16>
    %cst_66 = arith.constant dense<0.000000e+00> : vector<8x128xf32>
    %143 = tpu.matmul %140, %141, %cst_66 {dimension_numbers = #tpu.dot_dimension_numbers<[1], [1], [0], [0], [0, 0, 1, 0], [], []>} : vector<8x4xbf16>, vector<128x4xbf16>, vector<8x128xf32> -> vector<8x128xf32>
    %144 = vector.broadcast %25 : vector<1x128xf32> to vector<8x128xf32>
    %145 = arith.addf %143, %144 : vector<8x128xf32>
    %cst_67 = arith.constant dense<0xFF800000> : vector<8xf32>
    %146 = vector.multi_reduction <maximumf>, %145, %cst_67 [1] : vector<8x128xf32> to vector<8xf32>
    %147 = vector.shape_cast %146 : vector<8xf32> to vector<8x1xf32>
    %148 = vector.broadcast %147 : vector<8x1xf32> to vector<8x128xf32>
    %149 = arith.subf %145, %148 : vector<8x128xf32>
    %150 = math.exp %149 : vector<8x128xf32>
    %cst_68 = arith.constant dense<0.000000e+00> : vector<8xf32>
    %151 = vector.multi_reduction <add>, %150, %cst_68 [1] : vector<8x128xf32> to vector<8xf32>
    %152 = vector.shape_cast %151 : vector<8xf32> to vector<8x1xf32>
    %153 = arith.truncf %150 : vector<8x128xf32> to vector<8x128xbf16>
    %cst_69 = arith.constant dense<0.000000e+00> : vector<8x4xf32>
    %154 = tpu.matmul %153, %142, %cst_69 {dimension_numbers = #tpu.dot_dimension_numbers<[1], [0], [0], [1], [0, 0, 1, 1], [], []>} : vector<8x128xbf16>, vector<128x4xbf16>, vector<8x4xf32> -> vector<8x4xf32>
    %155 = tpu.reciprocal %152 {approx = true} : vector<8x1xf32> -> vector<8x1xf32>
    %156 = vector.broadcast %155 : vector<8x1xf32> to vector<8x4xf32>
    %157 = arith.mulf %154, %156 : vector<8x4xf32>
    %c0_70 = arith.constant 0 : index
    %c24_71 = arith.constant 24 : index
    %158 = vector.load %arg13[%c0_70, %c24_71] : memref<8x32xf32, #tpu.memory_space<vmem>>, vector<8x4xf32>
    tpu.vector_store %arg13[%c0_70, %c24_71], %157 {strides = array<i32>} : memref<8x32xf32, #tpu.memory_space<vmem>>, vector<8x4xf32>,
    %159 = vector.extract_strided_slice %13 {offsets = [0, 28], sizes = [8, 4], strides = [1, 1]} : vector<8x32xbf16> to vector<8x4xbf16>
    %c0_72 = arith.constant 0 : index
    %c28 = arith.constant 28 : index
    %160 = vector.load %arg11[%c0_72, %c28] : memref<128x32xbf16, #tpu.memory_space<vmem>>, vector<128x4xbf16>
    %c0_73 = arith.constant 0 : index
    %c28_74 = arith.constant 28 : index
    %161 = vector.load %arg12[%c0_73, %c28_74] : memref<128x32xbf16, #tpu.memory_space<vmem>>, vector<128x4xbf16>
    %cst_75 = arith.constant dense<0.000000e+00> : vector<8x128xf32>
    %162 = tpu.matmul %159, %160, %cst_75 {dimension_numbers = #tpu.dot_dimension_numbers<[1], [1], [0], [0], [0, 0, 1, 0], [], []>} : vector<8x4xbf16>, vector<128x4xbf16>, vector<8x128xf32> -> vector<8x128xf32>
    %163 = vector.broadcast %25 : vector<1x128xf32> to vector<8x128xf32>
    %164 = arith.addf %162, %163 : vector<8x128xf32>
    %cst_76 = arith.constant dense<0xFF800000> : vector<8xf32>
    %165 = vector.multi_reduction <maximumf>, %164, %cst_76 [1] : vector<8x128xf32> to vector<8xf32>
    %166 = vector.shape_cast %165 : vector<8xf32> to vector<8x1xf32>
    %167 = vector.broadcast %166 : vector<8x1xf32> to vector<8x128xf32>
    %168 = arith.subf %164, %167 : vector<8x128xf32>
    %169 = math.exp %168 : vector<8x128xf32>
    %cst_77 = arith.constant dense<0.000000e+00> : vector<8xf32>
    %170 = vector.multi_reduction <add>, %169, %cst_77 [1] : vector<8x128xf32> to vector<8xf32>
    %171 = vector.shape_cast %170 : vector<8xf32> to vector<8x1xf32>
    %172 = arith.truncf %169 : vector<8x128xf32> to vector<8x128xbf16>
    %cst_78 = arith.constant dense<0.000000e+00> : vector<8x4xf32>
    %173 = tpu.matmul %172, %161, %cst_78 {dimension_numbers = #tpu.dot_dimension_numbers<[1], [0], [0], [1], [0, 0, 1, 1], [], []>} : vector<8x128xbf16>, vector<128x4xbf16>, vector<8x4xf32> -> vector<8x4xf32>
    %174 = tpu.reciprocal %171 {approx = true} : vector<8x1xf32> -> vector<8x1xf32>
    %175 = vector.broadcast %174 : vector<8x1xf32> to vector<8x4xf32>
    %176 = arith.mulf %173, %175 : vector<8x4xf32>
    %c0_79 = arith.constant 0 : index
    %c28_80 = arith.constant 28 : index
    %177 = vector.load %arg13[%c0_79, %c28_80] : memref<8x32xf32, #tpu.memory_space<vmem>>, vector<8x4xf32>
    tpu.vector_store %arg13[%c0_79, %c28_80], %176 {strides = array<i32>} : memref<8x32xf32, #tpu.memory_space<vmem>>, vector<8x4xf32>,
    %c0_81 = arith.constant 0 : index
    %c0_82 = arith.constant 0 : index
    %178 = vector.load %arg13[%c0_81, %c0_82] : memref<8x32xf32, #tpu.memory_space<vmem>>, vector<8x32xf32>
    %179 = arith.truncf %178 : vector<8x32xf32> to vector<8x32xbf16>
    %c0_83 = arith.constant 0 : index
    %c0_84 = arith.constant 0 : index
    %180 = vector.load %arg8[%c0_83, %c0_84] : memref<32x32xbf16, #tpu.memory_space<vmem>>, vector<32x32xbf16>
    %cst_85 = arith.constant dense<0.000000e+00> : vector<8x32xf32>
    %181 = tpu.matmul %179, %180, %cst_85 {dimension_numbers = #tpu.dot_dimension_numbers<[1], [0], [0], [1], [0, 0, 1, 1], [], []>} : vector<8x32xbf16>, vector<32x32xbf16>, vector<8x32xf32> -> vector<8x32xf32>
    %c0_86 = arith.constant 0 : index
    %c0_87 = arith.constant 0 : index
    %182 = vector.load %arg9[%c0_86, %c0_87] : memref<1x32xf32, #tpu.memory_space<vmem>>, vector<1x32xf32>
    %183 = vector.broadcast %182 : vector<1x32xf32> to vector<8x32xf32>
    %184 = arith.addf %181, %183 : vector<8x32xf32>
    %c0_88 = arith.constant 0 : index
    %c0_89 = arith.constant 0 : index
    %c0_90 = arith.constant 0 : index
    %185 = vector.load %arg10[%c0_88, %c0_89, %c0_90] : memref<1x8x32xf32, #tpu.memory_space<vmem>>, vector<1x8x32xf32>
    %186 = vector.shape_cast %185 : vector<1x8x32xf32> to vector<8x32xf32>
    %187 = vector.shape_cast %184 : vector<8x32xf32> to vector<1x8x32xf32>
    tpu.vector_store %arg10[%c0_88, %c0_89, %c0_90], %187 {strides = array<i32>} : memref<1x8x32xf32, #tpu.memory_space<vmem>>, vector<1x8x32xf32>,
    return
  }
  func.func @transform_0(%arg0: i32, %arg1: i32) -> (i32, i32, i32) {
    %c0_i32 = arith.constant 0 : i32
    %c0_i32_0 = arith.constant 0 : i32
    %c0_i32_1 = arith.constant 0 : i32
    return %arg0, %c0_i32, %c0_i32_0 : i32, i32, i32
  }
  func.func @transform_1(%arg0: i32, %arg1: i32) -> (i32, i32, i32) {
    %c0_i32 = arith.constant 0 : i32
    %c0_i32_0 = arith.constant 0 : i32
    %c0_i32_1 = arith.constant 0 : i32
    return %arg0, %c0_i32, %c0_i32_0 : i32, i32, i32
  }
  func.func @transform_2(%arg0: i32, %arg1: i32) -> (i32, i32, i32) {
    %c0_i32 = arith.constant 0 : i32
    %c0_i32_0 = arith.constant 0 : i32
    %c0_i32_1 = arith.constant 0 : i32
    return %arg0, %c0_i32, %c0_i32_0 : i32, i32, i32
  }
  func.func @transform_3(%arg0: i32, %arg1: i32) -> (i32, i32) {
    %c0_i32 = arith.constant 0 : i32
    %c0_i32_0 = arith.constant 0 : i32
    %c0_i32_1 = arith.constant 0 : i32
    return %c0_i32, %c0_i32_0 : i32, i32
  }
  func.func @transform_4(%arg0: i32, %arg1: i32) -> (i32, i32) {
    %c0_i32 = arith.constant 0 : i32
    %c0_i32_0 = arith.constant 0 : i32
    %c0_i32_1 = arith.constant 0 : i32
    return %c0_i32, %c0_i32_0 : i32, i32
  }
  func.func @transform_5(%arg0: i32, %arg1: i32) -> (i32, i32) {
    %c0_i32 = arith.constant 0 : i32
    %c0_i32_0 = arith.constant 0 : i32
    %c0_i32_1 = arith.constant 0 : i32
    return %c0_i32, %c0_i32_0 : i32, i32
  }
  func.func @transform_6(%arg0: i32, %arg1: i32) -> (i32, i32) {
    %c0_i32 = arith.constant 0 : i32
    %c0_i32_0 = arith.constant 0 : i32
    %c0_i32_1 = arith.constant 0 : i32
    return %c0_i32, %c0_i32_0 : i32, i32
  }
  func.func @transform_7(%arg0: i32, %arg1: i32) -> (i32, i32) {
    %c0_i32 = arith.constant 0 : i32
    %c0_i32_0 = arith.constant 0 : i32
    %c0_i32_1 = arith.constant 0 : i32
    return %c0_i32, %c0_i32_0 : i32, i32
  }
  func.func @transform_8(%arg0: i32, %arg1: i32) -> (i32, i32, i32) {
    %c0_i32 = arith.constant 0 : i32
    %c0_i32_0 = arith.constant 0 : i32
    return %arg0, %arg1, %c0_i32 : i32, i32, i32
  }
}

</mosaic_0001>

<llo_original>
// kernel: tpu_custom_call.1
$region0: #{tpu_custom_call.1}
  #allocation0 [shape = 'u32[]', space=smem, size = 0x4, offset = 0x4, fixed_abs, tag = 'smem constant byte address 0x4 - core index']
  #allocation1 [shape = 'u32[144,128]{1,0:T(1,128)}', space=vmem, size = 0x12000, scoped, tag = 'internal scratch']
  #allocation2 [shape = 'bf16[128,32]{1,0:T(8,128)(2,1)}', space=vmem, size = 0x8000, scoped, tag = 'scratch operand']
  #allocation3 [shape = 'bf16[128,32]{1,0:T(8,128)(2,1)}', space=vmem, size = 0x8000, scoped, tag = 'scratch operand']
  #allocation4 [shape = 'f32[8,32]{1,0:T(8,128)}', space=vmem, size = 0x1000, scoped, tag = 'scratch operand']
  %s0 = inlined_call_operand.hbm [shape: f32[2,16,32], index: 0, kind: input, shape index: {}]
  %s1 = inlined_call_operand.hbm [shape: bf16[2,4,32], index: 1, kind: input, shape index: {}]
  %s2 = inlined_call_operand.hbm [shape: bf16[2,4,32], index: 2, kind: input, shape index: {}]
  %s3 = inlined_call_operand.hbm [shape: bf16[32,32], index: 3, kind: input, shape index: {}]
  %s4 = inlined_call_operand.hbm [shape: bf16[32,32], index: 4, kind: input, shape index: {}]
  %s5 = inlined_call_operand.hbm [shape: bf16[32,32], index: 5, kind: input, shape index: {}]
  %s6 = inlined_call_operand.hbm [shape: bf16[32,32], index: 6, kind: input, shape index: {}]
  %s7 = inlined_call_operand.vmem [shape: f32[1,32], index: 7, kind: input, shape index: {}]
  %s8 = inlined_call_operand.hbm [shape: f32[2,16,32], index: 8, kind: output, shape index: {}]
  %s9 = sld [smem:[#allocation0]]
  $region97: #{tpu_custom_call.1} parent=0
    _
  %s11 = ssub.s32 1, %s9
  %s12 = scalar_select 0, %s11, %s9
  $region1: #{tpu_custom_call.1} parent=0
    #allocation5 [shape = 'u8[16384]{0}', space=vmem, size = 0x4000, scoped, tag = 'input window, operand 0']
    #allocation6 [shape = 's32[2]{0}', space=sflag, size = 0x8, scoped, tag = 'scoped memory for tpu_custom_call.1']
    #allocation7 [shape = 's32[2]{0}', space=sflag, size = 0x8, scoped, tag = 'scoped memory for tpu_custom_call.1']
    #allocation8 [shape = 'u8[2048]{0}', space=vmem, size = 0x800, scoped, tag = 'input window, operand 1']
    #allocation9 [shape = 's32[2]{0}', space=sflag, size = 0x8, scoped, tag = 'scoped memory for tpu_custom_call.1']
    #allocation10 [shape = 'u8[2048]{0}', space=vmem, size = 0x800, scoped, tag = 'input window, operand 2']
    #allocation11 [shape = 'u8[8192]{0}', space=vmem, size = 0x2000, scoped, tag = 'input window, operand 3, single buffered']
    #allocation12 [shape = 's32[1]{0}', space=sflag, size = 0x4, scoped, tag = 'scoped memory for tpu_custom_call.1']
    #allocation13 [shape = 'u8[8192]{0}', space=vmem, size = 0x2000, scoped, tag = 'input window, operand 4, single buffered']
    #allocation14 [shape = 'u8[8192]{0}', space=vmem, size = 0x2000, scoped, tag = 'input window, operand 5, single buffered']
    #allocation15 [shape = 's32[1]{0}', space=sflag, size = 0x4, scoped, tag = 'scoped memory for tpu_custom_call.1']
    #allocation16 [shape = 'u8[8192]{0}', space=vmem, size = 0x2000, scoped, tag = 'input window, operand 6, single buffered']
    #allocation17 [shape = 'u8[8192]{0}', space=vmem, size = 0x2000, scoped, tag = 'output window, operand 0']
    %13 = vsyncpa [#allocation6], 0
    %s14 = scalar_lea.sflag [#allocation6], 1
    %15 = vsyncpa %s14, 0
    %16 = vsyncpa [#allocation9], 0
    %s17 = scalar_lea.sflag [#allocation9], 1
    %18 = vsyncpa %s17, 0
    %19 = vsyncpa [#allocation12], 0
    %20 = vsyncpa [#allocation15], 0
    %21 = vsyncpa [#allocation7], 0
    %s22 = scalar_lea.sflag [#allocation7], 1
    %23 = vsyncpa %s22, 0
    loop: start=0, step=1, limit=6
    $region2: #{tpu_custom_call.1} parent=1 // loop_pre_header
      _
    $region3: #{tpu_custom_call.1} parent=1 // loop_header
      %s25 = sphi 0, %s29
      %p26 = scmp.ge.s32.totalorder %s25, 6
      %s32 = sphi 0, %s44
      %s33 = sphi 0, %s40
      %s34 = sphi 0, %s32
      %s35 = sphi 0, %s33
      %s36 = sphi 0, %s34
      %s37 = sphi 0, %s35
      %s47 = sphi 0, %s49
      %s50 = sphi 0, %s47
      %s51 = sphi 0, %s50
      %s67 = sphi 0, %s51
      %s73 = sphi 0, %s75
      %s76 = sphi 0, %s73
      %s77 = sphi 0, %s76
      %s93 = sphi 0, %s77
      %s99 = sphi 0, %s101
      %s102 = sphi 0, %s99
      %s103 = sphi 0, %s102
      %s119 = sphi 0, %s103
      %s123 = sphi 0, %s123
      %s125 = sphi 0, %s123
      %s126 = sphi 0, %s125
      %s140 = sphi 0, %s126
      %s144 = sphi 0, %s144
      %s146 = sphi 0, %s144
      %s147 = sphi 0, %s146
      %s161 = sphi 0, %s147
      %s165 = sphi 0, %s165
      %s167 = sphi 0, %s165
      %s168 = sphi 0, %s167
      %s182 = sphi 0, %s168
      %s186 = sphi 0, %s186
      %s188 = sphi 0, %s186
      %s189 = sphi 0, %s188
      %s203 = sphi 0, %s189
      %s207 = sphi 0, %s207
      %s209 = sphi 0, %s207
      %s210 = sphi 0, %s209
      %s224 = sphi 0, %s210
      %s232 = sphi 0, %s234
      %s235 = sphi 0, %s232
      %s236 = sphi 0, %s235
      %s252 = sphi 0, %s236
    $region4: #{tpu_custom_call.1} parent=1 // loop_header_branch
      %28 = sbr.rel (%p26) target = $region8
    $region5: #{tpu_custom_call.1} parent=1 // loop_body
      %s30 = ssub.s32 %s25, 1
      %s31 = ssub.s32 %s25, 2
      %s38 = sadd.s32 1, %s33
      %p39 = scmp.ge.s32.totalorder %s38, 2
      %s40 = scalar_select %p39, 0, %s38
      %s41 = sadd.s32 1, %s32
      %s42 = scalar_select %p39, %s41, %s32
      %p43 = scmp.ge.s32.totalorder %s42, 2
      %s44 = scalar_select %p43, 0, %s42
      %s45 = ssub.s32 %s32, %s44
      %p46 = scmp.eq.s32.totalorder %s45, 0
      %s48 = sadd.s32 %s47, 1
      %s49 = scalar_select %p46, %s47, %s48
      %p52 = pneg %p46
      %p53 = scmp.eq.s32.totalorder %s25, 3
      %p54 = por %p52, %p53
      %p55 = scmp.ne.s32.totalorder %s47, %s50
      %p56 = scmp.eq.s32.totalorder %s25, 0
      %p57 = por %p55, %p56
      %p58 = scmp.ne.s32.totalorder %s47, %s50
      %p59 = scmp.eq.s32.totalorder %s30, 3
      %p60 = por %p58, %p59
      %p61 = scmp.ne.s32.totalorder %s50, %s51
      %p62 = scmp.eq.s32.totalorder %s30, 0
      %p63 = por %p61, %p62
      %p64 = scmp.ne.s32.totalorder %s50, %s51
      %p65 = scmp.eq.s32.totalorder %s31, 3
      %p66 = por %p64, %p65
      %p68 = scmp.ne.s32.totalorder %s51, %s67
      %p69 = scmp.eq.s32.totalorder %s31, 0
      %p70 = por %p68, %p69
      %s71 = ssub.s32 %s32, %s44
      %p72 = scmp.eq.s32.totalorder %s71, 0
      %s74 = sadd.s32 %s73, 1
      %s75 = scalar_select %p72, %s73, %s74
      %p78 = pneg %p72
      %p79 = scmp.eq.s32.totalorder %s25, 3
      %p80 = por %p78, %p79
      %p81 = scmp.ne.s32.totalorder %s73, %s76
      %p82 = scmp.eq.s32.totalorder %s25, 0
      %p83 = por %p81, %p82
      %p84 = scmp.ne.s32.totalorder %s73, %s76
      %p85 = scmp.eq.s32.totalorder %s30, 3
      %p86 = por %p84, %p85
      %p87 = scmp.ne.s32.totalorder %s76, %s77
      %p88 = scmp.eq.s32.totalorder %s30, 0
      %p89 = por %p87, %p88
      %p90 = scmp.ne.s32.totalorder %s76, %s77
      %p91 = scmp.eq.s32.totalorder %s31, 3
      %p92 = por %p90, %p91
      %p94 = scmp.ne.s32.totalorder %s77, %s93
      %p95 = scmp.eq.s32.totalorder %s31, 0
      %p96 = por %p94, %p95
      %s97 = ssub.s32 %s32, %s44
      %p98 = scmp.eq.s32.totalorder %s97, 0
      %s100 = sadd.s32 %s99, 1
      %s101 = scalar_select %p98, %s99, %s100
      %p104 = pneg %p98
      %p105 = scmp.eq.s32.totalorder %s25, 3
      %p106 = por %p104, %p105
      %p107 = scmp.ne.s32.totalorder %s99, %s102
      %p108 = scmp.eq.s32.totalorder %s25, 0
      %p109 = por %p107, %p108
      %p110 = scmp.ne.s32.totalorder %s99, %s102
      %p111 = scmp.eq.s32.totalorder %s30, 3
      %p112 = por %p110, %p111
      %p113 = scmp.ne.s32.totalorder %s102, %s103
      %p114 = scmp.eq.s32.totalorder %s30, 0
      %p115 = por %p113, %p114
      %p116 = scmp.ne.s32.totalorder %s102, %s103
      %p117 = scmp.eq.s32.totalorder %s31, 3
      %p118 = por %p116, %p117
      %p120 = scmp.ne.s32.totalorder %s103, %s119
      %p121 = scmp.eq.s32.totalorder %s31, 0
      %p122 = por %p120, %p121
      %s124 = sadd.s32 %s123, 1
      %p127 = scmp.eq.s32.totalorder %s25, 3
      %p128 = scmp.ne.s32.totalorder %s123, %s125
      %p129 = scmp.eq.s32.totalorder %s25, 0
      %p130 = por %p128, %p129
      %p131 = scmp.ne.s32.totalorder %s123, %s125
      %p132 = scmp.eq.s32.totalorder %s30, 3
      %p133 = por %p131, %p132
      %p134 = scmp.ne.s32.totalorder %s125, %s126
      %p135 = scmp.eq.s32.totalorder %s30, 0
      %p136 = por %p134, %p135
      %p137 = scmp.ne.s32.totalorder %s125, %s126
      %p138 = scmp.eq.s32.totalorder %s31, 3
      %p139 = por %p137, %p138
      %p141 = scmp.ne.s32.totalorder %s126, %s140
      %p142 = scmp.eq.s32.totalorder %s31, 0
      %p143 = por %p141, %p142
      %s145 = sadd.s32 %s144, 1
      %p148 = scmp.eq.s32.totalorder %s25, 3
      %p149 = scmp.ne.s32.totalorder %s144, %s146
      %p150 = scmp.eq.s32.totalorder %s25, 0
      %p151 = por %p149, %p150
      %p152 = scmp.ne.s32.totalorder %s144, %s146
      %p153 = scmp.eq.s32.totalorder %s30, 3
      %p154 = por %p152, %p153
      %p155 = scmp.ne.s32.totalorder %s146, %s147
      %p156 = scmp.eq.s32.totalorder %s30, 0
      %p157 = por %p155, %p156
      %p158 = scmp.ne.s32.totalorder %s146, %s147
      %p159 = scmp.eq.s32.totalorder %s31, 3
      %p160 = por %p158, %p159
      %p162 = scmp.ne.s32.totalorder %s147, %s161
      %p163 = scmp.eq.s32.totalorder %s31, 0
      %p164 = por %p162, %p163
      %s166 = sadd.s32 %s165, 1
      %p169 = scmp.eq.s32.totalorder %s25, 3
      %p170 = scmp.ne.s32.totalorder %s165, %s167
      %p171 = scmp.eq.s32.totalorder %s25, 0
      %p172 = por %p170, %p171
      %p173 = scmp.ne.s32.totalorder %s165, %s167
      %p174 = scmp.eq.s32.totalorder %s30, 3
      %p175 = por %p173, %p174
      %p176 = scmp.ne.s32.totalorder %s167, %s168
      %p177 = scmp.eq.s32.totalorder %s30, 0
      %p178 = por %p176, %p177
      %p179 = scmp.ne.s32.totalorder %s167, %s168
      %p180 = scmp.eq.s32.totalorder %s31, 3
      %p181 = por %p179, %p180
      %p183 = scmp.ne.s32.totalorder %s168, %s182
      %p184 = scmp.eq.s32.totalorder %s31, 0
      %p185 = por %p183, %p184
      %s187 = sadd.s32 %s186, 1
      %p190 = scmp.eq.s32.totalorder %s25, 3
      %p191 = scmp.ne.s32.totalorder %s186, %s188
      %p192 = scmp.eq.s32.totalorder %s25, 0
      %p193 = por %p191, %p192
      %p194 = scmp.ne.s32.totalorder %s186, %s188
      %p195 = scmp.eq.s32.totalorder %s30, 3
      %p196 = por %p194, %p195
      %p197 = scmp.ne.s32.totalorder %s188, %s189
      %p198 = scmp.eq.s32.totalorder %s30, 0
      %p199 = por %p197, %p198
      %p200 = scmp.ne.s32.totalorder %s188, %s189
      %p201 = scmp.eq.s32.totalorder %s31, 3
      %p202 = por %p200, %p201
      %p204 = scmp.ne.s32.totalorder %s189, %s203
      %p205 = scmp.eq.s32.totalorder %s31, 0
      %p206 = por %p204, %p205
      %s208 = sadd.s32 %s207, 1
      %p211 = scmp.eq.s32.totalorder %s25, 3
      %p212 = scmp.ne.s32.totalorder %s207, %s209
      %p213 = scmp.eq.s32.totalorder %s25, 0
      %p214 = por %p212, %p213
      %p215 = scmp.ne.s32.totalorder %s207, %s209
      %p216 = scmp.eq.s32.totalorder %s30, 3
      %p217 = por %p215, %p216
      %p218 = scmp.ne.s32.totalorder %s209, %s210
      %p219 = scmp.eq.s32.totalorder %s30, 0
      %p220 = por %p218, %p219
      %p221 = scmp.ne.s32.totalorder %s209, %s210
      %p222 = scmp.eq.s32.totalorder %s31, 3
      %p223 = por %p221, %p222
      %p225 = scmp.ne.s32.totalorder %s210, %s224
      %p226 = scmp.eq.s32.totalorder %s31, 0
      %p227 = por %p225, %p226
      %s228 = ssub.s32 %s32, %s44
      %s229 = ssub.s32 %s33, %s40
      %s230 = sor.u32 %s228, %s229
      %p231 = scmp.eq.s32.totalorder %s230, 0
      %s233 = sadd.s32 %s232, 1
      %s234 = scalar_select %p231, %s232, %s233
      %p237 = pneg %p231
      %p238 = scmp.eq.s32.totalorder %s25, 3
      %p239 = por %p237, %p238
      %p240 = scmp.ne.s32.totalorder %s232, %s235
      %p241 = scmp.eq.s32.totalorder %s25, 0
      %p242 = por %p240, %p241
      %p243 = scmp.ne.s32.totalorder %s232, %s235
      %p244 = scmp.eq.s32.totalorder %s30, 3
      %p245 = por %p243, %p244
      %p246 = scmp.ne.s32.totalorder %s235, %s236
      %p247 = scmp.eq.s32.totalorder %s30, 0
      %p248 = por %p246, %p247
      %p249 = scmp.ne.s32.totalorder %s235, %s236
      %p250 = scmp.eq.s32.totalorder %s31, 3
      %p251 = por %p249, %p250
      %p253 = scmp.ne.s32.totalorder %s236, %s252
      %p254 = scmp.eq.s32.totalorder %s31, 0
      %p255 = por %p253, %p254
      %p256 = scmp.le.s32.totalorder 1, %s25
      %p257 = scmp.lt.s32.totalorder %s25, 5
      %p258 = pnand %p256, %p257
      %p259 = pneg %p258
      // Predicated region
      $region9: #{tpu_custom_call.1} parent=5 // pred_check
        _
      $region10: #{tpu_custom_call.1} parent=5 // pred_check_branch
        %261 = sbr.rel (%p258) target = $region12
      $region11: #{tpu_custom_call.1} parent=5 // pred_region
        %s262 = ssub.s32 %s25, 1
        // Predicated region
        $region13: #{tpu_custom_call.1} parent=11 // pred_check
          %p263 = pneg %p136
        $region14: #{tpu_custom_call.1} parent=11 // pred_check_branch
          %265 = sbr.rel (%p263) target = $region16
        $region15: #{tpu_custom_call.1} parent=11 // pred_region
          %s267 = ssub.s32 256, 256
          %268 = vsyncadd [#allocation12], %s267
          %s269 = sshll.u32 [#allocation11], 4
          %s270 = int_to_ptr.vmem [resolvable:$true] %s269
          %275 = dma.hbm_to_vmem [thread:$0]  %s3, 256, %s270, [#allocation12], 64, 64, 4
        $region16: #{tpu_custom_call.1} parent=11 // pred_fallthru
          _
        // Predicated region
        $region17: #{tpu_custom_call.1} parent=11 // pred_check
          %p276 = pneg %p157
        $region18: #{tpu_custom_call.1} parent=11 // pred_check_branch
          %278 = sbr.rel (%p276) target = $region20
        $region19: #{tpu_custom_call.1} parent=11 // pred_region
          %s280 = ssub.s32 256, 256
          %281 = vsyncadd [#allocation12], %s280
          %s282 = sshll.u32 [#allocation13], 4
          %s283 = int_to_ptr.vmem [resolvable:$true] %s282
          %288 = dma.hbm_to_vmem [thread:$0]  %s4, 256, %s283, [#allocation12], 64, 64, 4
        $region20: #{tpu_custom_call.1} parent=11 // pred_fallthru
          _
        // Predicated region
        $region21: #{tpu_custom_call.1} parent=11 // pred_check
          %p289 = pneg %p178
        $region22: #{tpu_custom_call.1} parent=11 // pred_check_branch
          %291 = sbr.rel (%p289) target = $region24
        $region23: #{tpu_custom_call.1} parent=11 // pred_region
          %s293 = ssub.s32 256, 256
          %294 = vsyncadd [#allocation15], %s293
          %s295 = sshll.u32 [#allocation14], 4
          %s296 = int_to_ptr.vmem [resolvable:$true] %s295
          %301 = dma.hbm_to_vmem [thread:$0]  %s5, 256, %s296, [#allocation15], 64, 64, 4
        $region24: #{tpu_custom_call.1} parent=11 // pred_fallthru
          _
        // Predicated region
        $region25: #{tpu_custom_call.1} parent=11 // pred_check
          %p302 = pneg %p199
        $region26: #{tpu_custom_call.1} parent=11 // pred_check_branch
          %304 = sbr.rel (%p302) target = $region28
        $region27: #{tpu_custom_call.1} parent=11 // pred_region
          %s306 = ssub.s32 256, 256
          %307 = vsyncadd [#allocation15], %s306
          %s308 = sshll.u32 [#allocation16], 4
          %s309 = int_to_ptr.vmem [resolvable:$true] %s308
          %314 = dma.hbm_to_vmem [thread:$0]  %s6, 256, %s309, [#allocation15], 64, 64, 4
        $region28: #{tpu_custom_call.1} parent=11 // pred_fallthru
          _
        // Predicated region
        $region29: #{tpu_custom_call.1} parent=11 // pred_check
          %p315 = pneg %p220
        $region30: #{tpu_custom_call.1} parent=11 // pred_check_branch
          %317 = sbr.rel (%p315) target = $region32
        $region31: #{tpu_custom_call.1} parent=11 // pred_region
          _
        $region32: #{tpu_custom_call.1} parent=11 // pred_fallthru
          _
      $region12: #{tpu_custom_call.1} parent=5 // pred_fallthru
        _
      %p318 = scmp.lt.s32.totalorder %s25, 4
      // Predicated region
      $region33: #{tpu_custom_call.1} parent=5 // pred_check
        %p319 = pneg %p318
      $region34: #{tpu_custom_call.1} parent=5 // pred_check_branch
        %321 = sbr.rel (%p319) target = $region36
      $region35: #{tpu_custom_call.1} parent=5 // pred_region
        // Predicated region
        $region37: #{tpu_custom_call.1} parent=35 // pred_check
          %p322 = pneg %p57
        $region38: #{tpu_custom_call.1} parent=35 // pred_check_branch
          %324 = sbr.rel (%p322) target = $region40
        $region39: #{tpu_custom_call.1} parent=35 // pred_region
          %s325 = sand.u32 %s47, 1
          %s326 = scalar_lea.sflag [#allocation6], %s325
          %s327 = sand.u32 %s47, 1
          %s328 = smul.addr %s327, 16
          %s329 = scalar_lea.vmem [#allocation5], %s328
          %s331 = ssub.s32 256, 256
          %332 = vsyncadd %s326, %s331
          %s333 = smul.addr %s32, 2
          %s334 = smul.addr %s333, 128
          %s335 = scalar_lea.hbm %s0, %s334
          %s336 = sshll.u32 %s329, 4
          %s337 = int_to_ptr.vmem [resolvable:$true] %s336
          %342 = dma.hbm_to_vmem [thread:$0]  %s335, 256, %s337, %s326, 128, 128, 8
        $region40: #{tpu_custom_call.1} parent=35 // pred_fallthru
          _
        // Predicated region
        $region41: #{tpu_custom_call.1} parent=35 // pred_check
          %p343 = pneg %p83
        $region42: #{tpu_custom_call.1} parent=35 // pred_check_branch
          %345 = sbr.rel (%p343) target = $region44
        $region43: #{tpu_custom_call.1} parent=35 // pred_region
          %s346 = sand.u32 %s25, 1
          %s347 = scalar_lea.sflag [#allocation9], %s346
          %s348 = sand.u32 %s73, 1
          %s349 = smul.addr %s348, 2
          %s350 = scalar_lea.vmem [#allocation8], %s349
          %s352 = ssub.s32 32, 32
          %353 = vsyncadd %s347, %s352
          %s354 = smul.addr %s32, 32
          %s355 = scalar_lea.hbm %s1, %s354
          %s357 = sshll.u32 %s350, 4
          %s358 = int_to_ptr.vmem [resolvable:$true] %s357
          %360 = dma.hbm_to_vmem [thread:$0]  %s355, 32, %s358, %s347
        $region44: #{tpu_custom_call.1} parent=35 // pred_fallthru
          _
        // Predicated region
        $region45: #{tpu_custom_call.1} parent=35 // pred_check
          %p361 = pneg %p109
        $region46: #{tpu_custom_call.1} parent=35 // pred_check_branch
          %363 = sbr.rel (%p361) target = $region48
        $region47: #{tpu_custom_call.1} parent=35 // pred_region
          %s364 = sand.u32 %s25, 1
          %s365 = scalar_lea.sflag [#allocation9], %s364
          %s366 = sand.u32 %s99, 1
          %s367 = smul.addr %s366, 2
          %s368 = scalar_lea.vmem [#allocation10], %s367
          %s370 = ssub.s32 32, 32
          %371 = vsyncadd %s365, %s370
          %s372 = smul.addr %s32, 32
          %s373 = scalar_lea.hbm %s2, %s372
          %s375 = sshll.u32 %s368, 4
          %s376 = int_to_ptr.vmem [resolvable:$true] %s375
          %378 = dma.hbm_to_vmem [thread:$0]  %s373, 32, %s376, %s365
        $region48: #{tpu_custom_call.1} parent=35 // pred_fallthru
          _
      $region36: #{tpu_custom_call.1} parent=5 // pred_fallthru
        _
      %p379 = scmp.le.s32.totalorder 1, %s25
      %p380 = scmp.lt.s32.totalorder %s25, 5
      %p381 = pnand %p379, %p380
      %p382 = pneg %p381
      // Predicated region
      $region49: #{tpu_custom_call.1} parent=5 // pred_check
        _
      $region50: #{tpu_custom_call.1} parent=5 // pred_check_branch
        %384 = sbr.rel (%p381) target = $region52
      $region51: #{tpu_custom_call.1} parent=5 // pred_region
        %s385 = ssub.s32 %s25, 1
        %s386 = sand.u32 %s50, 1
        %s387 = scalar_lea.sflag [#allocation6], %s386
        %s388 = sand.u32 %s50, 1
        %s389 = smul.addr %s388, 16
        %s390 = scalar_lea.vmem [#allocation5], %s389
        // Predicated region
        $region53: #{tpu_custom_call.1} parent=51 // pred_check
          %p391 = pneg %p63
        $region54: #{tpu_custom_call.1} parent=51 // pred_check_branch
          %393 = sbr.rel (%p391) target = $region56
        $region55: #{tpu_custom_call.1} parent=51 // pred_region
          %394 = dma.done %s387, 256
        $region56: #{tpu_custom_call.1} parent=51 // pred_fallthru
          _
        %s395 = sand.u32 %s30, 1
        %s396 = scalar_lea.sflag [#allocation9], %s395
        %s397 = sand.u32 %s76, 1
        %s398 = smul.addr %s397, 2
        %s399 = scalar_lea.vmem [#allocation8], %s398
        // Predicated region
        $region57: #{tpu_custom_call.1} parent=51 // pred_check
          %p400 = pneg %p89
        $region58: #{tpu_custom_call.1} parent=51 // pred_check_branch
          %402 = sbr.rel (%p400) target = $region60
        $region59: #{tpu_custom_call.1} parent=51 // pred_region
          %403 = dma.done %s396, 32
        $region60: #{tpu_custom_call.1} parent=51 // pred_fallthru
          _
        %s404 = sand.u32 %s30, 1
        %s405 = scalar_lea.sflag [#allocation9], %s404
        %s406 = sand.u32 %s102, 1
        %s407 = smul.addr %s406, 2
        %s408 = scalar_lea.vmem [#allocation10], %s407
        // Predicated region
        $region61: #{tpu_custom_call.1} parent=51 // pred_check
          %p409 = pneg %p115
        $region62: #{tpu_custom_call.1} parent=51 // pred_check_branch
          %411 = sbr.rel (%p409) target = $region64
        $region63: #{tpu_custom_call.1} parent=51 // pred_region
          %412 = dma.done %s405, 32
        $region64: #{tpu_custom_call.1} parent=51 // pred_fallthru
          _
        // Predicated region
        $region65: #{tpu_custom_call.1} parent=51 // pred_check
          %p413 = pneg %p136
        $region66: #{tpu_custom_call.1} parent=51 // pred_check_branch
          %415 = sbr.rel (%p413) target = $region68
        $region67: #{tpu_custom_call.1} parent=51 // pred_region
          %416 = dma.done [#allocation12], 256
        $region68: #{tpu_custom_call.1} parent=51 // pred_fallthru
          _
        // Predicated region
        $region69: #{tpu_custom_call.1} parent=51 // pred_check
          %p417 = pneg %p157
        $region70: #{tpu_custom_call.1} parent=51 // pred_check_branch
          %419 = sbr.rel (%p417) target = $region72
        $region71: #{tpu_custom_call.1} parent=51 // pred_region
          %420 = dma.done [#allocation12], 256
        $region72: #{tpu_custom_call.1} parent=51 // pred_fallthru
          _
        // Predicated region
        $region73: #{tpu_custom_call.1} parent=51 // pred_check
          %p421 = pneg %p178
        $region74: #{tpu_custom_call.1} parent=51 // pred_check_branch
          %423 = sbr.rel (%p421) target = $region76
        $region75: #{tpu_custom_call.1} parent=51 // pred_region
          %424 = dma.done [#allocation15], 256
        $region76: #{tpu_custom_call.1} parent=51 // pred_fallthru
          _
        // Predicated region
        $region77: #{tpu_custom_call.1} parent=51 // pred_check
          %p425 = pneg %p199
        $region78: #{tpu_custom_call.1} parent=51 // pred_check_branch
          %427 = sbr.rel (%p425) target = $region80
        $region79: #{tpu_custom_call.1} parent=51 // pred_region
          %428 = dma.done [#allocation15], 256
        $region80: #{tpu_custom_call.1} parent=51 // pred_fallthru
          _
        %s429 = sand.u32 %s50, 1
        %s430 = scalar_lea.sflag [#allocation6], %s429
        %s431 = sand.u32 %s50, 1
        %s432 = smul.addr %s431, 16
        %s433 = scalar_lea.vmem [#allocation5], %s432
        %p434 = pneg %p63
        %p435 = pneg %p60
        %s436 = sand.u32 %s30, 1
        %s437 = scalar_lea.sflag [#allocation9], %s436
        %s438 = sand.u32 %s76, 1
        %s439 = smul.addr %s438, 2
        %s440 = scalar_lea.vmem [#allocation8], %s439
        %p441 = pneg %p89
        %p442 = pneg %p86
        %s443 = sand.u32 %s30, 1
        %s444 = scalar_lea.sflag [#allocation9], %s443
        %s445 = sand.u32 %s102, 1
        %s446 = smul.addr %s445, 2
        %s447 = scalar_lea.vmem [#allocation10], %s446
        %p448 = pneg %p115
        %p449 = pneg %p112
        %p450 = pneg %p136
        %p451 = pneg %p133
        %p452 = pneg %p157
        %p453 = pneg %p154
        %p454 = pneg %p178
        %p455 = pneg %p175
        %p456 = pneg %p199
        %p457 = pneg %p196
        %p458 = pneg %p220
        %p459 = pneg %p217
        %p460 = pneg %p248
        %p461 = pneg %p245
        %s462 = sand.u32 %s235, 1
        %s463 = scalar_lea.sflag [#allocation7], %s462
        %s464 = sand.u32 %s235, 1
        %s465 = smul.addr %s464, 8
        %s466 = scalar_lea.vmem [#allocation17], %s465
        %p468 = scmp.eq.s32.totalorder %s35, 0
        // Predicated region
        $region81: #{tpu_custom_call.1} parent=51 // pred_check
          %p469 = pneg %p468
        $region82: #{tpu_custom_call.1} parent=51 // pred_check_branch
          %471 = sbr.rel (%p469) target = $region84
        $region83: #{tpu_custom_call.1} parent=51 // pred_region
          %vm472 = vcmask 257024
          %473 = vst.msk [vmem:[#allocation2] sm:$0xf] %vm472, 0
          %474 = vst.msk [vmem:[#allocation2 + $0x4] sm:$0xf] %vm472, 0
          %475 = vst.msk [vmem:[#allocation2 + $0x8] sm:$0xf] %vm472, 0
          %476 = vst.msk [vmem:[#allocation2 + $0xc] sm:$0xf] %vm472, 0
          %477 = vst.msk [vmem:[#allocation2 + $0x10] sm:$0xf] %vm472, 0
          %478 = vst.msk [vmem:[#allocation2 + $0x14] sm:$0xf] %vm472, 0
          %479 = vst.msk [vmem:[#allocation2 + $0x18] sm:$0xf] %vm472, 0
          %480 = vst.msk [vmem:[#allocation2 + $0x1c] sm:$0xf] %vm472, 0
          %481 = vst.msk [vmem:[#allocation2 + $0x20] sm:$0xf] %vm472, 0
          %482 = vst.msk [vmem:[#allocation2 + $0x24] sm:$0xf] %vm472, 0
          %483 = vst.msk [vmem:[#allocation2 + $0x28] sm:$0xf] %vm472, 0
          %484 = vst.msk [vmem:[#allocation2 + $0x2c] sm:$0xf] %vm472, 0
          %485 = vst.msk [vmem:[#allocation2 + $0x30] sm:$0xf] %vm472, 0
          %486 = vst.msk [vmem:[#allocation2 + $0x34] sm:$0xf] %vm472, 0
          %487 = vst.msk [vmem:[#allocation2 + $0x38] sm:$0xf] %vm472, 0
          %488 = vst.msk [vmem:[#allocation2 + $0x3c] sm:$0xf] %vm472, 0
          %489 = vst.msk [vmem:[#allocation3] sm:$0xf] %vm472, 0
          %490 = vst.msk [vmem:[#allocation3 + $0x4] sm:$0xf] %vm472, 0
          %491 = vst.msk [vmem:[#allocation3 + $0x8] sm:$0xf] %vm472, 0
          %492 = vst.msk [vmem:[#allocation3 + $0xc] sm:$0xf] %vm472, 0
          %493 = vst.msk [vmem:[#allocation3 + $0x10] sm:$0xf] %vm472, 0
          %494 = vst.msk [vmem:[#allocation3 + $0x14] sm:$0xf] %vm472, 0
          %495 = vst.msk [vmem:[#allocation3 + $0x18] sm:$0xf] %vm472, 0
          %496 = vst.msk [vmem:[#allocation3 + $0x1c] sm:$0xf] %vm472, 0
          %497 = vst.msk [vmem:[#allocation3 + $0x20] sm:$0xf] %vm472, 0
          %498 = vst.msk [vmem:[#allocation3 + $0x24] sm:$0xf] %vm472, 0
          %499 = vst.msk [vmem:[#allocation3 + $0x28] sm:$0xf] %vm472, 0
          %500 = vst.msk [vmem:[#allocation3 + $0x2c] sm:$0xf] %vm472, 0
          %501 = vst.msk [vmem:[#allocation3 + $0x30] sm:$0xf] %vm472, 0
          %502 = vst.msk [vmem:[#allocation3 + $0x34] sm:$0xf] %vm472, 0
          %503 = vst.msk [vmem:[#allocation3 + $0x38] sm:$0xf] %vm472, 0
          %504 = vst.msk [vmem:[#allocation3 + $0x3c] sm:$0xf] %vm472, 0
          %v505 = vld [vmem:[%s399] sm:$0x3]
          %vm506 = vcmask 254976
          %507 = vst.msk [vmem:[#allocation2] sm:$0x3] %vm506, %v505
          %v508 = vld [vmem:[%s408] sm:$0x3]
          %509 = vst.msk [vmem:[#allocation3] sm:$0x3] %vm506, %v508
          %v510 = vld [vmem:[%s390] sm:$0xff]
          %v511 = vld [vmem:[%s390 + $0x8] sm:$0xff]
          %v512 = vpack.c.bf16 %v511, %v510
          %v513 = vld [vmem:[#allocation13] sm:$0xf]
          %v514 = vld [vmem:[#allocation13 + $0x4] sm:$0xf]
          %v515 = vld [vmem:[#allocation13 + $0x8] sm:$0xf]
          %v516 = vld [vmem:[#allocation13 + $0xc] sm:$0xf]
          %v521 = vunpack.c.l.b16 %v513
          %v522 = vunpack.c.l.b16 %v514
          %v523 = vunpack.c.l.b16 %v515
          %v524 = vunpack.c.l.b16 %v516
          %v525 = vpack.c.b16 %v522, %v521
          %v526 = vpack.c.b16 %v524, %v523
          %vm529 = vcmask 261120
          %v531 = vsel %vm529, %v512, 0
          %533 = vmatprep.subr.bf16.mxu0 0
          %534 = vmatpush1.bf16.msra.mxu0 0
          %535 = vmatprep.subr.bf16.mxu0 0
          %536 = vmatpush1.bf16.msra.mxu0 0
          %537 = vmatprep.subr.bf16.mxu0 0
          %538 = vmatpush1.bf16.msra.mxu0 0
          %539 = vmatprep.subr.bf16.mxu0 0
          %540 = vmatpush1.bf16.msra.mxu0 0
          %541 = vmatprep.subr.bf16.mxu0 0
          %542 = vmatpush1.bf16.msra.mxu0 0
          %543 = vmatprep.subr.bf16.mxu0 0
          %544 = vmatpush1.bf16.msra.mxu0 0
          %545 = vmatprep.subr.bf16.mxu0 0
          %546 = vmatpush1.bf16.msra.mxu0 %v526
          %547 = vmatprep.subr.bf16.mxu0 0
          %548 = vmatpush1.bf16.msra.mxu0 %v525
          %549 = vmatprep.subr.bf16.mxu0 0
          %550 = vmatpush2.bf16.msra.mxu0 0
          %551 = vmatprep.subr.bf16.mxu0 0
          %552 = vmatpush2.bf16.msra.mxu0 0
          %553 = vmatprep.subr.bf16.mxu0 0
          %554 = vmatpush2.bf16.msra.mxu0 0
          %555 = vmatprep.subr.bf16.mxu0 0
          %556 = vmatpush2.bf16.msra.mxu0 0
          %557 = vmatprep.subr.bf16.mxu0 0
          %558 = vmatpush2.bf16.msra.mxu0 0
          %559 = vmatprep.subr.bf16.mxu0 0
          %560 = vmatpush2.bf16.msra.mxu0 0
          %561 = vmatprep.subr.bf16.mxu0 0
          %562 = vmatpush2.bf16.msra.mxu0 0
          %563 = vmatprep.subr.bf16.mxu0 0
          %564 = vmatpush2.bf16.msra.mxu0 0
          %565 = vmatprep.mubr.bf16.mxu0 0
          %566 = vmatmul.mubr.bf16.gmra.mxu0 %v531
          %v567 = vpop.f32.mrf.mxu0
          %v568 = vadd.f32 0.0, %v567
          %v569 = vpop.f32.mrf.mxu0
          %v570 = vpop.f32.mrf.mxu0
          %v571 = vadd.f32 0.0, %v570
          %v572 = vpop.f32.mrf.mxu0
          %573 = vdwg.mxu0
          %v574 = vpack.c.bf16 %v571, %v568
          %v576 = vunpack.c.l.b16 %v574
          %v577 = vunpack.c.h.b16 %v574
          %v578 = vpack.c.b16 %v576, %v576
          %v579 = vpack.c.b16 %v577, %v577
          %582 = vst.msk [vmem:[#allocation2 + $0x4] sm:$0xf] %vm472, %v578
          %583 = vst.msk [vmem:[#allocation2 + $0x8] sm:$0xf] %vm472, %v579
          %v584 = vld [vmem:[#allocation14] sm:$0xf]
          %v585 = vld [vmem:[#allocation14 + $0x4] sm:$0xf]
          %v586 = vld [vmem:[#allocation14 + $0x8] sm:$0xf]
          %v587 = vld [vmem:[#allocation14 + $0xc] sm:$0xf]
          %v592 = vunpack.c.l.b16 %v584
          %v593 = vunpack.c.l.b16 %v585
          %v594 = vunpack.c.l.b16 %v586
          %v595 = vunpack.c.l.b16 %v587
          %v596 = vpack.c.b16 %v593, %v592
          %v597 = vpack.c.b16 %v595, %v594
          %600 = vmatprep.subr.bf16.mxu0 0
          %601 = vmatpush1.bf16.msra.mxu0 0
          %602 = vmatprep.subr.bf16.mxu0 0
          %603 = vmatpush1.bf16.msra.mxu0 0
          %604 = vmatprep.subr.bf16.mxu0 0
          %605 = vmatpush1.bf16.msra.mxu0 0
          %606 = vmatprep.subr.bf16.mxu0 0
          %607 = vmatpush1.bf16.msra.mxu0 0
          %608 = vmatprep.subr.bf16.mxu0 0
          %609 = vmatpush1.bf16.msra.mxu0 0
          %610 = vmatprep.subr.bf16.mxu0 0
          %611 = vmatpush1.bf16.msra.mxu0 0
          %612 = vmatprep.subr.bf16.mxu0 0
          %613 = vmatpush1.bf16.msra.mxu0 %v597
          %614 = vmatprep.subr.bf16.mxu0 0
          %615 = vmatpush1.bf16.msra.mxu0 %v596
          %616 = vmatprep.subr.bf16.mxu0 0
          %617 = vmatpush2.bf16.msra.mxu0 0
          %618 = vmatprep.subr.bf16.mxu0 0
          %619 = vmatpush2.bf16.msra.mxu0 0
          %620 = vmatprep.subr.bf16.mxu0 0
          %621 = vmatpush2.bf16.msra.mxu0 0
          %622 = vmatprep.subr.bf16.mxu0 0
          %623 = vmatpush2.bf16.msra.mxu0 0
          %624 = vmatprep.subr.bf16.mxu0 0
          %625 = vmatpush2.bf16.msra.mxu0 0
          %626 = vmatprep.subr.bf16.mxu0 0
          %627 = vmatpush2.bf16.msra.mxu0 0
          %628 = vmatprep.subr.bf16.mxu0 0
          %629 = vmatpush2.bf16.msra.mxu0 0
          %630 = vmatprep.subr.bf16.mxu0 0
          %631 = vmatpush2.bf16.msra.mxu0 0
          %632 = vmatprep.mubr.bf16.mxu0 0
          %633 = vmatmul.mubr.bf16.gmra.mxu0 %v531
          %v634 = vpop.f32.mrf.mxu0
          %v635 = vadd.f32 0.0, %v634
          %v636 = vpop.f32.mrf.mxu0
          %v637 = vpop.f32.mrf.mxu0
          %v638 = vadd.f32 0.0, %v637
          %v639 = vpop.f32.mrf.mxu0
          %640 = vdwg.mxu0
          %v641 = vpack.c.bf16 %v638, %v635
          %v643 = vunpack.c.l.b16 %v641
          %v644 = vunpack.c.h.b16 %v641
          %v645 = vpack.c.b16 %v643, %v643
          %v646 = vpack.c.b16 %v644, %v644
          %649 = vst.msk [vmem:[#allocation3 + $0x4] sm:$0xf] %vm472, %v645
          %650 = vst.msk [vmem:[#allocation3 + $0x8] sm:$0xf] %vm472, %v646
        $region84: #{tpu_custom_call.1} parent=51 // pred_fallthru
          _
        %s651 = smul.u32 %s35, 8
        %s652 = scalar_lea.vmem %s390, %s651 [#allocation5]
        %v653 = vld [vmem:[%s652] sm:$0xff]
        %v654 = vpack.c.bf16 %v653, %v653
        %v655 = vld [vmem:[#allocation11] sm:$0xf]
        %v656 = vld [vmem:[#allocation11 + $0x4] sm:$0xf]
        %v657 = vld [vmem:[#allocation11 + $0x8] sm:$0xf]
        %v658 = vld [vmem:[#allocation11 + $0xc] sm:$0xf]
        %v663 = vunpack.c.l.b16 %v655
        %v664 = vunpack.c.l.b16 %v656
        %v665 = vunpack.c.l.b16 %v657
        %v666 = vunpack.c.l.b16 %v658
        %v667 = vpack.c.b16 %v664, %v663
        %v668 = vpack.c.b16 %v666, %v665
        %vm671 = vcmask 261120
        %v673 = vsel %vm671, %v654, 0
        %675 = vmatprep.subr.bf16.mxu0 0
        %676 = vmatpush1.bf16.msra.mxu0 0
        %677 = vmatprep.subr.bf16.mxu0 0
        %678 = vmatpush1.bf16.msra.mxu0 0
        %679 = vmatprep.subr.bf16.mxu0 0
        %680 = vmatpush1.bf16.msra.mxu0 0
        %681 = vmatprep.subr.bf16.mxu0 0
        %682 = vmatpush1.bf16.msra.mxu0 0
        %683 = vmatprep.subr.bf16.mxu0 0
        %684 = vmatpush1.bf16.msra.mxu0 0
        %685 = vmatprep.subr.bf16.mxu0 0
        %686 = vmatpush1.bf16.msra.mxu0 0
        %687 = vmatprep.subr.bf16.mxu0 0
        %688 = vmatpush1.bf16.msra.mxu0 %v668
        %689 = vmatprep.subr.bf16.mxu0 0
        %690 = vmatpush1.bf16.msra.mxu0 %v667
        %691 = vmatprep.subr.bf16.mxu0 0
        %692 = vmatpush2.bf16.msra.mxu0 0
        %693 = vmatprep.subr.bf16.mxu0 0
        %694 = vmatpush2.bf16.msra.mxu0 0
        %695 = vmatprep.subr.bf16.mxu0 0
        %696 = vmatpush2.bf16.msra.mxu0 0
        %697 = vmatprep.subr.bf16.mxu0 0
        %698 = vmatpush2.bf16.msra.mxu0 0
        %699 = vmatprep.subr.bf16.mxu0 0
        %700 = vmatpush2.bf16.msra.mxu0 0
        %701 = vmatprep.subr.bf16.mxu0 0
        %702 = vmatpush2.bf16.msra.mxu0 0
        %703 = vmatprep.subr.bf16.mxu0 0
        %704 = vmatpush2.bf16.msra.mxu0 0
        %705 = vmatprep.subr.bf16.mxu0 0
        %706 = vmatpush2.bf16.msra.mxu0 0
        %707 = vmatprep.mubr.bf16.mxu0 0
        %708 = vmatmul.mubr.bf16.gmra.mxu0 %v673
        %v709 = vpop.f32.mrf.mxu0
        %v710 = vadd.f32 0.0, %v709
        %v711 = vpop.f32.mrf.mxu0
        %v712 = vpop.f32.mrf.mxu0
        %v713 = vpop.f32.mrf.mxu0
        %714 = vdwg.mxu0
        %v715 = vmul.f32 %v710, 0.5
        %v716 = vpack.c.bf16 %v715, %v715
        %v717 = vlaneseq
        %v718 = vand.u32 %v717, 127
        %vm719 = vcmp.lt.s32.totalorder %v718, 4
        %vm720 = vcmp.ge.s32.totalorder %v718, 8
        %vm721 = vcmp.lt.s32.totalorder %v718, 24
        %vm722 = vmand %vm720, %vm721
        %vm723 = vmor %vm719, %vm722
        %v724 = vsel %vm723, 0.0, -1e+30
        %v725 = vld [vmem:[#allocation2] sm:$0xf]
        %v726 = vld [vmem:[#allocation2 + $0x4] sm:$0xf]
        %v727 = vld [vmem:[#allocation2 + $0x8] sm:$0xf]
        %v728 = vld [vmem:[#allocation2 + $0xc] sm:$0xf]
        %v729 = vld [vmem:[#allocation2 + $0x10] sm:$0xf]
        %v730 = vld [vmem:[#allocation2 + $0x14] sm:$0xf]
        %v731 = vld [vmem:[#allocation2 + $0x18] sm:$0xf]
        %v732 = vld [vmem:[#allocation2 + $0x1c] sm:$0xf]
        %v733 = vld [vmem:[#allocation2 + $0x20] sm:$0xf]
        %v734 = vld [vmem:[#allocation2 + $0x24] sm:$0xf]
        %v735 = vld [vmem:[#allocation2 + $0x28] sm:$0xf]
        %v736 = vld [vmem:[#allocation2 + $0x2c] sm:$0xf]
        %v737 = vld [vmem:[#allocation2 + $0x30] sm:$0xf]
        %v738 = vld [vmem:[#allocation2 + $0x34] sm:$0xf]
        %v739 = vld [vmem:[#allocation2 + $0x38] sm:$0xf]
        %v740 = vld [vmem:[#allocation2 + $0x3c] sm:$0xf]
        %v741 = vld [vmem:[#allocation3] sm:$0xf]
        %v742 = vld [vmem:[#allocation3 + $0x4] sm:$0xf]
        %v743 = vld [vmem:[#allocation3 + $0x8] sm:$0xf]
        %v744 = vld [vmem:[#allocation3 + $0xc] sm:$0xf]
        %v745 = vld [vmem:[#allocation3 + $0x10] sm:$0xf]
        %v746 = vld [vmem:[#allocation3 + $0x14] sm:$0xf]
        %v747 = vld [vmem:[#allocation3 + $0x18] sm:$0xf]
        %v748 = vld [vmem:[#allocation3 + $0x1c] sm:$0xf]
        %v749 = vld [vmem:[#allocation3 + $0x20] sm:$0xf]
        %v750 = vld [vmem:[#allocation3 + $0x24] sm:$0xf]
        %v751 = vld [vmem:[#allocation3 + $0x28] sm:$0xf]
        %v752 = vld [vmem:[#allocation3 + $0x2c] sm:$0xf]
        %v753 = vld [vmem:[#allocation3 + $0x30] sm:$0xf]
        %v754 = vld [vmem:[#allocation3 + $0x34] sm:$0xf]
        %v755 = vld [vmem:[#allocation3 + $0x38] sm:$0xf]
        %v756 = vld [vmem:[#allocation3 + $0x3c] sm:$0xf]
        %v773 = vunpack.c.l.b16 %v725
        %v774 = vunpack.c.l.b16 %v726
        %v775 = vunpack.c.l.b16 %v727
        %v776 = vunpack.c.l.b16 %v728
        %v777 = vunpack.c.l.b16 %v729
        %v778 = vunpack.c.l.b16 %v730
        %v779 = vunpack.c.l.b16 %v731
        %v780 = vunpack.c.l.b16 %v732
        %v781 = vunpack.c.l.b16 %v733
        %v782 = vunpack.c.l.b16 %v734
        %v783 = vunpack.c.l.b16 %v735
        %v784 = vunpack.c.l.b16 %v736
        %v785 = vunpack.c.l.b16 %v737
        %v786 = vunpack.c.l.b16 %v738
        %v787 = vunpack.c.l.b16 %v739
        %v788 = vunpack.c.l.b16 %v740
        %v789 = vpack.c.b16 %v774, %v773
        %v790 = vpack.c.b16 %v776, %v775
        %v791 = vpack.c.b16 %v778, %v777
        %v792 = vpack.c.b16 %v780, %v779
        %v793 = vpack.c.b16 %v782, %v781
        %v794 = vpack.c.b16 %v784, %v783
        %v795 = vpack.c.b16 %v786, %v785
        %v796 = vpack.c.b16 %v788, %v787
        %vm797 = vcmask 31744
        %v799 = vsel %vm797, %v716, 0
        %v802 = vsel %vm797, %v789, 0
        %v805 = vsel %vm797, %v790, 0
        %v808 = vsel %vm797, %v791, 0
        %v811 = vsel %vm797, %v792, 0
        %v814 = vsel %vm797, %v793, 0
        %v817 = vsel %vm797, %v794, 0
        %v820 = vsel %vm797, %v795, 0
        %v823 = vsel %vm797, %v796, 0
        %825 = vmatprep.subr.bf16.mxu0 0
        %826 = vmatpush1.bf16.xpose.msra.mxu0 %v823
        %827 = vmatprep.subr.bf16.mxu0 0
        %828 = vmatpush1.bf16.xpose.msra.mxu0 %v820
        %829 = vmatprep.subr.bf16.mxu0 0
        %830 = vmatpush1.bf16.xpose.msra.mxu0 %v817
        %831 = vmatprep.subr.bf16.mxu0 0
        %832 = vmatpush1.bf16.xpose.msra.mxu0 %v814
        %833 = vmatprep.subr.bf16.mxu0 0
        %834 = vmatpush1.bf16.xpose.msra.mxu0 %v811
        %835 = vmatprep.subr.bf16.mxu0 0
        %836 = vmatpush1.bf16.xpose.msra.mxu0 %v808
        %837 = vmatprep.subr.bf16.mxu0 0
        %838 = vmatpush1.bf16.xpose.msra.mxu0 %v805
        %839 = vmatprep.subr.bf16.mxu0 0
        %840 = vmatpush1.bf16.xpose.msra.mxu0 %v802
        %841 = vmatprep.subr.bf16.mxu0 0
        %842 = vmatpush2.bf16.xpose.msra.mxu0 0
        %843 = vmatprep.subr.bf16.mxu0 0
        %844 = vmatpush2.bf16.xpose.msra.mxu0 0
        %845 = vmatprep.subr.bf16.mxu0 0
        %846 = vmatpush2.bf16.xpose.msra.mxu0 0
        %847 = vmatprep.subr.bf16.mxu0 0
        %848 = vmatpush2.bf16.xpose.msra.mxu0 0
        %849 = vmatprep.subr.bf16.mxu0 0
        %850 = vmatpush2.bf16.xpose.msra.mxu0 0
        %851 = vmatprep.subr.bf16.mxu0 0
        %852 = vmatpush2.bf16.xpose.msra.mxu0 0
        %853 = vmatprep.subr.bf16.mxu0 0
        %854 = vmatpush2.bf16.xpose.msra.mxu0 0
        %855 = vmatprep.subr.bf16.mxu0 0
        %856 = vmatpush2.bf16.xpose.msra.mxu0 0
        %857 = vmatprep.mubr.bf16.mxu0 0
        %858 = vmatmul.mubr.bf16.gmra.mxu0 %v799
        %v859 = vpop.f32.mrf.mxu0
        %v860 = vadd.f32 %v724, %v859
        %v861 = vpop.f32.mrf.mxu0
        %v862 = vpop.f32.mrf.mxu0
        %v863 = vpop.f32.mrf.mxu0
        %864 = vdwg.mxu0
        %865 = vmax.xlane.f32.xlu0 %v860
        %v866 = vpop.xlane.xlu0 %865
        %v867 = vsub.f32 %v860, %v866
        %v868 = vmul.f32 %v867, 1.442695
        %v869 = vpow.pop %v868
        %870 = vadd.xlane.f32.xlu0 %v869
        %v871 = vpop.xlane.xlu0 %870
        %v872 = vpack.c.bf16 %v869, %v869
        %v889 = vunpack.c.l.b16 %v741
        %v890 = vunpack.c.l.b16 %v742
        %v891 = vunpack.c.l.b16 %v743
        %v892 = vunpack.c.l.b16 %v744
        %v893 = vunpack.c.l.b16 %v745
        %v894 = vunpack.c.l.b16 %v746
        %v895 = vunpack.c.l.b16 %v747
        %v896 = vunpack.c.l.b16 %v748
        %v897 = vunpack.c.l.b16 %v749
        %v898 = vunpack.c.l.b16 %v750
        %v899 = vunpack.c.l.b16 %v751
        %v900 = vunpack.c.l.b16 %v752
        %v901 = vunpack.c.l.b16 %v753
        %v902 = vunpack.c.l.b16 %v754
        %v903 = vunpack.c.l.b16 %v755
        %v904 = vunpack.c.l.b16 %v756
        %v905 = vpack.c.b16 %v890, %v889
        %v906 = vpack.c.b16 %v892, %v891
        %v907 = vpack.c.b16 %v894, %v893
        %v908 = vpack.c.b16 %v896, %v895
        %v909 = vpack.c.b16 %v898, %v897
        %v910 = vpack.c.b16 %v900, %v899
        %v911 = vpack.c.b16 %v902, %v901
        %v912 = vpack.c.b16 %v904, %v903
        %921 = vmatprep.subr.bf16.mxu0 0
        %922 = vmatpush1.bf16.msra.mxu0 %v912
        %923 = vmatprep.subr.bf16.mxu0 0
        %924 = vmatpush1.bf16.msra.mxu0 %v911
        %925 = vmatprep.subr.bf16.mxu0 0
        %926 = vmatpush1.bf16.msra.mxu0 %v910
        %927 = vmatprep.subr.bf16.mxu0 0
        %928 = vmatpush1.bf16.msra.mxu0 %v909
        %929 = vmatprep.subr.bf16.mxu0 0
        %930 = vmatpush1.bf16.msra.mxu0 %v908
        %931 = vmatprep.subr.bf16.mxu0 0
        %932 = vmatpush1.bf16.msra.mxu0 %v907
        %933 = vmatprep.subr.bf16.mxu0 0
        %934 = vmatpush1.bf16.msra.mxu0 %v906
        %935 = vmatprep.subr.bf16.mxu0 0
        %936 = vmatpush1.bf16.msra.mxu0 %v905
        %937 = vmatprep.subr.bf16.mxu0 0
        %938 = vmatpush2.bf16.msra.mxu0 0
        %939 = vmatprep.subr.bf16.mxu0 0
        %940 = vmatpush2.bf16.msra.mxu0 0
        %941 = vmatprep.subr.bf16.mxu0 0
        %942 = vmatpush2.bf16.msra.mxu0 0
        %943 = vmatprep.subr.bf16.mxu0 0
        %944 = vmatpush2.bf16.msra.mxu0 0
        %945 = vmatprep.subr.bf16.mxu0 0
        %946 = vmatpush2.bf16.msra.mxu0 0
        %947 = vmatprep.subr.bf16.mxu0 0
        %948 = vmatpush2.bf16.msra.mxu0 0
        %949 = vmatprep.subr.bf16.mxu0 0
        %950 = vmatpush2.bf16.msra.mxu0 0
        %951 = vmatprep.subr.bf16.mxu0 0
        %952 = vmatpush2.bf16.msra.mxu0 0
        %953 = vmatprep.mubr.bf16.mxu0 0
        %954 = vmatmul.mubr.bf16.gmra.mxu0 %v872
        %v955 = vpop.f32.mrf.mxu0
        %v956 = vadd.f32 0.0, %v955
        %v957 = vpop.f32.mrf.mxu0
        %v958 = vpop.f32.mrf.mxu0
        %v959 = vpop.f32.mrf.mxu0
        %960 = vdwg.mxu0
        %v961 = vrcp.pop %v871
        %v962 = vmul.f32 %v956, %v961
        %963 = vst.msk [vmem:[#allocation4] sm:$0xff] %vm797, %v962
        %v964 = vld [vmem:[#allocation2] sm:$0xf]
        %v965 = vld [vmem:[#allocation2 + $0x4] sm:$0xf]
        %v966 = vld [vmem:[#allocation2 + $0x8] sm:$0xf]
        %v967 = vld [vmem:[#allocation2 + $0xc] sm:$0xf]
        %v968 = vld [vmem:[#allocation2 + $0x10] sm:$0xf]
        %v969 = vld [vmem:[#allocation2 + $0x14] sm:$0xf]
        %v970 = vld [vmem:[#allocation2 + $0x18] sm:$0xf]
        %v971 = vld [vmem:[#allocation2 + $0x1c] sm:$0xf]
        %v972 = vld [vmem:[#allocation2 + $0x20] sm:$0xf]
        %v973 = vld [vmem:[#allocation2 + $0x24] sm:$0xf]
        %v974 = vld [vmem:[#allocation2 + $0x28] sm:$0xf]
        %v975 = vld [vmem:[#allocation2 + $0x2c] sm:$0xf]
        %v976 = vld [vmem:[#allocation2 + $0x30] sm:$0xf]
        %v977 = vld [vmem:[#allocation2 + $0x34] sm:$0xf]
        %v978 = vld [vmem:[#allocation2 + $0x38] sm:$0xf]
        %v979 = vld [vmem:[#allocation2 + $0x3c] sm:$0xf]
        %v980 = vld [vmem:[#allocation3] sm:$0xf]
        %v981 = vld [vmem:[#allocation3 + $0x4] sm:$0xf]
        %v982 = vld [vmem:[#allocation3 + $0x8] sm:$0xf]
        %v983 = vld [vmem:[#allocation3 + $0xc] sm:$0xf]
        %v984 = vld [vmem:[#allocation3 + $0x10] sm:$0xf]
        %v985 = vld [vmem:[#allocation3 + $0x14] sm:$0xf]
        %v986 = vld [vmem:[#allocation3 + $0x18] sm:$0xf]
        %v987 = vld [vmem:[#allocation3 + $0x1c] sm:$0xf]
        %v988 = vld [vmem:[#allocation3 + $0x20] sm:$0xf]
        %v989 = vld [vmem:[#allocation3 + $0x24] sm:$0xf]
        %v990 = vld [vmem:[#allocation3 + $0x28] sm:$0xf]
        %v991 = vld [vmem:[#allocation3 + $0x2c] sm:$0xf]
        %v992 = vld [vmem:[#allocation3 + $0x30] sm:$0xf]
        %v993 = vld [vmem:[#allocation3 + $0x34] sm:$0xf]
        %v994 = vld [vmem:[#allocation3 + $0x38] sm:$0xf]
        %v995 = vld [vmem:[#allocation3 + $0x3c] sm:$0xf]
        %997 = vrot.lane.b32.xlu0 %v716, 124
        %v998 = vpop.permute.xlu0 %997
        %v1015 = vunpack.c.l.b16 %v964
        %v1016 = vunpack.c.l.b16 %v965
        %v1017 = vunpack.c.l.b16 %v966
        %v1018 = vunpack.c.l.b16 %v967
        %v1019 = vunpack.c.l.b16 %v968
        %v1020 = vunpack.c.l.b16 %v969
        %v1021 = vunpack.c.l.b16 %v970
        %v1022 = vunpack.c.l.b16 %v971
        %v1023 = vunpack.c.l.b16 %v972
        %v1024 = vunpack.c.l.b16 %v973
        %v1025 = vunpack.c.l.b16 %v974
        %v1026 = vunpack.c.l.b16 %v975
        %v1027 = vunpack.c.l.b16 %v976
        %v1028 = vunpack.c.l.b16 %v977
        %v1029 = vunpack.c.l.b16 %v978
        %v1030 = vunpack.c.l.b16 %v979
        %v1031 = vpack.c.b16 %v1016, %v1015
        %v1032 = vpack.c.b16 %v1018, %v1017
        %v1033 = vpack.c.b16 %v1020, %v1019
        %v1034 = vpack.c.b16 %v1022, %v1021
        %v1035 = vpack.c.b16 %v1024, %v1023
        %v1036 = vpack.c.b16 %v1026, %v1025
        %v1037 = vpack.c.b16 %v1028, %v1027
        %v1038 = vpack.c.b16 %v1030, %v1029
        %1039 = vrot.lane.b32.xlu0 %v1031, 124
        %v1040 = vpop.permute.xlu0 %1039
        %1041 = vrot.lane.b32.xlu0 %v1032, 124
        %v1042 = vpop.permute.xlu0 %1041
        %1043 = vrot.lane.b32.xlu0 %v1033, 124
        %v1044 = vpop.permute.xlu0 %1043
        %1045 = vrot.lane.b32.xlu0 %v1034, 124
        %v1046 = vpop.permute.xlu0 %1045
        %1047 = vrot.lane.b32.xlu0 %v1035, 124
        %v1048 = vpop.permute.xlu0 %1047
        %1049 = vrot.lane.b32.xlu0 %v1036, 124
        %v1050 = vpop.permute.xlu0 %1049
        %1051 = vrot.lane.b32.xlu0 %v1037, 124
        %v1052 = vpop.permute.xlu0 %1051
        %1053 = vrot.lane.b32.xlu0 %v1038, 124
        %v1054 = vpop.permute.xlu0 %1053
        %v1056 = vsel %vm797, %v998, 0
        %v1059 = vsel %vm797, %v1040, 0
        %v1062 = vsel %vm797, %v1042, 0
        %v1065 = vsel %vm797, %v1044, 0
        %v1068 = vsel %vm797, %v1046, 0
        %v1071 = vsel %vm797, %v1048, 0
        %v1074 = vsel %vm797, %v1050, 0
        %v1077 = vsel %vm797, %v1052, 0
        %v1080 = vsel %vm797, %v1054, 0
        %1082 = vmatprep.subr.bf16.mxu0 0
        %1083 = vmatpush1.bf16.xpose.msra.mxu0 %v1080
        %1084 = vmatprep.subr.bf16.mxu0 0
        %1085 = vmatpush1.bf16.xpose.msra.mxu0 %v1077
        %1086 = vmatprep.subr.bf16.mxu0 0
        %1087 = vmatpush1.bf16.xpose.msra.mxu0 %v1074
        %1088 = vmatprep.subr.bf16.mxu0 0
        %1089 = vmatpush1.bf16.xpose.msra.mxu0 %v1071
        %1090 = vmatprep.subr.bf16.mxu0 0
        %1091 = vmatpush1.bf16.xpose.msra.mxu0 %v1068
        %1092 = vmatprep.subr.bf16.mxu0 0
        %1093 = vmatpush1.bf16.xpose.msra.mxu0 %v1065
        %1094 = vmatprep.subr.bf16.mxu0 0
        %1095 = vmatpush1.bf16.xpose.msra.mxu0 %v1062
        %1096 = vmatprep.subr.bf16.mxu0 0
        %1097 = vmatpush1.bf16.xpose.msra.mxu0 %v1059
        %1098 = vmatprep.subr.bf16.mxu0 0
        %1099 = vmatpush2.bf16.xpose.msra.mxu0 0
        %1100 = vmatprep.subr.bf16.mxu0 0
        %1101 = vmatpush2.bf16.xpose.msra.mxu0 0
        %1102 = vmatprep.subr.bf16.mxu0 0
        %1103 = vmatpush2.bf16.xpose.msra.mxu0 0
        %1104 = vmatprep.subr.bf16.mxu0 0
        %1105 = vmatpush2.bf16.xpose.msra.mxu0 0
        %1106 = vmatprep.subr.bf16.mxu0 0
        %1107 = vmatpush2.bf16.xpose.msra.mxu0 0
        %1108 = vmatprep.subr.bf16.mxu0 0
        %1109 = vmatpush2.bf16.xpose.msra.mxu0 0
        %1110 = vmatprep.subr.bf16.mxu0 0
        %1111 = vmatpush2.bf16.xpose.msra.mxu0 0
        %1112 = vmatprep.subr.bf16.mxu0 0
        %1113 = vmatpush2.bf16.xpose.msra.mxu0 0
        %1114 = vmatprep.mubr.bf16.mxu0 0
        %1115 = vmatmul.mubr.bf16.gmra.mxu0 %v1056
        %v1116 = vpop.f32.mrf.mxu0
        %v1117 = vadd.f32 %v724, %v1116
        %v1118 = vpop.f32.mrf.mxu0
        %v1119 = vpop.f32.mrf.mxu0
        %v1120 = vpop.f32.mrf.mxu0
        %1121 = vdwg.mxu0
        %1122 = vmax.xlane.f32.xlu0 %v1117
        %v1123 = vpop.xlane.xlu0 %1122
        %v1124 = vsub.f32 %v1117, %v1123
        %v1125 = vmul.f32 %v1124, 1.442695
        %v1126 = vpow.pop %v1125
        %1127 = vadd.xlane.f32.xlu0 %v1126
        %v1128 = vpop.xlane.xlu0 %1127
        %v1129 = vpack.c.bf16 %v1126, %v1126
        %v1146 = vunpack.c.l.b16 %v980
        %v1147 = vunpack.c.l.b16 %v981
        %v1148 = vunpack.c.l.b16 %v982
        %v1149 = vunpack.c.l.b16 %v983
        %v1150 = vunpack.c.l.b16 %v984
        %v1151 = vunpack.c.l.b16 %v985
        %v1152 = vunpack.c.l.b16 %v986
        %v1153 = vunpack.c.l.b16 %v987
        %v1154 = vunpack.c.l.b16 %v988
        %v1155 = vunpack.c.l.b16 %v989
        %v1156 = vunpack.c.l.b16 %v990
        %v1157 = vunpack.c.l.b16 %v991
        %v1158 = vunpack.c.l.b16 %v992
        %v1159 = vunpack.c.l.b16 %v993
        %v1160 = vunpack.c.l.b16 %v994
        %v1161 = vunpack.c.l.b16 %v995
        %v1162 = vpack.c.b16 %v1147, %v1146
        %v1163 = vpack.c.b16 %v1149, %v1148
        %v1164 = vpack.c.b16 %v1151, %v1150
        %v1165 = vpack.c.b16 %v1153, %v1152
        %v1166 = vpack.c.b16 %v1155, %v1154
        %v1167 = vpack.c.b16 %v1157, %v1156
        %v1168 = vpack.c.b16 %v1159, %v1158
        %v1169 = vpack.c.b16 %v1161, %v1160
        %1170 = vrot.lane.b32.xlu0 %v1162, 124
        %v1171 = vpop.permute.xlu0 %1170
        %1172 = vrot.lane.b32.xlu0 %v1163, 124
        %v1173 = vpop.permute.xlu0 %1172
        %1174 = vrot.lane.b32.xlu0 %v1164, 124
        %v1175 = vpop.permute.xlu0 %1174
        %1176 = vrot.lane.b32.xlu0 %v1165, 124
        %v1177 = vpop.permute.xlu0 %1176
        %1178 = vrot.lane.b32.xlu0 %v1166, 124
        %v1179 = vpop.permute.xlu0 %1178
        %1180 = vrot.lane.b32.xlu0 %v1167, 124
        %v1181 = vpop.permute.xlu0 %1180
        %1182 = vrot.lane.b32.xlu0 %v1168, 124
        %v1183 = vpop.permute.xlu0 %1182
        %1184 = vrot.lane.b32.xlu0 %v1169, 124
        %v1185 = vpop.permute.xlu0 %1184
        %1194 = vmatprep.subr.bf16.mxu0 0
        %1195 = vmatpush1.bf16.msra.mxu0 %v1185
        %1196 = vmatprep.subr.bf16.mxu0 0
        %1197 = vmatpush1.bf16.msra.mxu0 %v1183
        %1198 = vmatprep.subr.bf16.mxu0 0
        %1199 = vmatpush1.bf16.msra.mxu0 %v1181
        %1200 = vmatprep.subr.bf16.mxu0 0
        %1201 = vmatpush1.bf16.msra.mxu0 %v1179
        %1202 = vmatprep.subr.bf16.mxu0 0
        %1203 = vmatpush1.bf16.msra.mxu0 %v1177
        %1204 = vmatprep.subr.bf16.mxu0 0
        %1205 = vmatpush1.bf16.msra.mxu0 %v1175
        %1206 = vmatprep.subr.bf16.mxu0 0
        %1207 = vmatpush1.bf16.msra.mxu0 %v1173
        %1208 = vmatprep.subr.bf16.mxu0 0
        %1209 = vmatpush1.bf16.msra.mxu0 %v1171
        %1210 = vmatprep.subr.bf16.mxu0 0
        %1211 = vmatpush2.bf16.msra.mxu0 0
        %1212 = vmatprep.subr.bf16.mxu0 0
        %1213 = vmatpush2.bf16.msra.mxu0 0
        %1214 = vmatprep.subr.bf16.mxu0 0
        %1215 = vmatpush2.bf16.msra.mxu0 0
        %1216 = vmatprep.subr.bf16.mxu0 0
        %1217 = vmatpush2.bf16.msra.mxu0 0
        %1218 = vmatprep.subr.bf16.mxu0 0
        %1219 = vmatpush2.bf16.msra.mxu0 0
        %1220 = vmatprep.subr.bf16.mxu0 0
        %1221 = vmatpush2.bf16.msra.mxu0 0
        %1222 = vmatprep.subr.bf16.mxu0 0
        %1223 = vmatpush2.bf16.msra.mxu0 0
        %1224 = vmatprep.subr.bf16.mxu0 0
        %1225 = vmatpush2.bf16.msra.mxu0 0
        %1226 = vmatprep.mubr.bf16.mxu0 0
        %1227 = vmatmul.mubr.bf16.gmra.mxu0 %v1129
        %v1228 = vpop.f32.mrf.mxu0
        %v1229 = vadd.f32 0.0, %v1228
        %v1230 = vpop.f32.mrf.mxu0
        %v1231 = vpop.f32.mrf.mxu0
        %v1232 = vpop.f32.mrf.mxu0
        %1233 = vdwg.mxu0
        %v1234 = vrcp.pop %v1128
        %v1235 = vmul.f32 %v1229, %v1234
        %1237 = vrot.lane.b32.xlu0 %v1235, 4
        %v1238 = vpop.permute.xlu0 %1237
        %vm1240 = vcmask 64544
        %1241 = vst.msk [vmem:[#allocation4] sm:$0xff] %vm1240, %v1238
        %v1242 = vld [vmem:[#allocation2] sm:$0xf]
        %v1243 = vld [vmem:[#allocation2 + $0x4] sm:$0xf]
        %v1244 = vld [vmem:[#allocation2 + $0x8] sm:$0xf]
        %v1245 = vld [vmem:[#allocation2 + $0xc] sm:$0xf]
        %v1246 = vld [vmem:[#allocation2 + $0x10] sm:$0xf]
        %v1247 = vld [vmem:[#allocation2 + $0x14] sm:$0xf]
        %v1248 = vld [vmem:[#allocation2 + $0x18] sm:$0xf]
        %v1249 = vld [vmem:[#allocation2 + $0x1c] sm:$0xf]
        %v1250 = vld [vmem:[#allocation2 + $0x20] sm:$0xf]
        %v1251 = vld [vmem:[#allocation2 + $0x24] sm:$0xf]
        %v1252 = vld [vmem:[#allocation2 + $0x28] sm:$0xf]
        %v1253 = vld [vmem:[#allocation2 + $0x2c] sm:$0xf]
        %v1254 = vld [vmem:[#allocation2 + $0x30] sm:$0xf]
        %v1255 = vld [vmem:[#allocation2 + $0x34] sm:$0xf]
        %v1256 = vld [vmem:[#allocation2 + $0x38] sm:$0xf]
        %v1257 = vld [vmem:[#allocation2 + $0x3c] sm:$0xf]
        %v1258 = vld [vmem:[#allocation3] sm:$0xf]
        %v1259 = vld [vmem:[#allocation3 + $0x4] sm:$0xf]
        %v1260 = vld [vmem:[#allocation3 + $0x8] sm:$0xf]
        %v1261 = vld [vmem:[#allocation3 + $0xc] sm:$0xf]
        %v1262 = vld [vmem:[#allocation3 + $0x10] sm:$0xf]
        %v1263 = vld [vmem:[#allocation3 + $0x14] sm:$0xf]
        %v1264 = vld [vmem:[#allocation3 + $0x18] sm:$0xf]
        %v1265 = vld [vmem:[#allocation3 + $0x1c] sm:$0xf]
        %v1266 = vld [vmem:[#allocation3 + $0x20] sm:$0xf]
        %v1267 = vld [vmem:[#allocation3 + $0x24] sm:$0xf]
        %v1268 = vld [vmem:[#allocation3 + $0x28] sm:$0xf]
        %v1269 = vld [vmem:[#allocation3 + $0x2c] sm:$0xf]
        %v1270 = vld [vmem:[#allocation3 + $0x30] sm:$0xf]
        %v1271 = vld [vmem:[#allocation3 + $0x34] sm:$0xf]
        %v1272 = vld [vmem:[#allocation3 + $0x38] sm:$0xf]
        %v1273 = vld [vmem:[#allocation3 + $0x3c] sm:$0xf]
        %1274 = vrot.lane.b32.xlu0 %v716, 120
        %v1275 = vpop.permute.xlu0 %1274
        %v1292 = vunpack.c.l.b16 %v1242
        %v1293 = vunpack.c.l.b16 %v1243
        %v1294 = vunpack.c.l.b16 %v1244
        %v1295 = vunpack.c.l.b16 %v1245
        %v1296 = vunpack.c.l.b16 %v1246
        %v1297 = vunpack.c.l.b16 %v1247
        %v1298 = vunpack.c.l.b16 %v1248
        %v1299 = vunpack.c.l.b16 %v1249
        %v1300 = vunpack.c.l.b16 %v1250
        %v1301 = vunpack.c.l.b16 %v1251
        %v1302 = vunpack.c.l.b16 %v1252
        %v1303 = vunpack.c.l.b16 %v1253
        %v1304 = vunpack.c.l.b16 %v1254
        %v1305 = vunpack.c.l.b16 %v1255
        %v1306 = vunpack.c.l.b16 %v1256
        %v1307 = vunpack.c.l.b16 %v1257
        %v1308 = vpack.c.b16 %v1293, %v1292
        %v1309 = vpack.c.b16 %v1295, %v1294
        %v1310 = vpack.c.b16 %v1297, %v1296
        %v1311 = vpack.c.b16 %v1299, %v1298
        %v1312 = vpack.c.b16 %v1301, %v1300
        %v1313 = vpack.c.b16 %v1303, %v1302
        %v1314 = vpack.c.b16 %v1305, %v1304
        %v1315 = vpack.c.b16 %v1307, %v1306
        %1316 = vrot.lane.b32.xlu0 %v1308, 120
        %v1317 = vpop.permute.xlu0 %1316
        %1318 = vrot.lane.b32.xlu0 %v1309, 120
        %v1319 = vpop.permute.xlu0 %1318
        %1320 = vrot.lane.b32.xlu0 %v1310, 120
        %v1321 = vpop.permute.xlu0 %1320
        %1322 = vrot.lane.b32.xlu0 %v1311, 120
        %v1323 = vpop.permute.xlu0 %1322
        %1324 = vrot.lane.b32.xlu0 %v1312, 120
        %v1325 = vpop.permute.xlu0 %1324
        %1326 = vrot.lane.b32.xlu0 %v1313, 120
        %v1327 = vpop.permute.xlu0 %1326
        %1328 = vrot.lane.b32.xlu0 %v1314, 120
        %v1329 = vpop.permute.xlu0 %1328
        %1330 = vrot.lane.b32.xlu0 %v1315, 120
        %v1331 = vpop.permute.xlu0 %1330
        %v1333 = vsel %vm797, %v1275, 0
        %v1336 = vsel %vm797, %v1317, 0
        %v1339 = vsel %vm797, %v1319, 0
        %v1342 = vsel %vm797, %v1321, 0
        %v1345 = vsel %vm797, %v1323, 0
        %v1348 = vsel %vm797, %v1325, 0
        %v1351 = vsel %vm797, %v1327, 0
        %v1354 = vsel %vm797, %v1329, 0
        %v1357 = vsel %vm797, %v1331, 0
        %1359 = vmatprep.subr.bf16.mxu0 0
        %1360 = vmatpush1.bf16.xpose.msra.mxu0 %v1357
        %1361 = vmatprep.subr.bf16.mxu0 0
        %1362 = vmatpush1.bf16.xpose.msra.mxu0 %v1354
        %1363 = vmatprep.subr.bf16.mxu0 0
        %1364 = vmatpush1.bf16.xpose.msra.mxu0 %v1351
        %1365 = vmatprep.subr.bf16.mxu0 0
        %1366 = vmatpush1.bf16.xpose.msra.mxu0 %v1348
        %1367 = vmatprep.subr.bf16.mxu0 0
        %1368 = vmatpush1.bf16.xpose.msra.mxu0 %v1345
        %1369 = vmatprep.subr.bf16.mxu0 0
        %1370 = vmatpush1.bf16.xpose.msra.mxu0 %v1342
        %1371 = vmatprep.subr.bf16.mxu0 0
        %1372 = vmatpush1.bf16.xpose.msra.mxu0 %v1339
        %1373 = vmatprep.subr.bf16.mxu0 0
        %1374 = vmatpush1.bf16.xpose.msra.mxu0 %v1336
        %1375 = vmatprep.subr.bf16.mxu0 0
        %1376 = vmatpush2.bf16.xpose.msra.mxu0 0
        %1377 = vmatprep.subr.bf16.mxu0 0
        %1378 = vmatpush2.bf16.xpose.msra.mxu0 0
        %1379 = vmatprep.subr.bf16.mxu0 0
        %1380 = vmatpush2.bf16.xpose.msra.mxu0 0
        %1381 = vmatprep.subr.bf16.mxu0 0
        %1382 = vmatpush2.bf16.xpose.msra.mxu0 0
        %1383 = vmatprep.subr.bf16.mxu0 0
        %1384 = vmatpush2.bf16.xpose.msra.mxu0 0
        %1385 = vmatprep.subr.bf16.mxu0 0
        %1386 = vmatpush2.bf16.xpose.msra.mxu0 0
        %1387 = vmatprep.subr.bf16.mxu0 0
        %1388 = vmatpush2.bf16.xpose.msra.mxu0 0
        %1389 = vmatprep.subr.bf16.mxu0 0
        %1390 = vmatpush2.bf16.xpose.msra.mxu0 0
        %1391 = vmatprep.mubr.bf16.mxu0 0
        %1392 = vmatmul.mubr.bf16.gmra.mxu0 %v1333
        %v1393 = vpop.f32.mrf.mxu0
        %v1394 = vadd.f32 %v724, %v1393
        %v1395 = vpop.f32.mrf.mxu0
        %v1396 = vpop.f32.mrf.mxu0
        %v1397 = vpop.f32.mrf.mxu0
        %1398 = vdwg.mxu0
        %1399 = vmax.xlane.f32.xlu0 %v1394
        %v1400 = vpop.xlane.xlu0 %1399
        %v1401 = vsub.f32 %v1394, %v1400
        %v1402 = vmul.f32 %v1401, 1.442695
        %v1403 = vpow.pop %v1402
        %1404 = vadd.xlane.f32.xlu0 %v1403
        %v1405 = vpop.xlane.xlu0 %1404
        %v1406 = vpack.c.bf16 %v1403, %v1403
        %v1423 = vunpack.c.l.b16 %v1258
        %v1424 = vunpack.c.l.b16 %v1259
        %v1425 = vunpack.c.l.b16 %v1260
        %v1426 = vunpack.c.l.b16 %v1261
        %v1427 = vunpack.c.l.b16 %v1262
        %v1428 = vunpack.c.l.b16 %v1263
        %v1429 = vunpack.c.l.b16 %v1264
        %v1430 = vunpack.c.l.b16 %v1265
        %v1431 = vunpack.c.l.b16 %v1266
        %v1432 = vunpack.c.l.b16 %v1267
        %v1433 = vunpack.c.l.b16 %v1268
        %v1434 = vunpack.c.l.b16 %v1269
        %v1435 = vunpack.c.l.b16 %v1270
        %v1436 = vunpack.c.l.b16 %v1271
        %v1437 = vunpack.c.l.b16 %v1272
        %v1438 = vunpack.c.l.b16 %v1273
        %v1439 = vpack.c.b16 %v1424, %v1423
        %v1440 = vpack.c.b16 %v1426, %v1425
        %v1441 = vpack.c.b16 %v1428, %v1427
        %v1442 = vpack.c.b16 %v1430, %v1429
        %v1443 = vpack.c.b16 %v1432, %v1431
        %v1444 = vpack.c.b16 %v1434, %v1433
        %v1445 = vpack.c.b16 %v1436, %v1435
        %v1446 = vpack.c.b16 %v1438, %v1437
        %1447 = vrot.lane.b32.xlu0 %v1439, 120
        %v1448 = vpop.permute.xlu0 %1447
        %1449 = vrot.lane.b32.xlu0 %v1440, 120
        %v1450 = vpop.permute.xlu0 %1449
        %1451 = vrot.lane.b32.xlu0 %v1441, 120
        %v1452 = vpop.permute.xlu0 %1451
        %1453 = vrot.lane.b32.xlu0 %v1442, 120
        %v1454 = vpop.permute.xlu0 %1453
        %1455 = vrot.lane.b32.xlu0 %v1443, 120
        %v1456 = vpop.permute.xlu0 %1455
        %1457 = vrot.lane.b32.xlu0 %v1444, 120
        %v1458 = vpop.permute.xlu0 %1457
        %1459 = vrot.lane.b32.xlu0 %v1445, 120
        %v1460 = vpop.permute.xlu0 %1459
        %1461 = vrot.lane.b32.xlu0 %v1446, 120
        %v1462 = vpop.permute.xlu0 %1461
        %1471 = vmatprep.subr.bf16.mxu0 0
        %1472 = vmatpush1.bf16.msra.mxu0 %v1462
        %1473 = vmatprep.subr.bf16.mxu0 0
        %1474 = vmatpush1.bf16.msra.mxu0 %v1460
        %1475 = vmatprep.subr.bf16.mxu0 0
        %1476 = vmatpush1.bf16.msra.mxu0 %v1458
        %1477 = vmatprep.subr.bf16.mxu0 0
        %1478 = vmatpush1.bf16.msra.mxu0 %v1456
        %1479 = vmatprep.subr.bf16.mxu0 0
        %1480 = vmatpush1.bf16.msra.mxu0 %v1454
        %1481 = vmatprep.subr.bf16.mxu0 0
        %1482 = vmatpush1.bf16.msra.mxu0 %v1452
        %1483 = vmatprep.subr.bf16.mxu0 0
        %1484 = vmatpush1.bf16.msra.mxu0 %v1450
        %1485 = vmatprep.subr.bf16.mxu0 0
        %1486 = vmatpush1.bf16.msra.mxu0 %v1448
        %1487 = vmatprep.subr.bf16.mxu0 0
        %1488 = vmatpush2.bf16.msra.mxu0 0
        %1489 = vmatprep.subr.bf16.mxu0 0
        %1490 = vmatpush2.bf16.msra.mxu0 0
        %1491 = vmatprep.subr.bf16.mxu0 0
        %1492 = vmatpush2.bf16.msra.mxu0 0
        %1493 = vmatprep.subr.bf16.mxu0 0
        %1494 = vmatpush2.bf16.msra.mxu0 0
        %1495 = vmatprep.subr.bf16.mxu0 0
        %1496 = vmatpush2.bf16.msra.mxu0 0
        %1497 = vmatprep.subr.bf16.mxu0 0
        %1498 = vmatpush2.bf16.msra.mxu0 0
        %1499 = vmatprep.subr.bf16.mxu0 0
        %1500 = vmatpush2.bf16.msra.mxu0 0
        %1501 = vmatprep.subr.bf16.mxu0 0
        %1502 = vmatpush2.bf16.msra.mxu0 0
        %1503 = vmatprep.mubr.bf16.mxu0 0
        %1504 = vmatmul.mubr.bf16.gmra.mxu0 %v1406
        %v1505 = vpop.f32.mrf.mxu0
        %v1506 = vadd.f32 0.0, %v1505
        %v1507 = vpop.f32.mrf.mxu0
        %v1508 = vpop.f32.mrf.mxu0
        %v1509 = vpop.f32.mrf.mxu0
        %1510 = vdwg.mxu0
        %v1511 = vrcp.pop %v1405
        %v1512 = vmul.f32 %v1506, %v1511
        %1514 = vrot.lane.b32.xlu0 %v1512, 8
        %v1515 = vpop.permute.xlu0 %1514
        %vm1517 = vcmask 97344
        %1518 = vst.msk [vmem:[#allocation4] sm:$0xff] %vm1517, %v1515
        %v1519 = vld [vmem:[#allocation2] sm:$0xf]
        %v1520 = vld [vmem:[#allocation2 + $0x4] sm:$0xf]
        %v1521 = vld [vmem:[#allocation2 + $0x8] sm:$0xf]
        %v1522 = vld [vmem:[#allocation2 + $0xc] sm:$0xf]
        %v1523 = vld [vmem:[#allocation2 + $0x10] sm:$0xf]
        %v1524 = vld [vmem:[#allocation2 + $0x14] sm:$0xf]
        %v1525 = vld [vmem:[#allocation2 + $0x18] sm:$0xf]
        %v1526 = vld [vmem:[#allocation2 + $0x1c] sm:$0xf]
        %v1527 = vld [vmem:[#allocation2 + $0x20] sm:$0xf]
        %v1528 = vld [vmem:[#allocation2 + $0x24] sm:$0xf]
        %v1529 = vld [vmem:[#allocation2 + $0x28] sm:$0xf]
        %v1530 = vld [vmem:[#allocation2 + $0x2c] sm:$0xf]
        %v1531 = vld [vmem:[#allocation2 + $0x30] sm:$0xf]
        %v1532 = vld [vmem:[#allocation2 + $0x34] sm:$0xf]
        %v1533 = vld [vmem:[#allocation2 + $0x38] sm:$0xf]
        %v1534 = vld [vmem:[#allocation2 + $0x3c] sm:$0xf]
        %v1535 = vld [vmem:[#allocation3] sm:$0xf]
        %v1536 = vld [vmem:[#allocation3 + $0x4] sm:$0xf]
        %v1537 = vld [vmem:[#allocation3 + $0x8] sm:$0xf]
        %v1538 = vld [vmem:[#allocation3 + $0xc] sm:$0xf]
        %v1539 = vld [vmem:[#allocation3 + $0x10] sm:$0xf]
        %v1540 = vld [vmem:[#allocation3 + $0x14] sm:$0xf]
        %v1541 = vld [vmem:[#allocation3 + $0x18] sm:$0xf]
        %v1542 = vld [vmem:[#allocation3 + $0x1c] sm:$0xf]
        %v1543 = vld [vmem:[#allocation3 + $0x20] sm:$0xf]
        %v1544 = vld [vmem:[#allocation3 + $0x24] sm:$0xf]
        %v1545 = vld [vmem:[#allocation3 + $0x28] sm:$0xf]
        %v1546 = vld [vmem:[#allocation3 + $0x2c] sm:$0xf]
        %v1547 = vld [vmem:[#allocation3 + $0x30] sm:$0xf]
        %v1548 = vld [vmem:[#allocation3 + $0x34] sm:$0xf]
        %v1549 = vld [vmem:[#allocation3 + $0x38] sm:$0xf]
        %v1550 = vld [vmem:[#allocation3 + $0x3c] sm:$0xf]
        %1551 = vrot.lane.b32.xlu0 %v716, 116
        %v1552 = vpop.permute.xlu0 %1551
        %v1569 = vunpack.c.l.b16 %v1519
        %v1570 = vunpack.c.l.b16 %v1520
        %v1571 = vunpack.c.l.b16 %v1521
        %v1572 = vunpack.c.l.b16 %v1522
        %v1573 = vunpack.c.l.b16 %v1523
        %v1574 = vunpack.c.l.b16 %v1524
        %v1575 = vunpack.c.l.b16 %v1525
        %v1576 = vunpack.c.l.b16 %v1526
        %v1577 = vunpack.c.l.b16 %v1527
        %v1578 = vunpack.c.l.b16 %v1528
        %v1579 = vunpack.c.l.b16 %v1529
        %v1580 = vunpack.c.l.b16 %v1530
        %v1581 = vunpack.c.l.b16 %v1531
        %v1582 = vunpack.c.l.b16 %v1532
        %v1583 = vunpack.c.l.b16 %v1533
        %v1584 = vunpack.c.l.b16 %v1534
        %v1585 = vpack.c.b16 %v1570, %v1569
        %v1586 = vpack.c.b16 %v1572, %v1571
        %v1587 = vpack.c.b16 %v1574, %v1573
        %v1588 = vpack.c.b16 %v1576, %v1575
        %v1589 = vpack.c.b16 %v1578, %v1577
        %v1590 = vpack.c.b16 %v1580, %v1579
        %v1591 = vpack.c.b16 %v1582, %v1581
        %v1592 = vpack.c.b16 %v1584, %v1583
        %1593 = vrot.lane.b32.xlu0 %v1585, 116
        %v1594 = vpop.permute.xlu0 %1593
        %1595 = vrot.lane.b32.xlu0 %v1586, 116
        %v1596 = vpop.permute.xlu0 %1595
        %1597 = vrot.lane.b32.xlu0 %v1587, 116
        %v1598 = vpop.permute.xlu0 %1597
        %1599 = vrot.lane.b32.xlu0 %v1588, 116
        %v1600 = vpop.permute.xlu0 %1599
        %1601 = vrot.lane.b32.xlu0 %v1589, 116
        %v1602 = vpop.permute.xlu0 %1601
        %1603 = vrot.lane.b32.xlu0 %v1590, 116
        %v1604 = vpop.permute.xlu0 %1603
        %1605 = vrot.lane.b32.xlu0 %v1591, 116
        %v1606 = vpop.permute.xlu0 %1605
        %1607 = vrot.lane.b32.xlu0 %v1592, 116
        %v1608 = vpop.permute.xlu0 %1607
        %v1610 = vsel %vm797, %v1552, 0
        %v1613 = vsel %vm797, %v1594, 0
        %v1616 = vsel %vm797, %v1596, 0
        %v1619 = vsel %vm797, %v1598, 0
        %v1622 = vsel %vm797, %v1600, 0
        %v1625 = vsel %vm797, %v1602, 0
        %v1628 = vsel %vm797, %v1604, 0
        %v1631 = vsel %vm797, %v1606, 0
        %v1634 = vsel %vm797, %v1608, 0
        %1636 = vmatprep.subr.bf16.mxu0 0
        %1637 = vmatpush1.bf16.xpose.msra.mxu0 %v1634
        %1638 = vmatprep.subr.bf16.mxu0 0
        %1639 = vmatpush1.bf16.xpose.msra.mxu0 %v1631
        %1640 = vmatprep.subr.bf16.mxu0 0
        %1641 = vmatpush1.bf16.xpose.msra.mxu0 %v1628
        %1642 = vmatprep.subr.bf16.mxu0 0
        %1643 = vmatpush1.bf16.xpose.msra.mxu0 %v1625
        %1644 = vmatprep.subr.bf16.mxu0 0
        %1645 = vmatpush1.bf16.xpose.msra.mxu0 %v1622
        %1646 = vmatprep.subr.bf16.mxu0 0
        %1647 = vmatpush1.bf16.xpose.msra.mxu0 %v1619
        %1648 = vmatprep.subr.bf16.mxu0 0
        %1649 = vmatpush1.bf16.xpose.msra.mxu0 %v1616
        %1650 = vmatprep.subr.bf16.mxu0 0
        %1651 = vmatpush1.bf16.xpose.msra.mxu0 %v1613
        %1652 = vmatprep.subr.bf16.mxu0 0
        %1653 = vmatpush2.bf16.xpose.msra.mxu0 0
        %1654 = vmatprep.subr.bf16.mxu0 0
        %1655 = vmatpush2.bf16.xpose.msra.mxu0 0
        %1656 = vmatprep.subr.bf16.mxu0 0
        %1657 = vmatpush2.bf16.xpose.msra.mxu0 0
        %1658 = vmatprep.subr.bf16.mxu0 0
        %1659 = vmatpush2.bf16.xpose.msra.mxu0 0
        %1660 = vmatprep.subr.bf16.mxu0 0
        %1661 = vmatpush2.bf16.xpose.msra.mxu0 0
        %1662 = vmatprep.subr.bf16.mxu0 0
        %1663 = vmatpush2.bf16.xpose.msra.mxu0 0
        %1664 = vmatprep.subr.bf16.mxu0 0
        %1665 = vmatpush2.bf16.xpose.msra.mxu0 0
        %1666 = vmatprep.subr.bf16.mxu0 0
        %1667 = vmatpush2.bf16.xpose.msra.mxu0 0
        %1668 = vmatprep.mubr.bf16.mxu0 0
        %1669 = vmatmul.mubr.bf16.gmra.mxu0 %v1610
        %v1670 = vpop.f32.mrf.mxu0
        %v1671 = vadd.f32 %v724, %v1670
        %v1672 = vpop.f32.mrf.mxu0
        %v1673 = vpop.f32.mrf.mxu0
        %v1674 = vpop.f32.mrf.mxu0
        %1675 = vdwg.mxu0
        %1676 = vmax.xlane.f32.xlu0 %v1671
        %v1677 = vpop.xlane.xlu0 %1676
        %v1678 = vsub.f32 %v1671, %v1677
        %v1679 = vmul.f32 %v1678, 1.442695
        %v1680 = vpow.pop %v1679
        %1681 = vadd.xlane.f32.xlu0 %v1680
        %v1682 = vpop.xlane.xlu0 %1681
        %v1683 = vpack.c.bf16 %v1680, %v1680
        %v1700 = vunpack.c.l.b16 %v1535
        %v1701 = vunpack.c.l.b16 %v1536
        %v1702 = vunpack.c.l.b16 %v1537
        %v1703 = vunpack.c.l.b16 %v1538
        %v1704 = vunpack.c.l.b16 %v1539
        %v1705 = vunpack.c.l.b16 %v1540
        %v1706 = vunpack.c.l.b16 %v1541
        %v1707 = vunpack.c.l.b16 %v1542
        %v1708 = vunpack.c.l.b16 %v1543
        %v1709 = vunpack.c.l.b16 %v1544
        %v1710 = vunpack.c.l.b16 %v1545
        %v1711 = vunpack.c.l.b16 %v1546
        %v1712 = vunpack.c.l.b16 %v1547
        %v1713 = vunpack.c.l.b16 %v1548
        %v1714 = vunpack.c.l.b16 %v1549
        %v1715 = vunpack.c.l.b16 %v1550
        %v1716 = vpack.c.b16 %v1701, %v1700
        %v1717 = vpack.c.b16 %v1703, %v1702
        %v1718 = vpack.c.b16 %v1705, %v1704
        %v1719 = vpack.c.b16 %v1707, %v1706
        %v1720 = vpack.c.b16 %v1709, %v1708
        %v1721 = vpack.c.b16 %v1711, %v1710
        %v1722 = vpack.c.b16 %v1713, %v1712
        %v1723 = vpack.c.b16 %v1715, %v1714
        %1724 = vrot.lane.b32.xlu0 %v1716, 116
        %v1725 = vpop.permute.xlu0 %1724
        %1726 = vrot.lane.b32.xlu0 %v1717, 116
        %v1727 = vpop.permute.xlu0 %1726
        %1728 = vrot.lane.b32.xlu0 %v1718, 116
        %v1729 = vpop.permute.xlu0 %1728
        %1730 = vrot.lane.b32.xlu0 %v1719, 116
        %v1731 = vpop.permute.xlu0 %1730
        %1732 = vrot.lane.b32.xlu0 %v1720, 116
        %v1733 = vpop.permute.xlu0 %1732
        %1734 = vrot.lane.b32.xlu0 %v1721, 116
        %v1735 = vpop.permute.xlu0 %1734
        %1736 = vrot.lane.b32.xlu0 %v1722, 116
        %v1737 = vpop.permute.xlu0 %1736
        %1738 = vrot.lane.b32.xlu0 %v1723, 116
        %v1739 = vpop.permute.xlu0 %1738
        %1748 = vmatprep.subr.bf16.mxu0 0
        %1749 = vmatpush1.bf16.msra.mxu0 %v1739
        %1750 = vmatprep.subr.bf16.mxu0 0
        %1751 = vmatpush1.bf16.msra.mxu0 %v1737
        %1752 = vmatprep.subr.bf16.mxu0 0
        %1753 = vmatpush1.bf16.msra.mxu0 %v1735
        %1754 = vmatprep.subr.bf16.mxu0 0
        %1755 = vmatpush1.bf16.msra.mxu0 %v1733
        %1756 = vmatprep.subr.bf16.mxu0 0
        %1757 = vmatpush1.bf16.msra.mxu0 %v1731
        %1758 = vmatprep.subr.bf16.mxu0 0
        %1759 = vmatpush1.bf16.msra.mxu0 %v1729
        %1760 = vmatprep.subr.bf16.mxu0 0
        %1761 = vmatpush1.bf16.msra.mxu0 %v1727
        %1762 = vmatprep.subr.bf16.mxu0 0
        %1763 = vmatpush1.bf16.msra.mxu0 %v1725
        %1764 = vmatprep.subr.bf16.mxu0 0
        %1765 = vmatpush2.bf16.msra.mxu0 0
        %1766 = vmatprep.subr.bf16.mxu0 0
        %1767 = vmatpush2.bf16.msra.mxu0 0
        %1768 = vmatprep.subr.bf16.mxu0 0
        %1769 = vmatpush2.bf16.msra.mxu0 0
        %1770 = vmatprep.subr.bf16.mxu0 0
        %1771 = vmatpush2.bf16.msra.mxu0 0
        %1772 = vmatprep.subr.bf16.mxu0 0
        %1773 = vmatpush2.bf16.msra.mxu0 0
        %1774 = vmatprep.subr.bf16.mxu0 0
        %1775 = vmatpush2.bf16.msra.mxu0 0
        %1776 = vmatprep.subr.bf16.mxu0 0
        %1777 = vmatpush2.bf16.msra.mxu0 0
        %1778 = vmatprep.subr.bf16.mxu0 0
        %1779 = vmatpush2.bf16.msra.mxu0 0
        %1780 = vmatprep.mubr.bf16.mxu0 0
        %1781 = vmatmul.mubr.bf16.gmra.mxu0 %v1683
        %v1782 = vpop.f32.mrf.mxu0
        %v1783 = vadd.f32 0.0, %v1782
        %v1784 = vpop.f32.mrf.mxu0
        %v1785 = vpop.f32.mrf.mxu0
        %v1786 = vpop.f32.mrf.mxu0
        %1787 = vdwg.mxu0
        %v1788 = vrcp.pop %v1682
        %v1789 = vmul.f32 %v1783, %v1788
        %1791 = vrot.lane.b32.xlu0 %v1789, 12
        %v1792 = vpop.permute.xlu0 %1791
        %vm1794 = vcmask 130144
        %1795 = vst.msk [vmem:[#allocation4] sm:$0xff] %vm1794, %v1792
        %v1796 = vld [vmem:[#allocation2] sm:$0xf]
        %v1797 = vld [vmem:[#allocation2 + $0x4] sm:$0xf]
        %v1798 = vld [vmem:[#allocation2 + $0x8] sm:$0xf]
        %v1799 = vld [vmem:[#allocation2 + $0xc] sm:$0xf]
        %v1800 = vld [vmem:[#allocation2 + $0x10] sm:$0xf]
        %v1801 = vld [vmem:[#allocation2 + $0x14] sm:$0xf]
        %v1802 = vld [vmem:[#allocation2 + $0x18] sm:$0xf]
        %v1803 = vld [vmem:[#allocation2 + $0x1c] sm:$0xf]
        %v1804 = vld [vmem:[#allocation2 + $0x20] sm:$0xf]
        %v1805 = vld [vmem:[#allocation2 + $0x24] sm:$0xf]
        %v1806 = vld [vmem:[#allocation2 + $0x28] sm:$0xf]
        %v1807 = vld [vmem:[#allocation2 + $0x2c] sm:$0xf]
        %v1808 = vld [vmem:[#allocation2 + $0x30] sm:$0xf]
        %v1809 = vld [vmem:[#allocation2 + $0x34] sm:$0xf]
        %v1810 = vld [vmem:[#allocation2 + $0x38] sm:$0xf]
        %v1811 = vld [vmem:[#allocation2 + $0x3c] sm:$0xf]
        %v1812 = vld [vmem:[#allocation3] sm:$0xf]
        %v1813 = vld [vmem:[#allocation3 + $0x4] sm:$0xf]
        %v1814 = vld [vmem:[#allocation3 + $0x8] sm:$0xf]
        %v1815 = vld [vmem:[#allocation3 + $0xc] sm:$0xf]
        %v1816 = vld [vmem:[#allocation3 + $0x10] sm:$0xf]
        %v1817 = vld [vmem:[#allocation3 + $0x14] sm:$0xf]
        %v1818 = vld [vmem:[#allocation3 + $0x18] sm:$0xf]
        %v1819 = vld [vmem:[#allocation3 + $0x1c] sm:$0xf]
        %v1820 = vld [vmem:[#allocation3 + $0x20] sm:$0xf]
        %v1821 = vld [vmem:[#allocation3 + $0x24] sm:$0xf]
        %v1822 = vld [vmem:[#allocation3 + $0x28] sm:$0xf]
        %v1823 = vld [vmem:[#allocation3 + $0x2c] sm:$0xf]
        %v1824 = vld [vmem:[#allocation3 + $0x30] sm:$0xf]
        %v1825 = vld [vmem:[#allocation3 + $0x34] sm:$0xf]
        %v1826 = vld [vmem:[#allocation3 + $0x38] sm:$0xf]
        %v1827 = vld [vmem:[#allocation3 + $0x3c] sm:$0xf]
        %1828 = vrot.lane.b32.xlu0 %v716, 112
        %v1829 = vpop.permute.xlu0 %1828
        %v1846 = vunpack.c.l.b16 %v1796
        %v1847 = vunpack.c.l.b16 %v1797
        %v1848 = vunpack.c.l.b16 %v1798
        %v1849 = vunpack.c.l.b16 %v1799
        %v1850 = vunpack.c.l.b16 %v1800
        %v1851 = vunpack.c.l.b16 %v1801
        %v1852 = vunpack.c.l.b16 %v1802
        %v1853 = vunpack.c.l.b16 %v1803
        %v1854 = vunpack.c.l.b16 %v1804
        %v1855 = vunpack.c.l.b16 %v1805
        %v1856 = vunpack.c.l.b16 %v1806
        %v1857 = vunpack.c.l.b16 %v1807
        %v1858 = vunpack.c.l.b16 %v1808
        %v1859 = vunpack.c.l.b16 %v1809
        %v1860 = vunpack.c.l.b16 %v1810
        %v1861 = vunpack.c.l.b16 %v1811
        %v1862 = vpack.c.b16 %v1847, %v1846
        %v1863 = vpack.c.b16 %v1849, %v1848
        %v1864 = vpack.c.b16 %v1851, %v1850
        %v1865 = vpack.c.b16 %v1853, %v1852
        %v1866 = vpack.c.b16 %v1855, %v1854
        %v1867 = vpack.c.b16 %v1857, %v1856
        %v1868 = vpack.c.b16 %v1859, %v1858
        %v1869 = vpack.c.b16 %v1861, %v1860
        %1870 = vrot.lane.b32.xlu0 %v1862, 112
        %v1871 = vpop.permute.xlu0 %1870
        %1872 = vrot.lane.b32.xlu0 %v1863, 112
        %v1873 = vpop.permute.xlu0 %1872
        %1874 = vrot.lane.b32.xlu0 %v1864, 112
        %v1875 = vpop.permute.xlu0 %1874
        %1876 = vrot.lane.b32.xlu0 %v1865, 112
        %v1877 = vpop.permute.xlu0 %1876
        %1878 = vrot.lane.b32.xlu0 %v1866, 112
        %v1879 = vpop.permute.xlu0 %1878
        %1880 = vrot.lane.b32.xlu0 %v1867, 112
        %v1881 = vpop.permute.xlu0 %1880
        %1882 = vrot.lane.b32.xlu0 %v1868, 112
        %v1883 = vpop.permute.xlu0 %1882
        %1884 = vrot.lane.b32.xlu0 %v1869, 112
        %v1885 = vpop.permute.xlu0 %1884
        %v1887 = vsel %vm797, %v1829, 0
        %v1890 = vsel %vm797, %v1871, 0
        %v1893 = vsel %vm797, %v1873, 0
        %v1896 = vsel %vm797, %v1875, 0
        %v1899 = vsel %vm797, %v1877, 0
        %v1902 = vsel %vm797, %v1879, 0
        %v1905 = vsel %vm797, %v1881, 0
        %v1908 = vsel %vm797, %v1883, 0
        %v1911 = vsel %vm797, %v1885, 0
        %1913 = vmatprep.subr.bf16.mxu0 0
        %1914 = vmatpush1.bf16.xpose.msra.mxu0 %v1911
        %1915 = vmatprep.subr.bf16.mxu0 0
        %1916 = vmatpush1.bf16.xpose.msra.mxu0 %v1908
        %1917 = vmatprep.subr.bf16.mxu0 0
        %1918 = vmatpush1.bf16.xpose.msra.mxu0 %v1905
        %1919 = vmatprep.subr.bf16.mxu0 0
        %1920 = vmatpush1.bf16.xpose.msra.mxu0 %v1902
        %1921 = vmatprep.subr.bf16.mxu0 0
        %1922 = vmatpush1.bf16.xpose.msra.mxu0 %v1899
        %1923 = vmatprep.subr.bf16.mxu0 0
        %1924 = vmatpush1.bf16.xpose.msra.mxu0 %v1896
        %1925 = vmatprep.subr.bf16.mxu0 0
        %1926 = vmatpush1.bf16.xpose.msra.mxu0 %v1893
        %1927 = vmatprep.subr.bf16.mxu0 0
        %1928 = vmatpush1.bf16.xpose.msra.mxu0 %v1890
        %1929 = vmatprep.subr.bf16.mxu0 0
        %1930 = vmatpush2.bf16.xpose.msra.mxu0 0
        %1931 = vmatprep.subr.bf16.mxu0 0
        %1932 = vmatpush2.bf16.xpose.msra.mxu0 0
        %1933 = vmatprep.subr.bf16.mxu0 0
        %1934 = vmatpush2.bf16.xpose.msra.mxu0 0
        %1935 = vmatprep.subr.bf16.mxu0 0
        %1936 = vmatpush2.bf16.xpose.msra.mxu0 0
        %1937 = vmatprep.subr.bf16.mxu0 0
        %1938 = vmatpush2.bf16.xpose.msra.mxu0 0
        %1939 = vmatprep.subr.bf16.mxu0 0
        %1940 = vmatpush2.bf16.xpose.msra.mxu0 0
        %1941 = vmatprep.subr.bf16.mxu0 0
        %1942 = vmatpush2.bf16.xpose.msra.mxu0 0
        %1943 = vmatprep.subr.bf16.mxu0 0
        %1944 = vmatpush2.bf16.xpose.msra.mxu0 0
        %1945 = vmatprep.mubr.bf16.mxu0 0
        %1946 = vmatmul.mubr.bf16.gmra.mxu0 %v1887
        %v1947 = vpop.f32.mrf.mxu0
        %v1948 = vadd.f32 %v724, %v1947
        %v1949 = vpop.f32.mrf.mxu0
        %v1950 = vpop.f32.mrf.mxu0
        %v1951 = vpop.f32.mrf.mxu0
        %1952 = vdwg.mxu0
        %1953 = vmax.xlane.f32.xlu0 %v1948
        %v1954 = vpop.xlane.xlu0 %1953
        %v1955 = vsub.f32 %v1948, %v1954
        %v1956 = vmul.f32 %v1955, 1.442695
        %v1957 = vpow.pop %v1956
        %1958 = vadd.xlane.f32.xlu0 %v1957
        %v1959 = vpop.xlane.xlu0 %1958
        %v1960 = vpack.c.bf16 %v1957, %v1957
        %v1977 = vunpack.c.l.b16 %v1812
        %v1978 = vunpack.c.l.b16 %v1813
        %v1979 = vunpack.c.l.b16 %v1814
        %v1980 = vunpack.c.l.b16 %v1815
        %v1981 = vunpack.c.l.b16 %v1816
        %v1982 = vunpack.c.l.b16 %v1817
        %v1983 = vunpack.c.l.b16 %v1818
        %v1984 = vunpack.c.l.b16 %v1819
        %v1985 = vunpack.c.l.b16 %v1820
        %v1986 = vunpack.c.l.b16 %v1821
        %v1987 = vunpack.c.l.b16 %v1822
        %v1988 = vunpack.c.l.b16 %v1823
        %v1989 = vunpack.c.l.b16 %v1824
        %v1990 = vunpack.c.l.b16 %v1825
        %v1991 = vunpack.c.l.b16 %v1826
        %v1992 = vunpack.c.l.b16 %v1827
        %v1993 = vpack.c.b16 %v1978, %v1977
        %v1994 = vpack.c.b16 %v1980, %v1979
        %v1995 = vpack.c.b16 %v1982, %v1981
        %v1996 = vpack.c.b16 %v1984, %v1983
        %v1997 = vpack.c.b16 %v1986, %v1985
        %v1998 = vpack.c.b16 %v1988, %v1987
        %v1999 = vpack.c.b16 %v1990, %v1989
        %v2000 = vpack.c.b16 %v1992, %v1991
        %2001 = vrot.lane.b32.xlu0 %v1993, 112
        %v2002 = vpop.permute.xlu0 %2001
        %2003 = vrot.lane.b32.xlu0 %v1994, 112
        %v2004 = vpop.permute.xlu0 %2003
        %2005 = vrot.lane.b32.xlu0 %v1995, 112
        %v2006 = vpop.permute.xlu0 %2005
        %2007 = vrot.lane.b32.xlu0 %v1996, 112
        %v2008 = vpop.permute.xlu0 %2007
        %2009 = vrot.lane.b32.xlu0 %v1997, 112
        %v2010 = vpop.permute.xlu0 %2009
        %2011 = vrot.lane.b32.xlu0 %v1998, 112
        %v2012 = vpop.permute.xlu0 %2011
        %2013 = vrot.lane.b32.xlu0 %v1999, 112
        %v2014 = vpop.permute.xlu0 %2013
        %2015 = vrot.lane.b32.xlu0 %v2000, 112
        %v2016 = vpop.permute.xlu0 %2015
        %2025 = vmatprep.subr.bf16.mxu0 0
        %2026 = vmatpush1.bf16.msra.mxu0 %v2016
        %2027 = vmatprep.subr.bf16.mxu0 0
        %2028 = vmatpush1.bf16.msra.mxu0 %v2014
        %2029 = vmatprep.subr.bf16.mxu0 0
        %2030 = vmatpush1.bf16.msra.mxu0 %v2012
        %2031 = vmatprep.subr.bf16.mxu0 0
        %2032 = vmatpush1.bf16.msra.mxu0 %v2010
        %2033 = vmatprep.subr.bf16.mxu0 0
        %2034 = vmatpush1.bf16.msra.mxu0 %v2008
        %2035 = vmatprep.subr.bf16.mxu0 0
        %2036 = vmatpush1.bf16.msra.mxu0 %v2006
        %2037 = vmatprep.subr.bf16.mxu0 0
        %2038 = vmatpush1.bf16.msra.mxu0 %v2004
        %2039 = vmatprep.subr.bf16.mxu0 0
        %2040 = vmatpush1.bf16.msra.mxu0 %v2002
        %2041 = vmatprep.subr.bf16.mxu0 0
        %2042 = vmatpush2.bf16.msra.mxu0 0
        %2043 = vmatprep.subr.bf16.mxu0 0
        %2044 = vmatpush2.bf16.msra.mxu0 0
        %2045 = vmatprep.subr.bf16.mxu0 0
        %2046 = vmatpush2.bf16.msra.mxu0 0
        %2047 = vmatprep.subr.bf16.mxu0 0
        %2048 = vmatpush2.bf16.msra.mxu0 0
        %2049 = vmatprep.subr.bf16.mxu0 0
        %2050 = vmatpush2.bf16.msra.mxu0 0
        %2051 = vmatprep.subr.bf16.mxu0 0
        %2052 = vmatpush2.bf16.msra.mxu0 0
        %2053 = vmatprep.subr.bf16.mxu0 0
        %2054 = vmatpush2.bf16.msra.mxu0 0
        %2055 = vmatprep.subr.bf16.mxu0 0
        %2056 = vmatpush2.bf16.msra.mxu0 0
        %2057 = vmatprep.mubr.bf16.mxu0 0
        %2058 = vmatmul.mubr.bf16.gmra.mxu0 %v1960
        %v2059 = vpop.f32.mrf.mxu0
        %v2060 = vadd.f32 0.0, %v2059
        %v2061 = vpop.f32.mrf.mxu0
        %v2062 = vpop.f32.mrf.mxu0
        %v2063 = vpop.f32.mrf.mxu0
        %2064 = vdwg.mxu0
        %v2065 = vrcp.pop %v1959
        %v2066 = vmul.f32 %v2060, %v2065
        %2068 = vrot.lane.b32.xlu0 %v2066, 16
        %v2069 = vpop.permute.xlu0 %2068
        %vm2071 = vcmask 162944
        %2072 = vst.msk [vmem:[#allocation4] sm:$0xff] %vm2071, %v2069
        %v2073 = vld [vmem:[#allocation2] sm:$0xf]
        %v2074 = vld [vmem:[#allocation2 + $0x4] sm:$0xf]
        %v2075 = vld [vmem:[#allocation2 + $0x8] sm:$0xf]
        %v2076 = vld [vmem:[#allocation2 + $0xc] sm:$0xf]
        %v2077 = vld [vmem:[#allocation2 + $0x10] sm:$0xf]
        %v2078 = vld [vmem:[#allocation2 + $0x14] sm:$0xf]
        %v2079 = vld [vmem:[#allocation2 + $0x18] sm:$0xf]
        %v2080 = vld [vmem:[#allocation2 + $0x1c] sm:$0xf]
        %v2081 = vld [vmem:[#allocation2 + $0x20] sm:$0xf]
        %v2082 = vld [vmem:[#allocation2 + $0x24] sm:$0xf]
        %v2083 = vld [vmem:[#allocation2 + $0x28] sm:$0xf]
        %v2084 = vld [vmem:[#allocation2 + $0x2c] sm:$0xf]
        %v2085 = vld [vmem:[#allocation2 + $0x30] sm:$0xf]
        %v2086 = vld [vmem:[#allocation2 + $0x34] sm:$0xf]
        %v2087 = vld [vmem:[#allocation2 + $0x38] sm:$0xf]
        %v2088 = vld [vmem:[#allocation2 + $0x3c] sm:$0xf]
        %v2089 = vld [vmem:[#allocation3] sm:$0xf]
        %v2090 = vld [vmem:[#allocation3 + $0x4] sm:$0xf]
        %v2091 = vld [vmem:[#allocation3 + $0x8] sm:$0xf]
        %v2092 = vld [vmem:[#allocation3 + $0xc] sm:$0xf]
        %v2093 = vld [vmem:[#allocation3 + $0x10] sm:$0xf]
        %v2094 = vld [vmem:[#allocation3 + $0x14] sm:$0xf]
        %v2095 = vld [vmem:[#allocation3 + $0x18] sm:$0xf]
        %v2096 = vld [vmem:[#allocation3 + $0x1c] sm:$0xf]
        %v2097 = vld [vmem:[#allocation3 + $0x20] sm:$0xf]
        %v2098 = vld [vmem:[#allocation3 + $0x24] sm:$0xf]
        %v2099 = vld [vmem:[#allocation3 + $0x28] sm:$0xf]
        %v2100 = vld [vmem:[#allocation3 + $0x2c] sm:$0xf]
        %v2101 = vld [vmem:[#allocation3 + $0x30] sm:$0xf]
        %v2102 = vld [vmem:[#allocation3 + $0x34] sm:$0xf]
        %v2103 = vld [vmem:[#allocation3 + $0x38] sm:$0xf]
        %v2104 = vld [vmem:[#allocation3 + $0x3c] sm:$0xf]
        %2105 = vrot.lane.b32.xlu0 %v716, 108
        %v2106 = vpop.permute.xlu0 %2105
        %v2123 = vunpack.c.l.b16 %v2073
        %v2124 = vunpack.c.l.b16 %v2074
        %v2125 = vunpack.c.l.b16 %v2075
        %v2126 = vunpack.c.l.b16 %v2076
        %v2127 = vunpack.c.l.b16 %v2077
        %v2128 = vunpack.c.l.b16 %v2078
        %v2129 = vunpack.c.l.b16 %v2079
        %v2130 = vunpack.c.l.b16 %v2080
        %v2131 = vunpack.c.l.b16 %v2081
        %v2132 = vunpack.c.l.b16 %v2082
        %v2133 = vunpack.c.l.b16 %v2083
        %v2134 = vunpack.c.l.b16 %v2084
        %v2135 = vunpack.c.l.b16 %v2085
        %v2136 = vunpack.c.l.b16 %v2086
        %v2137 = vunpack.c.l.b16 %v2087
        %v2138 = vunpack.c.l.b16 %v2088
        %v2139 = vpack.c.b16 %v2124, %v2123
        %v2140 = vpack.c.b16 %v2126, %v2125
        %v2141 = vpack.c.b16 %v2128, %v2127
        %v2142 = vpack.c.b16 %v2130, %v2129
        %v2143 = vpack.c.b16 %v2132, %v2131
        %v2144 = vpack.c.b16 %v2134, %v2133
        %v2145 = vpack.c.b16 %v2136, %v2135
        %v2146 = vpack.c.b16 %v2138, %v2137
        %2147 = vrot.lane.b32.xlu0 %v2139, 108
        %v2148 = vpop.permute.xlu0 %2147
        %2149 = vrot.lane.b32.xlu0 %v2140, 108
        %v2150 = vpop.permute.xlu0 %2149
        %2151 = vrot.lane.b32.xlu0 %v2141, 108
        %v2152 = vpop.permute.xlu0 %2151
        %2153 = vrot.lane.b32.xlu0 %v2142, 108
        %v2154 = vpop.permute.xlu0 %2153
        %2155 = vrot.lane.b32.xlu0 %v2143, 108
        %v2156 = vpop.permute.xlu0 %2155
        %2157 = vrot.lane.b32.xlu0 %v2144, 108
        %v2158 = vpop.permute.xlu0 %2157
        %2159 = vrot.lane.b32.xlu0 %v2145, 108
        %v2160 = vpop.permute.xlu0 %2159
        %2161 = vrot.lane.b32.xlu0 %v2146, 108
        %v2162 = vpop.permute.xlu0 %2161
        %v2164 = vsel %vm797, %v2106, 0
        %v2167 = vsel %vm797, %v2148, 0
        %v2170 = vsel %vm797, %v2150, 0
        %v2173 = vsel %vm797, %v2152, 0
        %v2176 = vsel %vm797, %v2154, 0
        %v2179 = vsel %vm797, %v2156, 0
        %v2182 = vsel %vm797, %v2158, 0
        %v2185 = vsel %vm797, %v2160, 0
        %v2188 = vsel %vm797, %v2162, 0
        %2190 = vmatprep.subr.bf16.mxu0 0
        %2191 = vmatpush1.bf16.xpose.msra.mxu0 %v2188
        %2192 = vmatprep.subr.bf16.mxu0 0
        %2193 = vmatpush1.bf16.xpose.msra.mxu0 %v2185
        %2194 = vmatprep.subr.bf16.mxu0 0
        %2195 = vmatpush1.bf16.xpose.msra.mxu0 %v2182
        %2196 = vmatprep.subr.bf16.mxu0 0
        %2197 = vmatpush1.bf16.xpose.msra.mxu0 %v2179
        %2198 = vmatprep.subr.bf16.mxu0 0
        %2199 = vmatpush1.bf16.xpose.msra.mxu0 %v2176
        %2200 = vmatprep.subr.bf16.mxu0 0
        %2201 = vmatpush1.bf16.xpose.msra.mxu0 %v2173
        %2202 = vmatprep.subr.bf16.mxu0 0
        %2203 = vmatpush1.bf16.xpose.msra.mxu0 %v2170
        %2204 = vmatprep.subr.bf16.mxu0 0
        %2205 = vmatpush1.bf16.xpose.msra.mxu0 %v2167
        %2206 = vmatprep.subr.bf16.mxu0 0
        %2207 = vmatpush2.bf16.xpose.msra.mxu0 0
        %2208 = vmatprep.subr.bf16.mxu0 0
        %2209 = vmatpush2.bf16.xpose.msra.mxu0 0
        %2210 = vmatprep.subr.bf16.mxu0 0
        %2211 = vmatpush2.bf16.xpose.msra.mxu0 0
        %2212 = vmatprep.subr.bf16.mxu0 0
        %2213 = vmatpush2.bf16.xpose.msra.mxu0 0
        %2214 = vmatprep.subr.bf16.mxu0 0
        %2215 = vmatpush2.bf16.xpose.msra.mxu0 0
        %2216 = vmatprep.subr.bf16.mxu0 0
        %2217 = vmatpush2.bf16.xpose.msra.mxu0 0
        %2218 = vmatprep.subr.bf16.mxu0 0
        %2219 = vmatpush2.bf16.xpose.msra.mxu0 0
        %2220 = vmatprep.subr.bf16.mxu0 0
        %2221 = vmatpush2.bf16.xpose.msra.mxu0 0
        %2222 = vmatprep.mubr.bf16.mxu0 0
        %2223 = vmatmul.mubr.bf16.gmra.mxu0 %v2164
        %v2224 = vpop.f32.mrf.mxu0
        %v2225 = vadd.f32 %v724, %v2224
        %v2226 = vpop.f32.mrf.mxu0
        %v2227 = vpop.f32.mrf.mxu0
        %v2228 = vpop.f32.mrf.mxu0
        %2229 = vdwg.mxu0
        %2230 = vmax.xlane.f32.xlu0 %v2225
        %v2231 = vpop.xlane.xlu0 %2230
        %v2232 = vsub.f32 %v2225, %v2231
        %v2233 = vmul.f32 %v2232, 1.442695
        %v2234 = vpow.pop %v2233
        %2235 = vadd.xlane.f32.xlu0 %v2234
        %v2236 = vpop.xlane.xlu0 %2235
        %v2237 = vpack.c.bf16 %v2234, %v2234
        %v2254 = vunpack.c.l.b16 %v2089
        %v2255 = vunpack.c.l.b16 %v2090
        %v2256 = vunpack.c.l.b16 %v2091
        %v2257 = vunpack.c.l.b16 %v2092
        %v2258 = vunpack.c.l.b16 %v2093
        %v2259 = vunpack.c.l.b16 %v2094
        %v2260 = vunpack.c.l.b16 %v2095
        %v2261 = vunpack.c.l.b16 %v2096
        %v2262 = vunpack.c.l.b16 %v2097
        %v2263 = vunpack.c.l.b16 %v2098
        %v2264 = vunpack.c.l.b16 %v2099
        %v2265 = vunpack.c.l.b16 %v2100
        %v2266 = vunpack.c.l.b16 %v2101
        %v2267 = vunpack.c.l.b16 %v2102
        %v2268 = vunpack.c.l.b16 %v2103
        %v2269 = vunpack.c.l.b16 %v2104
        %v2270 = vpack.c.b16 %v2255, %v2254
        %v2271 = vpack.c.b16 %v2257, %v2256
        %v2272 = vpack.c.b16 %v2259, %v2258
        %v2273 = vpack.c.b16 %v2261, %v2260
        %v2274 = vpack.c.b16 %v2263, %v2262
        %v2275 = vpack.c.b16 %v2265, %v2264
        %v2276 = vpack.c.b16 %v2267, %v2266
        %v2277 = vpack.c.b16 %v2269, %v2268
        %2278 = vrot.lane.b32.xlu0 %v2270, 108
        %v2279 = vpop.permute.xlu0 %2278
        %2280 = vrot.lane.b32.xlu0 %v2271, 108
        %v2281 = vpop.permute.xlu0 %2280
        %2282 = vrot.lane.b32.xlu0 %v2272, 108
        %v2283 = vpop.permute.xlu0 %2282
        %2284 = vrot.lane.b32.xlu0 %v2273, 108
        %v2285 = vpop.permute.xlu0 %2284
        %2286 = vrot.lane.b32.xlu0 %v2274, 108
        %v2287 = vpop.permute.xlu0 %2286
        %2288 = vrot.lane.b32.xlu0 %v2275, 108
        %v2289 = vpop.permute.xlu0 %2288
        %2290 = vrot.lane.b32.xlu0 %v2276, 108
        %v2291 = vpop.permute.xlu0 %2290
        %2292 = vrot.lane.b32.xlu0 %v2277, 108
        %v2293 = vpop.permute.xlu0 %2292
        %2302 = vmatprep.subr.bf16.mxu0 0
        %2303 = vmatpush1.bf16.msra.mxu0 %v2293
        %2304 = vmatprep.subr.bf16.mxu0 0
        %2305 = vmatpush1.bf16.msra.mxu0 %v2291
        %2306 = vmatprep.subr.bf16.mxu0 0
        %2307 = vmatpush1.bf16.msra.mxu0 %v2289
        %2308 = vmatprep.subr.bf16.mxu0 0
        %2309 = vmatpush1.bf16.msra.mxu0 %v2287
        %2310 = vmatprep.subr.bf16.mxu0 0
        %2311 = vmatpush1.bf16.msra.mxu0 %v2285
        %2312 = vmatprep.subr.bf16.mxu0 0
        %2313 = vmatpush1.bf16.msra.mxu0 %v2283
        %2314 = vmatprep.subr.bf16.mxu0 0
        %2315 = vmatpush1.bf16.msra.mxu0 %v2281
        %2316 = vmatprep.subr.bf16.mxu0 0
        %2317 = vmatpush1.bf16.msra.mxu0 %v2279
        %2318 = vmatprep.subr.bf16.mxu0 0
        %2319 = vmatpush2.bf16.msra.mxu0 0
        %2320 = vmatprep.subr.bf16.mxu0 0
        %2321 = vmatpush2.bf16.msra.mxu0 0
        %2322 = vmatprep.subr.bf16.mxu0 0
        %2323 = vmatpush2.bf16.msra.mxu0 0
        %2324 = vmatprep.subr.bf16.mxu0 0
        %2325 = vmatpush2.bf16.msra.mxu0 0
        %2326 = vmatprep.subr.bf16.mxu0 0
        %2327 = vmatpush2.bf16.msra.mxu0 0
        %2328 = vmatprep.subr.bf16.mxu0 0
        %2329 = vmatpush2.bf16.msra.mxu0 0
        %2330 = vmatprep.subr.bf16.mxu0 0
        %2331 = vmatpush2.bf16.msra.mxu0 0
        %2332 = vmatprep.subr.bf16.mxu0 0
        %2333 = vmatpush2.bf16.msra.mxu0 0
        %2334 = vmatprep.mubr.bf16.mxu0 0
        %2335 = vmatmul.mubr.bf16.gmra.mxu0 %v2237
        %v2336 = vpop.f32.mrf.mxu0
        %v2337 = vadd.f32 0.0, %v2336
        %v2338 = vpop.f32.mrf.mxu0
        %v2339 = vpop.f32.mrf.mxu0
        %v2340 = vpop.f32.mrf.mxu0
        %2341 = vdwg.mxu0
        %v2342 = vrcp.pop %v2236
        %v2343 = vmul.f32 %v2337, %v2342
        %2345 = vrot.lane.b32.xlu0 %v2343, 20
        %v2346 = vpop.permute.xlu0 %2345
        %vm2348 = vcmask 195744
        %2349 = vst.msk [vmem:[#allocation4] sm:$0xff] %vm2348, %v2346
        %v2350 = vld [vmem:[#allocation2] sm:$0xf]
        %v2351 = vld [vmem:[#allocation2 + $0x4] sm:$0xf]
        %v2352 = vld [vmem:[#allocation2 + $0x8] sm:$0xf]
        %v2353 = vld [vmem:[#allocation2 + $0xc] sm:$0xf]
        %v2354 = vld [vmem:[#allocation2 + $0x10] sm:$0xf]
        %v2355 = vld [vmem:[#allocation2 + $0x14] sm:$0xf]
        %v2356 = vld [vmem:[#allocation2 + $0x18] sm:$0xf]
        %v2357 = vld [vmem:[#allocation2 + $0x1c] sm:$0xf]
        %v2358 = vld [vmem:[#allocation2 + $0x20] sm:$0xf]
        %v2359 = vld [vmem:[#allocation2 + $0x24] sm:$0xf]
        %v2360 = vld [vmem:[#allocation2 + $0x28] sm:$0xf]
        %v2361 = vld [vmem:[#allocation2 + $0x2c] sm:$0xf]
        %v2362 = vld [vmem:[#allocation2 + $0x30] sm:$0xf]
        %v2363 = vld [vmem:[#allocation2 + $0x34] sm:$0xf]
        %v2364 = vld [vmem:[#allocation2 + $0x38] sm:$0xf]
        %v2365 = vld [vmem:[#allocation2 + $0x3c] sm:$0xf]
        %v2366 = vld [vmem:[#allocation3] sm:$0xf]
        %v2367 = vld [vmem:[#allocation3 + $0x4] sm:$0xf]
        %v2368 = vld [vmem:[#allocation3 + $0x8] sm:$0xf]
        %v2369 = vld [vmem:[#allocation3 + $0xc] sm:$0xf]
        %v2370 = vld [vmem:[#allocation3 + $0x10] sm:$0xf]
        %v2371 = vld [vmem:[#allocation3 + $0x14] sm:$0xf]
        %v2372 = vld [vmem:[#allocation3 + $0x18] sm:$0xf]
        %v2373 = vld [vmem:[#allocation3 + $0x1c] sm:$0xf]
        %v2374 = vld [vmem:[#allocation3 + $0x20] sm:$0xf]
        %v2375 = vld [vmem:[#allocation3 + $0x24] sm:$0xf]
        %v2376 = vld [vmem:[#allocation3 + $0x28] sm:$0xf]
        %v2377 = vld [vmem:[#allocation3 + $0x2c] sm:$0xf]
        %v2378 = vld [vmem:[#allocation3 + $0x30] sm:$0xf]
        %v2379 = vld [vmem:[#allocation3 + $0x34] sm:$0xf]
        %v2380 = vld [vmem:[#allocation3 + $0x38] sm:$0xf]
        %v2381 = vld [vmem:[#allocation3 + $0x3c] sm:$0xf]
        %2382 = vrot.lane.b32.xlu0 %v716, 104
        %v2383 = vpop.permute.xlu0 %2382
        %v2400 = vunpack.c.l.b16 %v2350
        %v2401 = vunpack.c.l.b16 %v2351
        %v2402 = vunpack.c.l.b16 %v2352
        %v2403 = vunpack.c.l.b16 %v2353
        %v2404 = vunpack.c.l.b16 %v2354
        %v2405 = vunpack.c.l.b16 %v2355
        %v2406 = vunpack.c.l.b16 %v2356
        %v2407 = vunpack.c.l.b16 %v2357
        %v2408 = vunpack.c.l.b16 %v2358
        %v2409 = vunpack.c.l.b16 %v2359
        %v2410 = vunpack.c.l.b16 %v2360
        %v2411 = vunpack.c.l.b16 %v2361
        %v2412 = vunpack.c.l.b16 %v2362
        %v2413 = vunpack.c.l.b16 %v2363
        %v2414 = vunpack.c.l.b16 %v2364
        %v2415 = vunpack.c.l.b16 %v2365
        %v2416 = vpack.c.b16 %v2401, %v2400
        %v2417 = vpack.c.b16 %v2403, %v2402
        %v2418 = vpack.c.b16 %v2405, %v2404
        %v2419 = vpack.c.b16 %v2407, %v2406
        %v2420 = vpack.c.b16 %v2409, %v2408
        %v2421 = vpack.c.b16 %v2411, %v2410
        %v2422 = vpack.c.b16 %v2413, %v2412
        %v2423 = vpack.c.b16 %v2415, %v2414
        %2424 = vrot.lane.b32.xlu0 %v2416, 104
        %v2425 = vpop.permute.xlu0 %2424
        %2426 = vrot.lane.b32.xlu0 %v2417, 104
        %v2427 = vpop.permute.xlu0 %2426
        %2428 = vrot.lane.b32.xlu0 %v2418, 104
        %v2429 = vpop.permute.xlu0 %2428
        %2430 = vrot.lane.b32.xlu0 %v2419, 104
        %v2431 = vpop.permute.xlu0 %2430
        %2432 = vrot.lane.b32.xlu0 %v2420, 104
        %v2433 = vpop.permute.xlu0 %2432
        %2434 = vrot.lane.b32.xlu0 %v2421, 104
        %v2435 = vpop.permute.xlu0 %2434
        %2436 = vrot.lane.b32.xlu0 %v2422, 104
        %v2437 = vpop.permute.xlu0 %2436
        %2438 = vrot.lane.b32.xlu0 %v2423, 104
        %v2439 = vpop.permute.xlu0 %2438
        %v2441 = vsel %vm797, %v2383, 0
        %v2444 = vsel %vm797, %v2425, 0
        %v2447 = vsel %vm797, %v2427, 0
        %v2450 = vsel %vm797, %v2429, 0
        %v2453 = vsel %vm797, %v2431, 0
        %v2456 = vsel %vm797, %v2433, 0
        %v2459 = vsel %vm797, %v2435, 0
        %v2462 = vsel %vm797, %v2437, 0
        %v2465 = vsel %vm797, %v2439, 0
        %2467 = vmatprep.subr.bf16.mxu0 0
        %2468 = vmatpush1.bf16.xpose.msra.mxu0 %v2465
        %2469 = vmatprep.subr.bf16.mxu0 0
        %2470 = vmatpush1.bf16.xpose.msra.mxu0 %v2462
        %2471 = vmatprep.subr.bf16.mxu0 0
        %2472 = vmatpush1.bf16.xpose.msra.mxu0 %v2459
        %2473 = vmatprep.subr.bf16.mxu0 0
        %2474 = vmatpush1.bf16.xpose.msra.mxu0 %v2456
        %2475 = vmatprep.subr.bf16.mxu0 0
        %2476 = vmatpush1.bf16.xpose.msra.mxu0 %v2453
        %2477 = vmatprep.subr.bf16.mxu0 0
        %2478 = vmatpush1.bf16.xpose.msra.mxu0 %v2450
        %2479 = vmatprep.subr.bf16.mxu0 0
        %2480 = vmatpush1.bf16.xpose.msra.mxu0 %v2447
        %2481 = vmatprep.subr.bf16.mxu0 0
        %2482 = vmatpush1.bf16.xpose.msra.mxu0 %v2444
        %2483 = vmatprep.subr.bf16.mxu0 0
        %2484 = vmatpush2.bf16.xpose.msra.mxu0 0
        %2485 = vmatprep.subr.bf16.mxu0 0
        %2486 = vmatpush2.bf16.xpose.msra.mxu0 0
        %2487 = vmatprep.subr.bf16.mxu0 0
        %2488 = vmatpush2.bf16.xpose.msra.mxu0 0
        %2489 = vmatprep.subr.bf16.mxu0 0
        %2490 = vmatpush2.bf16.xpose.msra.mxu0 0
        %2491 = vmatprep.subr.bf16.mxu0 0
        %2492 = vmatpush2.bf16.xpose.msra.mxu0 0
        %2493 = vmatprep.subr.bf16.mxu0 0
        %2494 = vmatpush2.bf16.xpose.msra.mxu0 0
        %2495 = vmatprep.subr.bf16.mxu0 0
        %2496 = vmatpush2.bf16.xpose.msra.mxu0 0
        %2497 = vmatprep.subr.bf16.mxu0 0
        %2498 = vmatpush2.bf16.xpose.msra.mxu0 0
        %2499 = vmatprep.mubr.bf16.mxu0 0
        %2500 = vmatmul.mubr.bf16.gmra.mxu0 %v2441
        %v2501 = vpop.f32.mrf.mxu0
        %v2502 = vadd.f32 %v724, %v2501
        %v2503 = vpop.f32.mrf.mxu0
        %v2504 = vpop.f32.mrf.mxu0
        %v2505 = vpop.f32.mrf.mxu0
        %2506 = vdwg.mxu0
        %2507 = vmax.xlane.f32.xlu0 %v2502
        %v2508 = vpop.xlane.xlu0 %2507
        %v2509 = vsub.f32 %v2502, %v2508
        %v2510 = vmul.f32 %v2509, 1.442695
        %v2511 = vpow.pop %v2510
        %2512 = vadd.xlane.f32.xlu0 %v2511
        %v2513 = vpop.xlane.xlu0 %2512
        %v2514 = vpack.c.bf16 %v2511, %v2511
        %v2531 = vunpack.c.l.b16 %v2366
        %v2532 = vunpack.c.l.b16 %v2367
        %v2533 = vunpack.c.l.b16 %v2368
        %v2534 = vunpack.c.l.b16 %v2369
        %v2535 = vunpack.c.l.b16 %v2370
        %v2536 = vunpack.c.l.b16 %v2371
        %v2537 = vunpack.c.l.b16 %v2372
        %v2538 = vunpack.c.l.b16 %v2373
        %v2539 = vunpack.c.l.b16 %v2374
        %v2540 = vunpack.c.l.b16 %v2375
        %v2541 = vunpack.c.l.b16 %v2376
        %v2542 = vunpack.c.l.b16 %v2377
        %v2543 = vunpack.c.l.b16 %v2378
        %v2544 = vunpack.c.l.b16 %v2379
        %v2545 = vunpack.c.l.b16 %v2380
        %v2546 = vunpack.c.l.b16 %v2381
        %v2547 = vpack.c.b16 %v2532, %v2531
        %v2548 = vpack.c.b16 %v2534, %v2533
        %v2549 = vpack.c.b16 %v2536, %v2535
        %v2550 = vpack.c.b16 %v2538, %v2537
        %v2551 = vpack.c.b16 %v2540, %v2539
        %v2552 = vpack.c.b16 %v2542, %v2541
        %v2553 = vpack.c.b16 %v2544, %v2543
        %v2554 = vpack.c.b16 %v2546, %v2545
        %2555 = vrot.lane.b32.xlu0 %v2547, 104
        %v2556 = vpop.permute.xlu0 %2555
        %2557 = vrot.lane.b32.xlu0 %v2548, 104
        %v2558 = vpop.permute.xlu0 %2557
        %2559 = vrot.lane.b32.xlu0 %v2549, 104
        %v2560 = vpop.permute.xlu0 %2559
        %2561 = vrot.lane.b32.xlu0 %v2550, 104
        %v2562 = vpop.permute.xlu0 %2561
        %2563 = vrot.lane.b32.xlu0 %v2551, 104
        %v2564 = vpop.permute.xlu0 %2563
        %2565 = vrot.lane.b32.xlu0 %v2552, 104
        %v2566 = vpop.permute.xlu0 %2565
        %2567 = vrot.lane.b32.xlu0 %v2553, 104
        %v2568 = vpop.permute.xlu0 %2567
        %2569 = vrot.lane.b32.xlu0 %v2554, 104
        %v2570 = vpop.permute.xlu0 %2569
        %2579 = vmatprep.subr.bf16.mxu0 0
        %2580 = vmatpush1.bf16.msra.mxu0 %v2570
        %2581 = vmatprep.subr.bf16.mxu0 0
        %2582 = vmatpush1.bf16.msra.mxu0 %v2568
        %2583 = vmatprep.subr.bf16.mxu0 0
        %2584 = vmatpush1.bf16.msra.mxu0 %v2566
        %2585 = vmatprep.subr.bf16.mxu0 0
        %2586 = vmatpush1.bf16.msra.mxu0 %v2564
        %2587 = vmatprep.subr.bf16.mxu0 0
        %2588 = vmatpush1.bf16.msra.mxu0 %v2562
        %2589 = vmatprep.subr.bf16.mxu0 0
        %2590 = vmatpush1.bf16.msra.mxu0 %v2560
        %2591 = vmatprep.subr.bf16.mxu0 0
        %2592 = vmatpush1.bf16.msra.mxu0 %v2558
        %2593 = vmatprep.subr.bf16.mxu0 0
        %2594 = vmatpush1.bf16.msra.mxu0 %v2556
        %2595 = vmatprep.subr.bf16.mxu0 0
        %2596 = vmatpush2.bf16.msra.mxu0 0
        %2597 = vmatprep.subr.bf16.mxu0 0
        %2598 = vmatpush2.bf16.msra.mxu0 0
        %2599 = vmatprep.subr.bf16.mxu0 0
        %2600 = vmatpush2.bf16.msra.mxu0 0
        %2601 = vmatprep.subr.bf16.mxu0 0
        %2602 = vmatpush2.bf16.msra.mxu0 0
        %2603 = vmatprep.subr.bf16.mxu0 0
        %2604 = vmatpush2.bf16.msra.mxu0 0
        %2605 = vmatprep.subr.bf16.mxu0 0
        %2606 = vmatpush2.bf16.msra.mxu0 0
        %2607 = vmatprep.subr.bf16.mxu0 0
        %2608 = vmatpush2.bf16.msra.mxu0 0
        %2609 = vmatprep.subr.bf16.mxu0 0
        %2610 = vmatpush2.bf16.msra.mxu0 0
        %2611 = vmatprep.mubr.bf16.mxu0 0
        %2612 = vmatmul.mubr.bf16.gmra.mxu0 %v2514
        %v2613 = vpop.f32.mrf.mxu0
        %v2614 = vadd.f32 0.0, %v2613
        %v2615 = vpop.f32.mrf.mxu0
        %v2616 = vpop.f32.mrf.mxu0
        %v2617 = vpop.f32.mrf.mxu0
        %2618 = vdwg.mxu0
        %v2619 = vrcp.pop %v2513
        %v2620 = vmul.f32 %v2614, %v2619
        %2622 = vrot.lane.b32.xlu0 %v2620, 24
        %v2623 = vpop.permute.xlu0 %2622
        %vm2625 = vcmask 228544
        %2626 = vst.msk [vmem:[#allocation4] sm:$0xff] %vm2625, %v2623
        %v2627 = vld [vmem:[#allocation2] sm:$0xf]
        %v2628 = vld [vmem:[#allocation2 + $0x4] sm:$0xf]
        %v2629 = vld [vmem:[#allocation2 + $0x8] sm:$0xf]
        %v2630 = vld [vmem:[#allocation2 + $0xc] sm:$0xf]
        %v2631 = vld [vmem:[#allocation2 + $0x10] sm:$0xf]
        %v2632 = vld [vmem:[#allocation2 + $0x14] sm:$0xf]
        %v2633 = vld [vmem:[#allocation2 + $0x18] sm:$0xf]
        %v2634 = vld [vmem:[#allocation2 + $0x1c] sm:$0xf]
        %v2635 = vld [vmem:[#allocation2 + $0x20] sm:$0xf]
        %v2636 = vld [vmem:[#allocation2 + $0x24] sm:$0xf]
        %v2637 = vld [vmem:[#allocation2 + $0x28] sm:$0xf]
        %v2638 = vld [vmem:[#allocation2 + $0x2c] sm:$0xf]
        %v2639 = vld [vmem:[#allocation2 + $0x30] sm:$0xf]
        %v2640 = vld [vmem:[#allocation2 + $0x34] sm:$0xf]
        %v2641 = vld [vmem:[#allocation2 + $0x38] sm:$0xf]
        %v2642 = vld [vmem:[#allocation2 + $0x3c] sm:$0xf]
        %v2643 = vld [vmem:[#allocation3] sm:$0xf]
        %v2644 = vld [vmem:[#allocation3 + $0x4] sm:$0xf]
        %v2645 = vld [vmem:[#allocation3 + $0x8] sm:$0xf]
        %v2646 = vld [vmem:[#allocation3 + $0xc] sm:$0xf]
        %v2647 = vld [vmem:[#allocation3 + $0x10] sm:$0xf]
        %v2648 = vld [vmem:[#allocation3 + $0x14] sm:$0xf]
        %v2649 = vld [vmem:[#allocation3 + $0x18] sm:$0xf]
        %v2650 = vld [vmem:[#allocation3 + $0x1c] sm:$0xf]
        %v2651 = vld [vmem:[#allocation3 + $0x20] sm:$0xf]
        %v2652 = vld [vmem:[#allocation3 + $0x24] sm:$0xf]
        %v2653 = vld [vmem:[#allocation3 + $0x28] sm:$0xf]
        %v2654 = vld [vmem:[#allocation3 + $0x2c] sm:$0xf]
        %v2655 = vld [vmem:[#allocation3 + $0x30] sm:$0xf]
        %v2656 = vld [vmem:[#allocation3 + $0x34] sm:$0xf]
        %v2657 = vld [vmem:[#allocation3 + $0x38] sm:$0xf]
        %v2658 = vld [vmem:[#allocation3 + $0x3c] sm:$0xf]
        %2659 = vrot.lane.b32.xlu0 %v716, 100
        %v2660 = vpop.permute.xlu0 %2659
        %v2677 = vunpack.c.l.b16 %v2627
        %v2678 = vunpack.c.l.b16 %v2628
        %v2679 = vunpack.c.l.b16 %v2629
        %v2680 = vunpack.c.l.b16 %v2630
        %v2681 = vunpack.c.l.b16 %v2631
        %v2682 = vunpack.c.l.b16 %v2632
        %v2683 = vunpack.c.l.b16 %v2633
        %v2684 = vunpack.c.l.b16 %v2634
        %v2685 = vunpack.c.l.b16 %v2635
        %v2686 = vunpack.c.l.b16 %v2636
        %v2687 = vunpack.c.l.b16 %v2637
        %v2688 = vunpack.c.l.b16 %v2638
        %v2689 = vunpack.c.l.b16 %v2639
        %v2690 = vunpack.c.l.b16 %v2640
        %v2691 = vunpack.c.l.b16 %v2641
        %v2692 = vunpack.c.l.b16 %v2642
        %v2693 = vpack.c.b16 %v2678, %v2677
        %v2694 = vpack.c.b16 %v2680, %v2679
        %v2695 = vpack.c.b16 %v2682, %v2681
        %v2696 = vpack.c.b16 %v2684, %v2683
        %v2697 = vpack.c.b16 %v2686, %v2685
        %v2698 = vpack.c.b16 %v2688, %v2687
        %v2699 = vpack.c.b16 %v2690, %v2689
        %v2700 = vpack.c.b16 %v2692, %v2691
        %2701 = vrot.lane.b32.xlu0 %v2693, 100
        %v2702 = vpop.permute.xlu0 %2701
        %2703 = vrot.lane.b32.xlu0 %v2694, 100
        %v2704 = vpop.permute.xlu0 %2703
        %2705 = vrot.lane.b32.xlu0 %v2695, 100
        %v2706 = vpop.permute.xlu0 %2705
        %2707 = vrot.lane.b32.xlu0 %v2696, 100
        %v2708 = vpop.permute.xlu0 %2707
        %2709 = vrot.lane.b32.xlu0 %v2697, 100
        %v2710 = vpop.permute.xlu0 %2709
        %2711 = vrot.lane.b32.xlu0 %v2698, 100
        %v2712 = vpop.permute.xlu0 %2711
        %2713 = vrot.lane.b32.xlu0 %v2699, 100
        %v2714 = vpop.permute.xlu0 %2713
        %2715 = vrot.lane.b32.xlu0 %v2700, 100
        %v2716 = vpop.permute.xlu0 %2715
        %v2718 = vsel %vm797, %v2660, 0
        %v2721 = vsel %vm797, %v2702, 0
        %v2724 = vsel %vm797, %v2704, 0
        %v2727 = vsel %vm797, %v2706, 0
        %v2730 = vsel %vm797, %v2708, 0
        %v2733 = vsel %vm797, %v2710, 0
        %v2736 = vsel %vm797, %v2712, 0
        %v2739 = vsel %vm797, %v2714, 0
        %v2742 = vsel %vm797, %v2716, 0
        %2744 = vmatprep.subr.bf16.mxu0 0
        %2745 = vmatpush1.bf16.xpose.msra.mxu0 %v2742
        %2746 = vmatprep.subr.bf16.mxu0 0
        %2747 = vmatpush1.bf16.xpose.msra.mxu0 %v2739
        %2748 = vmatprep.subr.bf16.mxu0 0
        %2749 = vmatpush1.bf16.xpose.msra.mxu0 %v2736
        %2750 = vmatprep.subr.bf16.mxu0 0
        %2751 = vmatpush1.bf16.xpose.msra.mxu0 %v2733
        %2752 = vmatprep.subr.bf16.mxu0 0
        %2753 = vmatpush1.bf16.xpose.msra.mxu0 %v2730
        %2754 = vmatprep.subr.bf16.mxu0 0
        %2755 = vmatpush1.bf16.xpose.msra.mxu0 %v2727
        %2756 = vmatprep.subr.bf16.mxu0 0
        %2757 = vmatpush1.bf16.xpose.msra.mxu0 %v2724
        %2758 = vmatprep.subr.bf16.mxu0 0
        %2759 = vmatpush1.bf16.xpose.msra.mxu0 %v2721
        %2760 = vmatprep.subr.bf16.mxu0 0
        %2761 = vmatpush2.bf16.xpose.msra.mxu0 0
        %2762 = vmatprep.subr.bf16.mxu0 0
        %2763 = vmatpush2.bf16.xpose.msra.mxu0 0
        %2764 = vmatprep.subr.bf16.mxu0 0
        %2765 = vmatpush2.bf16.xpose.msra.mxu0 0
        %2766 = vmatprep.subr.bf16.mxu0 0
        %2767 = vmatpush2.bf16.xpose.msra.mxu0 0
        %2768 = vmatprep.subr.bf16.mxu0 0
        %2769 = vmatpush2.bf16.xpose.msra.mxu0 0
        %2770 = vmatprep.subr.bf16.mxu0 0
        %2771 = vmatpush2.bf16.xpose.msra.mxu0 0
        %2772 = vmatprep.subr.bf16.mxu0 0
        %2773 = vmatpush2.bf16.xpose.msra.mxu0 0
        %2774 = vmatprep.subr.bf16.mxu0 0
        %2775 = vmatpush2.bf16.xpose.msra.mxu0 0
        %2776 = vmatprep.mubr.bf16.mxu0 0
        %2777 = vmatmul.mubr.bf16.gmra.mxu0 %v2718
        %v2778 = vpop.f32.mrf.mxu0
        %v2779 = vadd.f32 %v724, %v2778
        %v2780 = vpop.f32.mrf.mxu0
        %v2781 = vpop.f32.mrf.mxu0
        %v2782 = vpop.f32.mrf.mxu0
        %2783 = vdwg.mxu0
        %2784 = vmax.xlane.f32.xlu0 %v2779
        %v2785 = vpop.xlane.xlu0 %2784
        %v2786 = vsub.f32 %v2779, %v2785
        %v2787 = vmul.f32 %v2786, 1.442695
        %v2788 = vpow.pop %v2787
        %2789 = vadd.xlane.f32.xlu0 %v2788
        %v2790 = vpop.xlane.xlu0 %2789
        %v2791 = vpack.c.bf16 %v2788, %v2788
        %v2808 = vunpack.c.l.b16 %v2643
        %v2809 = vunpack.c.l.b16 %v2644
        %v2810 = vunpack.c.l.b16 %v2645
        %v2811 = vunpack.c.l.b16 %v2646
        %v2812 = vunpack.c.l.b16 %v2647
        %v2813 = vunpack.c.l.b16 %v2648
        %v2814 = vunpack.c.l.b16 %v2649
        %v2815 = vunpack.c.l.b16 %v2650
        %v2816 = vunpack.c.l.b16 %v2651
        %v2817 = vunpack.c.l.b16 %v2652
        %v2818 = vunpack.c.l.b16 %v2653
        %v2819 = vunpack.c.l.b16 %v2654
        %v2820 = vunpack.c.l.b16 %v2655
        %v2821 = vunpack.c.l.b16 %v2656
        %v2822 = vunpack.c.l.b16 %v2657
        %v2823 = vunpack.c.l.b16 %v2658
        %v2824 = vpack.c.b16 %v2809, %v2808
        %v2825 = vpack.c.b16 %v2811, %v2810
        %v2826 = vpack.c.b16 %v2813, %v2812
        %v2827 = vpack.c.b16 %v2815, %v2814
        %v2828 = vpack.c.b16 %v2817, %v2816
        %v2829 = vpack.c.b16 %v2819, %v2818
        %v2830 = vpack.c.b16 %v2821, %v2820
        %v2831 = vpack.c.b16 %v2823, %v2822
        %2832 = vrot.lane.b32.xlu0 %v2824, 100
        %v2833 = vpop.permute.xlu0 %2832
        %2834 = vrot.lane.b32.xlu0 %v2825, 100
        %v2835 = vpop.permute.xlu0 %2834
        %2836 = vrot.lane.b32.xlu0 %v2826, 100
        %v2837 = vpop.permute.xlu0 %2836
        %2838 = vrot.lane.b32.xlu0 %v2827, 100
        %v2839 = vpop.permute.xlu0 %2838
        %2840 = vrot.lane.b32.xlu0 %v2828, 100
        %v2841 = vpop.permute.xlu0 %2840
        %2842 = vrot.lane.b32.xlu0 %v2829, 100
        %v2843 = vpop.permute.xlu0 %2842
        %2844 = vrot.lane.b32.xlu0 %v2830, 100
        %v2845 = vpop.permute.xlu0 %2844
        %2846 = vrot.lane.b32.xlu0 %v2831, 100
        %v2847 = vpop.permute.xlu0 %2846
        %2856 = vmatprep.subr.bf16.mxu0 0
        %2857 = vmatpush1.bf16.msra.mxu0 %v2847
        %2858 = vmatprep.subr.bf16.mxu0 0
        %2859 = vmatpush1.bf16.msra.mxu0 %v2845
        %2860 = vmatprep.subr.bf16.mxu0 0
        %2861 = vmatpush1.bf16.msra.mxu0 %v2843
        %2862 = vmatprep.subr.bf16.mxu0 0
        %2863 = vmatpush1.bf16.msra.mxu0 %v2841
        %2864 = vmatprep.subr.bf16.mxu0 0
        %2865 = vmatpush1.bf16.msra.mxu0 %v2839
        %2866 = vmatprep.subr.bf16.mxu0 0
        %2867 = vmatpush1.bf16.msra.mxu0 %v2837
        %2868 = vmatprep.subr.bf16.mxu0 0
        %2869 = vmatpush1.bf16.msra.mxu0 %v2835
        %2870 = vmatprep.subr.bf16.mxu0 0
        %2871 = vmatpush1.bf16.msra.mxu0 %v2833
        %2872 = vmatprep.subr.bf16.mxu0 0
        %2873 = vmatpush2.bf16.msra.mxu0 0
        %2874 = vmatprep.subr.bf16.mxu0 0
        %2875 = vmatpush2.bf16.msra.mxu0 0
        %2876 = vmatprep.subr.bf16.mxu0 0
        %2877 = vmatpush2.bf16.msra.mxu0 0
        %2878 = vmatprep.subr.bf16.mxu0 0
        %2879 = vmatpush2.bf16.msra.mxu0 0
        %2880 = vmatprep.subr.bf16.mxu0 0
        %2881 = vmatpush2.bf16.msra.mxu0 0
        %2882 = vmatprep.subr.bf16.mxu0 0
        %2883 = vmatpush2.bf16.msra.mxu0 0
        %2884 = vmatprep.subr.bf16.mxu0 0
        %2885 = vmatpush2.bf16.msra.mxu0 0
        %2886 = vmatprep.subr.bf16.mxu0 0
        %2887 = vmatpush2.bf16.msra.mxu0 0
        %2888 = vmatprep.mubr.bf16.mxu0 0
        %2889 = vmatmul.mubr.bf16.gmra.mxu0 %v2791
        %v2890 = vpop.f32.mrf.mxu0
        %v2891 = vadd.f32 0.0, %v2890
        %v2892 = vpop.f32.mrf.mxu0
        %v2893 = vpop.f32.mrf.mxu0
        %v2894 = vpop.f32.mrf.mxu0
        %2895 = vdwg.mxu0
        %v2896 = vrcp.pop %v2790
        %v2897 = vmul.f32 %v2891, %v2896
        %2899 = vrot.lane.b32.xlu0 %v2897, 28
        %v2900 = vpop.permute.xlu0 %2899
        %vm2902 = vcmask 261344
        %2903 = vst.msk [vmem:[#allocation4] sm:$0xff] %vm2902, %v2900
        %v2904 = vld [vmem:[#allocation4] sm:$0xff]
        %v2905 = vpack.c.bf16 %v2904, %v2904
        %v2906 = vld [vmem:[#allocation16] sm:$0xf]
        %v2907 = vld [vmem:[#allocation16 + $0x4] sm:$0xf]
        %v2908 = vld [vmem:[#allocation16 + $0x8] sm:$0xf]
        %v2909 = vld [vmem:[#allocation16 + $0xc] sm:$0xf]
        %v2910 = vld [vmem:[%s7] sm:$0x1]
        %v2912 = vlaneseq
        %v2913 = vshrl.u32 %v2912, 7
        %v2914 = vsub.s32 0, %v2913
        %v2915 = vrot.slane %v2910, %v2914
        %v2921 = vunpack.c.l.b16 %v2906
        %v2922 = vunpack.c.l.b16 %v2907
        %v2923 = vunpack.c.l.b16 %v2908
        %v2924 = vunpack.c.l.b16 %v2909
        %v2925 = vpack.c.b16 %v2922, %v2921
        %v2926 = vpack.c.b16 %v2924, %v2923
        %v2930 = vsel %vm671, %v2905, 0
        %2932 = vmatprep.subr.bf16.mxu0 0
        %2933 = vmatpush1.bf16.msra.mxu0 0
        %2934 = vmatprep.subr.bf16.mxu0 0
        %2935 = vmatpush1.bf16.msra.mxu0 0
        %2936 = vmatprep.subr.bf16.mxu0 0
        %2937 = vmatpush1.bf16.msra.mxu0 0
        %2938 = vmatprep.subr.bf16.mxu0 0
        %2939 = vmatpush1.bf16.msra.mxu0 0
        %2940 = vmatprep.subr.bf16.mxu0 0
        %2941 = vmatpush1.bf16.msra.mxu0 0
        %2942 = vmatprep.subr.bf16.mxu0 0
        %2943 = vmatpush1.bf16.msra.mxu0 0
        %2944 = vmatprep.subr.bf16.mxu0 0
        %2945 = vmatpush1.bf16.msra.mxu0 %v2926
        %2946 = vmatprep.subr.bf16.mxu0 0
        %2947 = vmatpush1.bf16.msra.mxu0 %v2925
        %2948 = vmatprep.subr.bf16.mxu0 0
        %2949 = vmatpush2.bf16.msra.mxu0 0
        %2950 = vmatprep.subr.bf16.mxu0 0
        %2951 = vmatpush2.bf16.msra.mxu0 0
        %2952 = vmatprep.subr.bf16.mxu0 0
        %2953 = vmatpush2.bf16.msra.mxu0 0
        %2954 = vmatprep.subr.bf16.mxu0 0
        %2955 = vmatpush2.bf16.msra.mxu0 0
        %2956 = vmatprep.subr.bf16.mxu0 0
        %2957 = vmatpush2.bf16.msra.mxu0 0
        %2958 = vmatprep.subr.bf16.mxu0 0
        %2959 = vmatpush2.bf16.msra.mxu0 0
        %2960 = vmatprep.subr.bf16.mxu0 0
        %2961 = vmatpush2.bf16.msra.mxu0 0
        %2962 = vmatprep.subr.bf16.mxu0 0
        %2963 = vmatpush2.bf16.msra.mxu0 0
        %2964 = vmatprep.mubr.bf16.mxu0 0
        %2965 = vmatmul.mubr.bf16.gmra.mxu0 %v2930
        %v2966 = vpop.f32.mrf.mxu0
        %v2967 = vadd.f32 %v2915, %v2966
        %v2968 = vpop.f32.mrf.mxu0
        %v2969 = vpop.f32.mrf.mxu0
        %v2970 = vpop.f32.mrf.mxu0
        %2971 = vdwg.mxu0
        %2972 = vst.msk [vmem:[%s466] sm:$0xff] %vm671, %v2967
        %s2973 = sand.u32 %s235, 1
        %s2974 = scalar_lea.sflag [#allocation7], %s2973
        %s2975 = sand.u32 %s235, 1
        %s2976 = smul.addr %s2975, 8
        %s2977 = scalar_lea.vmem [#allocation17], %s2976
        // Predicated region
        $region85: #{tpu_custom_call.1} parent=51 // pred_check
          %p2978 = pneg %p245
        $region86: #{tpu_custom_call.1} parent=51 // pred_check_branch
          %2980 = sbr.rel (%p2978) target = $region88
        $region87: #{tpu_custom_call.1} parent=51 // pred_region
          %s2982 = ssub.s32 128, 128
          %2983 = vsyncadd %s2974, %s2982
          %s2984 = smul.addr %s34, 2
          %s2985 = sadd.s32 %s35, %s2984
          %s2986 = smul.addr %s2985, 128
          %s2987 = scalar_lea.hbm %s8, %s2986
          %s2989 = sshll.u32 %s2977, 4
          %s2990 = int_to_ptr.vmem [resolvable:$true] %s2989
          %2992 = dma.vmem_to_hbm [thread:$0]  %s2990, 128, %s2987, %s2974
        $region88: #{tpu_custom_call.1} parent=51 // pred_fallthru
          _
      $region52: #{tpu_custom_call.1} parent=5 // pred_fallthru
        _
      %p2993 = scmp.le.s32.totalorder 2, %s25
      // Predicated region
      $region89: #{tpu_custom_call.1} parent=5 // pred_check
        %p2994 = pneg %p2993
      $region90: #{tpu_custom_call.1} parent=5 // pred_check_branch
        %2996 = sbr.rel (%p2994) target = $region92
      $region91: #{tpu_custom_call.1} parent=5 // pred_region
        %s2997 = ssub.s32 %s25, 2
        // Predicated region
        $region93: #{tpu_custom_call.1} parent=91 // pred_check
          %p2998 = pneg %p251
        $region94: #{tpu_custom_call.1} parent=91 // pred_check_branch
          %3000 = sbr.rel (%p2998) target = $region96
        $region95: #{tpu_custom_call.1} parent=91 // pred_region
          %s3001 = sand.u32 %s236, 1
          %s3002 = scalar_lea.sflag [#allocation7], %s3001
          %s3003 = sand.u32 %s236, 1
          %s3004 = smul.addr %s3003, 8
          %s3005 = scalar_lea.vmem [#allocation17], %s3004
          %3006 = dma.done %s3002, 128
        $region96: #{tpu_custom_call.1} parent=91 // pred_fallthru
          _
      $region92: #{tpu_custom_call.1} parent=5 // pred_fallthru
        _
    $region6: #{tpu_custom_call.1} parent=1 // loop_footer
      %s29 = sadd.s32 1, %s25
    $region7: #{tpu_custom_call.1} parent=1 // loop_footer_branch
      %24 = sbr.rel target = $region3
    $region8: #{tpu_custom_call.1} parent=1 // loop_exit
      _
    %3007 = vsyncpa [#allocation6], 1
    %s3008 = scalar_lea.sflag [#allocation6], 1
    %3009 = vsyncpa %s3008, 1
    %3010 = vsyncpa [#allocation9], 1
    %s3011 = scalar_lea.sflag [#allocation9], 1
    %3012 = vsyncpa %s3011, 1
    %3013 = vsyncpa [#allocation12], 1
    %3014 = vsyncpa [#allocation15], 1
    %3015 = vsyncpa [#allocation7], 1
    %s3016 = scalar_lea.sflag [#allocation7], 1
    %3017 = vsyncpa %s3016, 1

</llo_original>
